<compile_context>
chip_gen: v7x
topology: tpu7x:2x2x1
jax: 0.10.0
libtpu: 0.0.40
codegen_flags: <defaults>
</compile_context>

<pallas_src>
import jax
import jax.numpy as jnp
from jax.experimental import pallas as pl
from jax.experimental.pallas import tpu as pltpu

# ----------------------------------------------------------------------------
# Small configuration consistent with the module's __init__ (shrunk for demo)
# ----------------------------------------------------------------------------
IN_CHANNELS = 1
HIDDEN = 32            # hidden_dim
NUM_LAYERS = 4         # num_layers (default 10, shrunk so dilations fit T=16)
KERNEL_SIZE = 2
DILATION_BASE = 2
BATCH = 2
BATCH_PAD = 8          # batch padded to a full sublane group (8)
SEQ_LEN = 16           # T
OUT_LANES = 128        # lane-dense output slab width


def _mm(a, b):
    # plain (m, k) @ (k, n) contraction, f32 accumulation on the MXU
    return jax.lax.dot_general(a, b, (((1,), (0,)), ((), ())),
                               preferred_element_type=jnp.float32)


# ----------------------------------------------------------------------------
# Pallas kernel: whole forward pass (dilated gated conv stack + GRU + Linear)
# ----------------------------------------------------------------------------
def gated_wavenet_kernel(x_ref, wconv_ref, bconv_ref, wskip_ref, bskip_ref,
                         wgru_ref, bgru_ref, wout_ref, bout_ref,
                         out_ref, gi_ref):
    H = HIDDEN
    H2 = 2 * H
    Bp = BATCH_PAD
    M = SEQ_LEN * Bp

    x = x_ref[...]                                               # (M, H)
    # hoisted out of the layer loop (broadcasts are not CSE'd)
    row_ids = jax.lax.broadcasted_iota(jnp.int32, (M, H), 0)

    skip_sum = jnp.zeros((M, H), jnp.float32)
    for i in range(NUM_LAYERS):                                  # static, unrolled
        shift = (DILATION_BASE ** i) * Bp                        # multiple of 8 sublanes
        # causal dilated tap: x_shift[t*Bp+b] = x[(t-d)*Bp+b], zero for t < d
        x_shift = jnp.where(row_ids < shift, 0.0, pltpu.roll(x, shift, axis=0))
        xcat = jnp.concatenate([x, x_shift], axis=1)             # (M, 2H)
        # one fused (M,2H)@(2H,2H) matmul -> [f_pre | 0.5*g_pre], one tanh for both gates
        t = jnp.tanh(_mm(xcat, wconv_ref[i]) + bconv_ref[i])     # (M, 2H)
        out = t[:, :H] * (0.5 * t[:, H:] + 0.5)                  # tanh(f)*sigmoid(g); dropout==identity
        skip_sum = skip_sum + _mm(out, wskip_ref[i]) + bskip_ref[i]
        if i == 0 and IN_CHANNELS != HIDDEN:
            x = out                                              # torch: shapes differ -> no residual
        else:
            x = x + out

    # ---- GRU refiner over T steps (h0 = 0); only the final hidden state is kept. ----
    wih_t = wgru_ref[0]                                          # (H, 3H) gate order [r|z|n]
    whh_t = wgru_ref[1]                                          # (H, 3H)
    bih = bgru_ref[0]                                            # (1, 3H)
    bhh = bgru_ref[1]                                            # (1, 3H)
    # all input projections in one wide matmul, parked in VMEM scratch (aligned per-step reads)
    gi_ref[...] = _mm(skip_sum, wih_t) + bih                     # (M, 3H)

    h = jnp.zeros((Bp, H), jnp.float32)
    for step in range(SEQ_LEN):                                  # static trip-count
        lo = step * Bp                                           # 8-aligned sublane start
        gi_t = gi_ref[lo:lo + Bp, :]                             # (Bp, 3H)
        gh = _mm(h, whh_t) + bhh                                 # one matmul per step
        rz = jax.nn.sigmoid(gi_t[:, :H2] + gh[:, :H2])           # r and z with one EUP call
        r = rz[:, :H]
        z = rz[:, H:]
        n = jnp.tanh(gi_t[:, H2:] + r * gh[:, H2:])
        h = (1.0 - z) * n + z * h

    # output_layer: Linear(H, 1), written as a lane-dense (Bp, 128) slab
    out_ref[...] = _mm(h, wout_ref[...]) + bout_ref[...]


# ----------------------------------------------------------------------------
# Wrapper (glue): layout transform + pallas_call
# ----------------------------------------------------------------------------
def gated_wavenet_forward(x, kparams):
    # x: (B, C_in, T) -- same NCW convention as the PyTorch module.
    Bb, C, Tt = x.shape
    xt = jnp.transpose(x, (2, 0, 1))                                   # (T, B, C)
    xt = jnp.pad(xt, ((0, 0), (0, BATCH_PAD - Bb), (0, HIDDEN - C)))   # pad batch->8, chans->H
    x2 = xt.reshape(Tt * BATCH_PAD, HIDDEN)

    H = HIDDEN
    M = Tt * BATCH_PAD
    flops = (NUM_LAYERS * (2 * M * (2 * H) * (2 * H) + 2 * M * H * H)
             + 2 * M * H * (3 * H)
             + Tt * 2 * BATCH_PAD * H * (3 * H)
             + 2 * BATCH_PAD * H * OUT_LANES)
    transcendentals = NUM_LAYERS * M * 2 * H + Tt * BATCH_PAD * 3 * H
    bytes_accessed = 4 * (x2.size + sum(int(p.size) for p in kparams)
                          + BATCH_PAD * OUT_LANES + M * 3 * H)

    vmem = pl.BlockSpec(memory_space=pltpu.MemorySpace.VMEM)
    y = pl.pallas_call(
        gated_wavenet_kernel,
        out_shape=jax.ShapeDtypeStruct((BATCH_PAD, OUT_LANES), jnp.float32),
        in_specs=[vmem] * (1 + len(kparams)),
        out_specs=vmem,
        scratch_shapes=[pltpu.VMEM((SEQ_LEN * BATCH_PAD, 3 * HIDDEN), jnp.float32)],
        cost_estimate=pl.CostEstimate(flops=flops,
                                      transcendentals=transcendentals,
                                      bytes_accessed=bytes_accessed),
    )(x2, *kparams)
    return y[:Bb, 0]                                                   # .squeeze(1) -> (B,)


# ----------------------------------------------------------------------------
# Deterministic parameter construction (PyTorch shapes) + packing for kernel
# ----------------------------------------------------------------------------
def make_params(key):
    keys = iter(jax.random.split(key, NUM_LAYERS * 6 + 6))

    def nrm(shape, scale=0.2):
        return scale * jax.random.normal(next(keys), shape, dtype=jnp.float32)

    cfw, cfb, cgw, cgb, sw, sb = [], [], [], [], [], []
    for i in range(NUM_LAYERS):
        in_ch = IN_CHANNELS if i == 0 else HIDDEN
        cfw.append(nrm((HIDDEN, in_ch, KERNEL_SIZE)))   # res_blocks[i].weight
        cfb.append(nrm((HIDDEN,)))
        cgw.append(nrm((HIDDEN, in_ch, KERNEL_SIZE)))   # gate_blocks[i].weight
        cgb.append(nrm((HIDDEN,)))
        sw.append(nrm((HIDDEN, HIDDEN)))                # skip_blocks[i] (1x1 conv)
        sb.append(nrm((HIDDEN,)))
    wih = nrm((3 * HIDDEN, HIDDEN))                     # GRU weight_ih_l0 [r; z; n]
    whh = nrm((3 * HIDDEN, HIDDEN))                     # GRU weight_hh_l0
    bih = nrm((3 * HIDDEN,))
    bhh = nrm((3 * HIDDEN,))
    ow = nrm((1, HIDDEN))                               # output_layer.weight
    ob = nrm((1,))                                      # output_layer.bias
    return (cfw, cfb, cgw, cgb, sw, sb, wih, whh, bih, bhh, ow, ob)


def pack_params(raw):
    (cfw, cfb, cgw, cgb, sw, sb, wih, whh, bih, bhh, ow, ob) = raw
    H = HIDDEN

    wconv_l, bconv_l, wskip_l, bskip_l = [], [], [], []
    for i in range(NUM_LAYERS):
        # (H, in_ch, K) -> (H, H, K) with zero input channels
        wf = jnp.pad(cfw[i], ((0, 0), (0, H - cfw[i].shape[1]), (0, 0)))
        wg = jnp.pad(cgw[i], ((0, 0), (0, H - cgw[i].shape[1]), (0, 0)))
        # tap k=1 multiplies x[t], tap k=0 multiplies x[t-d]; pre-transposed to (in, out)
        w1f, w0f = wf[:, :, 1].T, wf[:, :, 0].T
        w1g, w0g = wg[:, :, 1].T, wg[:, :, 0].T
        # fused (2H, 2H): rows 0:H act on x, rows H:2H act on x_shift;
        # cols 0:H -> f preact, cols H:2H -> 0.5*g preact (sigmoid-via-tanh trick)
        top = jnp.concatenate([w1f, 0.5 * w1g], axis=1)
        bot = jnp.concatenate([w0f, 0.5 * w0g], axis=1)
        wconv_l.append(jnp.concatenate([top, bot], axis=0))                # (2H, 2H)
        bconv_l.append(jnp.concatenate([cfb[i], 0.5 * cgb[i]])[None, :])   # (1, 2H)
        wskip_l.append(sw[i].T)                                            # (H, H)
        bskip_l.append(sb[i][None, :])                                     # (1, H)

    wconv = jnp.stack(wconv_l)                          # (L, 2H, 2H)
    bconv = jnp.stack(bconv_l)                          # (L, 1, 2H)
    wskip = jnp.stack(wskip_l)                          # (L, H, H)
    bskip = jnp.stack(bskip_l)                          # (L, 1, H)
    wgru = jnp.stack([wih.T, whh.T])                    # (2, H, 3H), gate order [r|z|n]
    bgru = jnp.stack([bih[None, :], bhh[None, :]])      # (2, 1, 3H)
    wout = jnp.pad(ow.T, ((0, 0), (0, OUT_LANES - ow.shape[0])))      # (H, 128), col 0 real
    bout = jnp.pad(ob[None, :], ((0, 0), (0, OUT_LANES - ob.shape[0])))  # (1, 128)
    return (wconv, bconv, wskip, bskip, wgru, bgru, wout, bout)


# ----------------------------------------------------------------------------
# Pure-JAX reference reproducing the PyTorch forward exactly (eval mode)
# ----------------------------------------------------------------------------
def reference_forward(x, raw):
    (cfw, cfb, cgw, cgb, sw, sb, wih, whh, bih, bhh, ow, ob) = raw
    H = HIDDEN
    T = x.shape[-1]
    hp = jax.lax.Precision.HIGHEST
    cur = x
    skip_sum = None
    for i in range(NUM_LAYERS):
        d = DILATION_BASE ** i
        pad = (KERNEL_SIZE - 1) * d

        def conv(inp, w, b):
            y = jax.lax.conv_general_dilated(
                inp, w, window_strides=(1,), padding=[(pad, pad)],
                rhs_dilation=(d,), dimension_numbers=('NCH', 'OIH', 'NCH'),
                precision=hp)
            return y + b[None, :, None]

        f = jnp.tanh(conv(cur, cfw[i], cfb[i]))
        g = jax.nn.sigmoid(conv(cur, cgw[i], cgb[i]))
        out = (f * g)[..., :T]
        sk = jnp.einsum('oc,bct->bot', sw[i], out, precision=hp) + sb[i][None, :, None]
        skip_sum = sk if skip_sum is None else skip_sum + sk
        cur = cur + out if out.shape == cur.shape else out

    ri = jnp.transpose(skip_sum, (0, 2, 1))             # (B, T, H)
    h = jnp.zeros((x.shape[0], H), jnp.float32)
    for t in range(T):
        xt = ri[:, t, :]
        gi = jnp.dot(xt, wih.T, precision=hp) + bih
        gh = jnp.dot(h, whh.T, precision=hp) + bhh
        r = jax.nn.sigmoid(gi[:, :H] + gh[:, :H])
        z = jax.nn.sigmoid(gi[:, H:2 * H] + gh[:, H:2 * H])
        n = jnp.tanh(gi[:, 2 * H:] + r * gh[:, 2 * H:])
        h = (1.0 - z) * n + z * h
    return (jnp.dot(h, ow.T, precision=hp) + ob)[:, 0]


if __name__ == "__main__":
    key = jax.random.PRNGKey(0)
    pkey, xkey = jax.random.split(key)
    raw = make_params(pkey)
    kparams = pack_params(raw)
    x = jax.random.normal(xkey, (BATCH, IN_CHANNELS, SEQ_LEN), dtype=jnp.float32)

    fwd = jax.jit(gated_wavenet_forward)
    y = fwd(x, kparams)
    jax.block_until_ready(y)

    y_ref = reference_forward(x, raw)
    max_err = float(jnp.max(jnp.abs(y - y_ref)))
    assert y.shape == (BATCH,), y.shape
    assert max_err < 5e-3, f"mismatch vs reference: {max_err}"
    print("KERNEL_OK")
</pallas_src>

<mosaic_0001>
module attributes {stable_mosaic.version = 11 : i64} {
  func.func @gated_wavenet_kernel(%arg0: memref<128x32xf32, #tpu.memory_space<vmem>>, %arg1: memref<4x64x64xf32, #tpu.memory_space<vmem>>, %arg2: memref<4x1x64xf32, #tpu.memory_space<vmem>>, %arg3: memref<4x32x32xf32, #tpu.memory_space<vmem>>, %arg4: memref<4x1x32xf32, #tpu.memory_space<vmem>>, %arg5: memref<2x32x96xf32, #tpu.memory_space<vmem>>, %arg6: memref<2x1x96xf32, #tpu.memory_space<vmem>>, %arg7: memref<32x128xf32, #tpu.memory_space<vmem>>, %arg8: memref<1x128xf32, #tpu.memory_space<vmem>>, %arg9: memref<8x128xf32, #tpu.memory_space<vmem>>, %arg10: memref<128x96xf32, #tpu.memory_space<vmem>>) attributes {dimension_semantics = [], scalar_prefetch = 0 : i64, scratch_operands = 1 : i64, tpu.core_type = #tpu.core_type<tc>} {
    %c0 = arith.constant 0 : index
    %c0_0 = arith.constant 0 : index
    %0 = vector.load %arg0[%c0, %c0_0] : memref<128x32xf32, #tpu.memory_space<vmem>>, vector<128x32xf32>
    %1 = tpu.iota {dimensions = array<i32: 0>} : vector<128x32xi32>
    %cst = arith.constant 0.000000e+00 : f32
    %2 = vector.broadcast %cst : f32 to vector<128x32xf32>
    %c8_i32 = arith.constant 8 : i32
    %3 = vector.broadcast %c8_i32 : i32 to vector<128x32xi32>
    %4 = arith.cmpi slt, %1, %3 : vector<128x32xi32>
    %c8_i32_1 = arith.constant 8 : i32
    %5 = tpu.dynamic_rotate %0 by %c8_i32_1 dim 0 : vector<128x32xf32>, i32 -> vector<128x32xf32>
    %cst_2 = arith.constant 0.000000e+00 : f32
    %6 = vector.broadcast %cst_2 : f32 to vector<128x32xf32>
    %7 = arith.select %4, %6, %5 : vector<128x32xi1>, vector<128x32xf32>
    %8 = tpu.concatenate %0, %7 in 1 : vector<128x32xf32>, vector<128x32xf32> -> vector<128x64xf32>
    %c0_3 = arith.constant 0 : index
    %c0_4 = arith.constant 0 : index
    %c0_5 = arith.constant 0 : index
    %9 = vector.load %arg1[%c0_3, %c0_4, %c0_5] : memref<4x64x64xf32, #tpu.memory_space<vmem>>, vector<1x64x64xf32>
    %10 = vector.shape_cast %9 : vector<1x64x64xf32> to vector<64x64xf32>
    %cst_6 = arith.constant dense<0.000000e+00> : vector<128x64xf32>
    %11 = tpu.matmul %8, %10, %cst_6 {dimension_numbers = #tpu.dot_dimension_numbers<[1], [0], [0], [1], [0, 0, 1, 1], [], []>} : vector<128x64xf32>, vector<64x64xf32>, vector<128x64xf32> -> vector<128x64xf32>
    %c0_7 = arith.constant 0 : index
    %c0_8 = arith.constant 0 : index
    %c0_9 = arith.constant 0 : index
    %12 = vector.load %arg2[%c0_7, %c0_8, %c0_9] : memref<4x1x64xf32, #tpu.memory_space<vmem>>, vector<1x1x64xf32>
    %13 = vector.shape_cast %12 : vector<1x1x64xf32> to vector<1x64xf32>
    %14 = vector.broadcast %13 : vector<1x64xf32> to vector<128x64xf32>
    %15 = arith.addf %11, %14 : vector<128x64xf32>
    %16 = math.tanh %15 : vector<128x64xf32>
    %17 = vector.extract_strided_slice %16 {offsets = [0, 0], sizes = [128, 32], strides = [1, 1]} : vector<128x64xf32> to vector<128x32xf32>
    %18 = vector.extract_strided_slice %16 {offsets = [0, 32], sizes = [128, 32], strides = [1, 1]} : vector<128x64xf32> to vector<128x32xf32>
    %cst_10 = arith.constant 5.000000e-01 : f32
    %19 = vector.broadcast %cst_10 : f32 to vector<128x32xf32>
    %20 = arith.mulf %19, %18 : vector<128x32xf32>
    %cst_11 = arith.constant 5.000000e-01 : f32
    %21 = vector.broadcast %cst_11 : f32 to vector<128x32xf32>
    %22 = arith.addf %20, %21 : vector<128x32xf32>
    %23 = arith.mulf %17, %22 : vector<128x32xf32>
    %c0_12 = arith.constant 0 : index
    %c0_13 = arith.constant 0 : index
    %c0_14 = arith.constant 0 : index
    %24 = vector.load %arg3[%c0_12, %c0_13, %c0_14] : memref<4x32x32xf32, #tpu.memory_space<vmem>>, vector<1x32x32xf32>
    %25 = vector.shape_cast %24 : vector<1x32x32xf32> to vector<32x32xf32>
    %cst_15 = arith.constant dense<0.000000e+00> : vector<128x32xf32>
    %26 = tpu.matmul %23, %25, %cst_15 {dimension_numbers = #tpu.dot_dimension_numbers<[1], [0], [0], [1], [0, 0, 1, 1], [], []>} : vector<128x32xf32>, vector<32x32xf32>, vector<128x32xf32> -> vector<128x32xf32>
    %27 = arith.addf %2, %26 : vector<128x32xf32>
    %c0_16 = arith.constant 0 : index
    %c0_17 = arith.constant 0 : index
    %c0_18 = arith.constant 0 : index
    %28 = vector.load %arg4[%c0_16, %c0_17, %c0_18] : memref<4x1x32xf32, #tpu.memory_space<vmem>>, vector<1x1x32xf32>
    %29 = vector.shape_cast %28 : vector<1x1x32xf32> to vector<1x32xf32>
    %30 = vector.broadcast %29 : vector<1x32xf32> to vector<128x32xf32>
    %31 = arith.addf %27, %30 : vector<128x32xf32>
    %c16_i32 = arith.constant 16 : i32
    %32 = vector.broadcast %c16_i32 : i32 to vector<128x32xi32>
    %33 = arith.cmpi slt, %1, %32 : vector<128x32xi32>
    %c16_i32_19 = arith.constant 16 : i32
    %34 = tpu.dynamic_rotate %23 by %c16_i32_19 dim 0 : vector<128x32xf32>, i32 -> vector<128x32xf32>
    %cst_20 = arith.constant 0.000000e+00 : f32
    %35 = vector.broadcast %cst_20 : f32 to vector<128x32xf32>
    %36 = arith.select %33, %35, %34 : vector<128x32xi1>, vector<128x32xf32>
    %37 = tpu.concatenate %23, %36 in 1 : vector<128x32xf32>, vector<128x32xf32> -> vector<128x64xf32>
    %c1 = arith.constant 1 : index
    %c0_21 = arith.constant 0 : index
    %c0_22 = arith.constant 0 : index
    %38 = vector.load %arg1[%c1, %c0_21, %c0_22] : memref<4x64x64xf32, #tpu.memory_space<vmem>>, vector<1x64x64xf32>
    %39 = vector.shape_cast %38 : vector<1x64x64xf32> to vector<64x64xf32>
    %cst_23 = arith.constant dense<0.000000e+00> : vector<128x64xf32>
    %40 = tpu.matmul %37, %39, %cst_23 {dimension_numbers = #tpu.dot_dimension_numbers<[1], [0], [0], [1], [0, 0, 1, 1], [], []>} : vector<128x64xf32>, vector<64x64xf32>, vector<128x64xf32> -> vector<128x64xf32>
    %c1_24 = arith.constant 1 : index
    %c0_25 = arith.constant 0 : index
    %c0_26 = arith.constant 0 : index
    %41 = vector.load %arg2[%c1_24, %c0_25, %c0_26] : memref<4x1x64xf32, #tpu.memory_space<vmem>>, vector<1x1x64xf32>
    %42 = vector.shape_cast %41 : vector<1x1x64xf32> to vector<1x64xf32>
    %43 = vector.broadcast %42 : vector<1x64xf32> to vector<128x64xf32>
    %44 = arith.addf %40, %43 : vector<128x64xf32>
    %45 = math.tanh %44 : vector<128x64xf32>
    %46 = vector.extract_strided_slice %45 {offsets = [0, 0], sizes = [128, 32], strides = [1, 1]} : vector<128x64xf32> to vector<128x32xf32>
    %47 = vector.extract_strided_slice %45 {offsets = [0, 32], sizes = [128, 32], strides = [1, 1]} : vector<128x64xf32> to vector<128x32xf32>
    %cst_27 = arith.constant 5.000000e-01 : f32
    %48 = vector.broadcast %cst_27 : f32 to vector<128x32xf32>
    %49 = arith.mulf %48, %47 : vector<128x32xf32>
    %cst_28 = arith.constant 5.000000e-01 : f32
    %50 = vector.broadcast %cst_28 : f32 to vector<128x32xf32>
    %51 = arith.addf %49, %50 : vector<128x32xf32>
    %52 = arith.mulf %46, %51 : vector<128x32xf32>
    %c1_29 = arith.constant 1 : index
    %c0_30 = arith.constant 0 : index
    %c0_31 = arith.constant 0 : index
    %53 = vector.load %arg3[%c1_29, %c0_30, %c0_31] : memref<4x32x32xf32, #tpu.memory_space<vmem>>, vector<1x32x32xf32>
    %54 = vector.shape_cast %53 : vector<1x32x32xf32> to vector<32x32xf32>
    %cst_32 = arith.constant dense<0.000000e+00> : vector<128x32xf32>
    %55 = tpu.matmul %52, %54, %cst_32 {dimension_numbers = #tpu.dot_dimension_numbers<[1], [0], [0], [1], [0, 0, 1, 1], [], []>} : vector<128x32xf32>, vector<32x32xf32>, vector<128x32xf32> -> vector<128x32xf32>
    %56 = arith.addf %31, %55 : vector<128x32xf32>
    %c1_33 = arith.constant 1 : index
    %c0_34 = arith.constant 0 : index
    %c0_35 = arith.constant 0 : index
    %57 = vector.load %arg4[%c1_33, %c0_34, %c0_35] : memref<4x1x32xf32, #tpu.memory_space<vmem>>, vector<1x1x32xf32>
    %58 = vector.shape_cast %57 : vector<1x1x32xf32> to vector<1x32xf32>
    %59 = vector.broadcast %58 : vector<1x32xf32> to vector<128x32xf32>
    %60 = arith.addf %56, %59 : vector<128x32xf32>
    %61 = arith.addf %23, %52 : vector<128x32xf32>
    %c32_i32 = arith.constant 32 : i32
    %62 = vector.broadcast %c32_i32 : i32 to vector<128x32xi32>
    %63 = arith.cmpi slt, %1, %62 : vector<128x32xi32>
    %c32_i32_36 = arith.constant 32 : i32
    %64 = tpu.dynamic_rotate %61 by %c32_i32_36 dim 0 : vector<128x32xf32>, i32 -> vector<128x32xf32>
    %cst_37 = arith.constant 0.000000e+00 : f32
    %65 = vector.broadcast %cst_37 : f32 to vector<128x32xf32>
    %66 = arith.select %63, %65, %64 : vector<128x32xi1>, vector<128x32xf32>
    %67 = tpu.concatenate %61, %66 in 1 : vector<128x32xf32>, vector<128x32xf32> -> vector<128x64xf32>
    %c2 = arith.constant 2 : index
    %c0_38 = arith.constant 0 : index
    %c0_39 = arith.constant 0 : index
    %68 = vector.load %arg1[%c2, %c0_38, %c0_39] : memref<4x64x64xf32, #tpu.memory_space<vmem>>, vector<1x64x64xf32>
    %69 = vector.shape_cast %68 : vector<1x64x64xf32> to vector<64x64xf32>
    %cst_40 = arith.constant dense<0.000000e+00> : vector<128x64xf32>
    %70 = tpu.matmul %67, %69, %cst_40 {dimension_numbers = #tpu.dot_dimension_numbers<[1], [0], [0], [1], [0, 0, 1, 1], [], []>} : vector<128x64xf32>, vector<64x64xf32>, vector<128x64xf32> -> vector<128x64xf32>
    %c2_41 = arith.constant 2 : index
    %c0_42 = arith.constant 0 : index
    %c0_43 = arith.constant 0 : index
    %71 = vector.load %arg2[%c2_41, %c0_42, %c0_43] : memref<4x1x64xf32, #tpu.memory_space<vmem>>, vector<1x1x64xf32>
    %72 = vector.shape_cast %71 : vector<1x1x64xf32> to vector<1x64xf32>
    %73 = vector.broadcast %72 : vector<1x64xf32> to vector<128x64xf32>
    %74 = arith.addf %70, %73 : vector<128x64xf32>
    %75 = math.tanh %74 : vector<128x64xf32>
    %76 = vector.extract_strided_slice %75 {offsets = [0, 0], sizes = [128, 32], strides = [1, 1]} : vector<128x64xf32> to vector<128x32xf32>
    %77 = vector.extract_strided_slice %75 {offsets = [0, 32], sizes = [128, 32], strides = [1, 1]} : vector<128x64xf32> to vector<128x32xf32>
    %cst_44 = arith.constant 5.000000e-01 : f32
    %78 = vector.broadcast %cst_44 : f32 to vector<128x32xf32>
    %79 = arith.mulf %78, %77 : vector<128x32xf32>
    %cst_45 = arith.constant 5.000000e-01 : f32
    %80 = vector.broadcast %cst_45 : f32 to vector<128x32xf32>
    %81 = arith.addf %79, %80 : vector<128x32xf32>
    %82 = arith.mulf %76, %81 : vector<128x32xf32>
    %c2_46 = arith.constant 2 : index
    %c0_47 = arith.constant 0 : index
    %c0_48 = arith.constant 0 : index
    %83 = vector.load %arg3[%c2_46, %c0_47, %c0_48] : memref<4x32x32xf32, #tpu.memory_space<vmem>>, vector<1x32x32xf32>
    %84 = vector.shape_cast %83 : vector<1x32x32xf32> to vector<32x32xf32>
    %cst_49 = arith.constant dense<0.000000e+00> : vector<128x32xf32>
    %85 = tpu.matmul %82, %84, %cst_49 {dimension_numbers = #tpu.dot_dimension_numbers<[1], [0], [0], [1], [0, 0, 1, 1], [], []>} : vector<128x32xf32>, vector<32x32xf32>, vector<128x32xf32> -> vector<128x32xf32>
    %86 = arith.addf %60, %85 : vector<128x32xf32>
    %c2_50 = arith.constant 2 : index
    %c0_51 = arith.constant 0 : index
    %c0_52 = arith.constant 0 : index
    %87 = vector.load %arg4[%c2_50, %c0_51, %c0_52] : memref<4x1x32xf32, #tpu.memory_space<vmem>>, vector<1x1x32xf32>
    %88 = vector.shape_cast %87 : vector<1x1x32xf32> to vector<1x32xf32>
    %89 = vector.broadcast %88 : vector<1x32xf32> to vector<128x32xf32>
    %90 = arith.addf %86, %89 : vector<128x32xf32>
    %91 = arith.addf %61, %82 : vector<128x32xf32>
    %c64_i32 = arith.constant 64 : i32
    %92 = vector.broadcast %c64_i32 : i32 to vector<128x32xi32>
    %93 = arith.cmpi slt, %1, %92 : vector<128x32xi32>
    %c64_i32_53 = arith.constant 64 : i32
    %94 = tpu.dynamic_rotate %91 by %c64_i32_53 dim 0 : vector<128x32xf32>, i32 -> vector<128x32xf32>
    %cst_54 = arith.constant 0.000000e+00 : f32
    %95 = vector.broadcast %cst_54 : f32 to vector<128x32xf32>
    %96 = arith.select %93, %95, %94 : vector<128x32xi1>, vector<128x32xf32>
    %97 = tpu.concatenate %91, %96 in 1 : vector<128x32xf32>, vector<128x32xf32> -> vector<128x64xf32>
    %c3 = arith.constant 3 : index
    %c0_55 = arith.constant 0 : index
    %c0_56 = arith.constant 0 : index
    %98 = vector.load %arg1[%c3, %c0_55, %c0_56] : memref<4x64x64xf32, #tpu.memory_space<vmem>>, vector<1x64x64xf32>
    %99 = vector.shape_cast %98 : vector<1x64x64xf32> to vector<64x64xf32>
    %cst_57 = arith.constant dense<0.000000e+00> : vector<128x64xf32>
    %100 = tpu.matmul %97, %99, %cst_57 {dimension_numbers = #tpu.dot_dimension_numbers<[1], [0], [0], [1], [0, 0, 1, 1], [], []>} : vector<128x64xf32>, vector<64x64xf32>, vector<128x64xf32> -> vector<128x64xf32>
    %c3_58 = arith.constant 3 : index
    %c0_59 = arith.constant 0 : index
    %c0_60 = arith.constant 0 : index
    %101 = vector.load %arg2[%c3_58, %c0_59, %c0_60] : memref<4x1x64xf32, #tpu.memory_space<vmem>>, vector<1x1x64xf32>
    %102 = vector.shape_cast %101 : vector<1x1x64xf32> to vector<1x64xf32>
    %103 = vector.broadcast %102 : vector<1x64xf32> to vector<128x64xf32>
    %104 = arith.addf %100, %103 : vector<128x64xf32>
    %105 = math.tanh %104 : vector<128x64xf32>
    %106 = vector.extract_strided_slice %105 {offsets = [0, 0], sizes = [128, 32], strides = [1, 1]} : vector<128x64xf32> to vector<128x32xf32>
    %107 = vector.extract_strided_slice %105 {offsets = [0, 32], sizes = [128, 32], strides = [1, 1]} : vector<128x64xf32> to vector<128x32xf32>
    %cst_61 = arith.constant 5.000000e-01 : f32
    %108 = vector.broadcast %cst_61 : f32 to vector<128x32xf32>
    %109 = arith.mulf %108, %107 : vector<128x32xf32>
    %cst_62 = arith.constant 5.000000e-01 : f32
    %110 = vector.broadcast %cst_62 : f32 to vector<128x32xf32>
    %111 = arith.addf %109, %110 : vector<128x32xf32>
    %112 = arith.mulf %106, %111 : vector<128x32xf32>
    %c3_63 = arith.constant 3 : index
    %c0_64 = arith.constant 0 : index
    %c0_65 = arith.constant 0 : index
    %113 = vector.load %arg3[%c3_63, %c0_64, %c0_65] : memref<4x32x32xf32, #tpu.memory_space<vmem>>, vector<1x32x32xf32>
    %114 = vector.shape_cast %113 : vector<1x32x32xf32> to vector<32x32xf32>
    %cst_66 = arith.constant dense<0.000000e+00> : vector<128x32xf32>
    %115 = tpu.matmul %112, %114, %cst_66 {dimension_numbers = #tpu.dot_dimension_numbers<[1], [0], [0], [1], [0, 0, 1, 1], [], []>} : vector<128x32xf32>, vector<32x32xf32>, vector<128x32xf32> -> vector<128x32xf32>
    %116 = arith.addf %90, %115 : vector<128x32xf32>
    %c3_67 = arith.constant 3 : index
    %c0_68 = arith.constant 0 : index
    %c0_69 = arith.constant 0 : index
    %117 = vector.load %arg4[%c3_67, %c0_68, %c0_69] : memref<4x1x32xf32, #tpu.memory_space<vmem>>, vector<1x1x32xf32>
    %118 = vector.shape_cast %117 : vector<1x1x32xf32> to vector<1x32xf32>
    %119 = vector.broadcast %118 : vector<1x32xf32> to vector<128x32xf32>
    %120 = arith.addf %116, %119 : vector<128x32xf32>
    %c0_70 = arith.constant 0 : index
    %c0_71 = arith.constant 0 : index
    %c0_72 = arith.constant 0 : index
    %121 = vector.load %arg5[%c0_70, %c0_71, %c0_72] : memref<2x32x96xf32, #tpu.memory_space<vmem>>, vector<1x32x96xf32>
    %122 = vector.shape_cast %121 : vector<1x32x96xf32> to vector<32x96xf32>
    %c1_73 = arith.constant 1 : index
    %c0_74 = arith.constant 0 : index
    %c0_75 = arith.constant 0 : index
    %123 = vector.load %arg5[%c1_73, %c0_74, %c0_75] : memref<2x32x96xf32, #tpu.memory_space<vmem>>, vector<1x32x96xf32>
    %124 = vector.shape_cast %123 : vector<1x32x96xf32> to vector<32x96xf32>
    %c0_76 = arith.constant 0 : index
    %c0_77 = arith.constant 0 : index
    %c0_78 = arith.constant 0 : index
    %125 = vector.load %arg6[%c0_76, %c0_77, %c0_78] : memref<2x1x96xf32, #tpu.memory_space<vmem>>, vector<1x1x96xf32>
    %126 = vector.shape_cast %125 : vector<1x1x96xf32> to vector<1x96xf32>
    %c1_79 = arith.constant 1 : index
    %c0_80 = arith.constant 0 : index
    %c0_81 = arith.constant 0 : index
    %127 = vector.load %arg6[%c1_79, %c0_80, %c0_81] : memref<2x1x96xf32, #tpu.memory_space<vmem>>, vector<1x1x96xf32>
    %128 = vector.shape_cast %127 : vector<1x1x96xf32> to vector<1x96xf32>
    %cst_82 = arith.constant dense<0.000000e+00> : vector<128x96xf32>
    %129 = tpu.matmul %120, %122, %cst_82 {dimension_numbers = #tpu.dot_dimension_numbers<[1], [0], [0], [1], [0, 0, 1, 1], [], []>} : vector<128x32xf32>, vector<32x96xf32>, vector<128x96xf32> -> vector<128x96xf32>
    %130 = vector.broadcast %126 : vector<1x96xf32> to vector<128x96xf32>
    %131 = arith.addf %129, %130 : vector<128x96xf32>
    %c0_83 = arith.constant 0 : index
    %c0_84 = arith.constant 0 : index
    %132 = vector.load %arg10[%c0_83, %c0_84] : memref<128x96xf32, #tpu.memory_space<vmem>>, vector<128x96xf32>
    tpu.vector_store %arg10[%c0_83, %c0_84], %131 {strides = array<i32>} : memref<128x96xf32, #tpu.memory_space<vmem>>, vector<128x96xf32>,
    %cst_85 = arith.constant 0.000000e+00 : f32
    %133 = vector.broadcast %cst_85 : f32 to vector<8x32xf32>
    %c0_86 = arith.constant 0 : index
    %c0_87 = arith.constant 0 : index
    %134 = vector.load %arg10[%c0_86, %c0_87] : memref<128x96xf32, #tpu.memory_space<vmem>>, vector<8x96xf32>
    %cst_88 = arith.constant dense<0.000000e+00> : vector<8x96xf32>
    %135 = tpu.matmul %133, %124, %cst_88 {dimension_numbers = #tpu.dot_dimension_numbers<[1], [0], [0], [1], [0, 0, 1, 1], [], []>} : vector<8x32xf32>, vector<32x96xf32>, vector<8x96xf32> -> vector<8x96xf32>
    %136 = vector.broadcast %128 : vector<1x96xf32> to vector<8x96xf32>
    %137 = arith.addf %135, %136 : vector<8x96xf32>
    %138 = vector.extract_strided_slice %134 {offsets = [0, 0], sizes = [8, 64], strides = [1, 1]} : vector<8x96xf32> to vector<8x64xf32>
    %139 = vector.extract_strided_slice %137 {offsets = [0, 0], sizes = [8, 64], strides = [1, 1]} : vector<8x96xf32> to vector<8x64xf32>
    %140 = arith.addf %138, %139 : vector<8x64xf32>
    %141 = arith.negf %140 : vector<8x64xf32>
    %142 = math.exp %141 : vector<8x64xf32>
    %cst_89 = arith.constant 1.000000e+00 : f32
    %143 = vector.broadcast %cst_89 : f32 to vector<8x64xf32>
    %144 = arith.addf %143, %142 : vector<8x64xf32>
    %145 = arith.divf %143, %144 : vector<8x64xf32>
    %146 = vector.extract_strided_slice %145 {offsets = [0, 0], sizes = [8, 32], strides = [1, 1]} : vector<8x64xf32> to vector<8x32xf32>
    %147 = vector.extract_strided_slice %145 {offsets = [0, 32], sizes = [8, 32], strides = [1, 1]} : vector<8x64xf32> to vector<8x32xf32>
    %148 = vector.extract_strided_slice %134 {offsets = [0, 64], sizes = [8, 32], strides = [1, 1]} : vector<8x96xf32> to vector<8x32xf32>
    %149 = vector.extract_strided_slice %137 {offsets = [0, 64], sizes = [8, 32], strides = [1, 1]} : vector<8x96xf32> to vector<8x32xf32>
    %150 = arith.mulf %146, %149 : vector<8x32xf32>
    %151 = arith.addf %148, %150 : vector<8x32xf32>
    %152 = math.tanh %151 : vector<8x32xf32>
    %cst_90 = arith.constant 1.000000e+00 : f32
    %153 = vector.broadcast %cst_90 : f32 to vector<8x32xf32>
    %154 = arith.subf %153, %147 : vector<8x32xf32>
    %155 = arith.mulf %154, %152 : vector<8x32xf32>
    %156 = arith.mulf %147, %133 : vector<8x32xf32>
    %157 = arith.addf %155, %156 : vector<8x32xf32>
    %c8 = arith.constant 8 : index
    %c0_91 = arith.constant 0 : index
    %158 = vector.load %arg10[%c8, %c0_91] : memref<128x96xf32, #tpu.memory_space<vmem>>, vector<8x96xf32>
    %cst_92 = arith.constant dense<0.000000e+00> : vector<8x96xf32>
    %159 = tpu.matmul %157, %124, %cst_92 {dimension_numbers = #tpu.dot_dimension_numbers<[1], [0], [0], [1], [0, 0, 1, 1], [], []>} : vector<8x32xf32>, vector<32x96xf32>, vector<8x96xf32> -> vector<8x96xf32>
    %160 = vector.broadcast %128 : vector<1x96xf32> to vector<8x96xf32>
    %161 = arith.addf %159, %160 : vector<8x96xf32>
    %162 = vector.extract_strided_slice %158 {offsets = [0, 0], sizes = [8, 64], strides = [1, 1]} : vector<8x96xf32> to vector<8x64xf32>
    %163 = vector.extract_strided_slice %161 {offsets = [0, 0], sizes = [8, 64], strides = [1, 1]} : vector<8x96xf32> to vector<8x64xf32>
    %164 = arith.addf %162, %163 : vector<8x64xf32>
    %165 = arith.negf %164 : vector<8x64xf32>
    %166 = math.exp %165 : vector<8x64xf32>
    %cst_93 = arith.constant 1.000000e+00 : f32
    %167 = vector.broadcast %cst_93 : f32 to vector<8x64xf32>
    %168 = arith.addf %167, %166 : vector<8x64xf32>
    %169 = arith.divf %167, %168 : vector<8x64xf32>
    %170 = vector.extract_strided_slice %169 {offsets = [0, 0], sizes = [8, 32], strides = [1, 1]} : vector<8x64xf32> to vector<8x32xf32>
    %171 = vector.extract_strided_slice %169 {offsets = [0, 32], sizes = [8, 32], strides = [1, 1]} : vector<8x64xf32> to vector<8x32xf32>
    %172 = vector.extract_strided_slice %158 {offsets = [0, 64], sizes = [8, 32], strides = [1, 1]} : vector<8x96xf32> to vector<8x32xf32>
    %173 = vector.extract_strided_slice %161 {offsets = [0, 64], sizes = [8, 32], strides = [1, 1]} : vector<8x96xf32> to vector<8x32xf32>
    %174 = arith.mulf %170, %173 : vector<8x32xf32>
    %175 = arith.addf %172, %174 : vector<8x32xf32>
    %176 = math.tanh %175 : vector<8x32xf32>
    %cst_94 = arith.constant 1.000000e+00 : f32
    %177 = vector.broadcast %cst_94 : f32 to vector<8x32xf32>
    %178 = arith.subf %177, %171 : vector<8x32xf32>
    %179 = arith.mulf %178, %176 : vector<8x32xf32>
    %180 = arith.mulf %171, %157 : vector<8x32xf32>
    %181 = arith.addf %179, %180 : vector<8x32xf32>
    %c16 = arith.constant 16 : index
    %c0_95 = arith.constant 0 : index
    %182 = vector.load %arg10[%c16, %c0_95] : memref<128x96xf32, #tpu.memory_space<vmem>>, vector<8x96xf32>
    %cst_96 = arith.constant dense<0.000000e+00> : vector<8x96xf32>
    %183 = tpu.matmul %181, %124, %cst_96 {dimension_numbers = #tpu.dot_dimension_numbers<[1], [0], [0], [1], [0, 0, 1, 1], [], []>} : vector<8x32xf32>, vector<32x96xf32>, vector<8x96xf32> -> vector<8x96xf32>
    %184 = vector.broadcast %128 : vector<1x96xf32> to vector<8x96xf32>
    %185 = arith.addf %183, %184 : vector<8x96xf32>
    %186 = vector.extract_strided_slice %182 {offsets = [0, 0], sizes = [8, 64], strides = [1, 1]} : vector<8x96xf32> to vector<8x64xf32>
    %187 = vector.extract_strided_slice %185 {offsets = [0, 0], sizes = [8, 64], strides = [1, 1]} : vector<8x96xf32> to vector<8x64xf32>
    %188 = arith.addf %186, %187 : vector<8x64xf32>
    %189 = arith.negf %188 : vector<8x64xf32>
    %190 = math.exp %189 : vector<8x64xf32>
    %cst_97 = arith.constant 1.000000e+00 : f32
    %191 = vector.broadcast %cst_97 : f32 to vector<8x64xf32>
    %192 = arith.addf %191, %190 : vector<8x64xf32>
    %193 = arith.divf %191, %192 : vector<8x64xf32>
    %194 = vector.extract_strided_slice %193 {offsets = [0, 0], sizes = [8, 32], strides = [1, 1]} : vector<8x64xf32> to vector<8x32xf32>
    %195 = vector.extract_strided_slice %193 {offsets = [0, 32], sizes = [8, 32], strides = [1, 1]} : vector<8x64xf32> to vector<8x32xf32>
    %196 = vector.extract_strided_slice %182 {offsets = [0, 64], sizes = [8, 32], strides = [1, 1]} : vector<8x96xf32> to vector<8x32xf32>
    %197 = vector.extract_strided_slice %185 {offsets = [0, 64], sizes = [8, 32], strides = [1, 1]} : vector<8x96xf32> to vector<8x32xf32>
    %198 = arith.mulf %194, %197 : vector<8x32xf32>
    %199 = arith.addf %196, %198 : vector<8x32xf32>
    %200 = math.tanh %199 : vector<8x32xf32>
    %cst_98 = arith.constant 1.000000e+00 : f32
    %201 = vector.broadcast %cst_98 : f32 to vector<8x32xf32>
    %202 = arith.subf %201, %195 : vector<8x32xf32>
    %203 = arith.mulf %202, %200 : vector<8x32xf32>
    %204 = arith.mulf %195, %181 : vector<8x32xf32>
    %205 = arith.addf %203, %204 : vector<8x32xf32>
    %c24 = arith.constant 24 : index
    %c0_99 = arith.constant 0 : index
    %206 = vector.load %arg10[%c24, %c0_99] : memref<128x96xf32, #tpu.memory_space<vmem>>, vector<8x96xf32>
    %cst_100 = arith.constant dense<0.000000e+00> : vector<8x96xf32>
    %207 = tpu.matmul %205, %124, %cst_100 {dimension_numbers = #tpu.dot_dimension_numbers<[1], [0], [0], [1], [0, 0, 1, 1], [], []>} : vector<8x32xf32>, vector<32x96xf32>, vector<8x96xf32> -> vector<8x96xf32>
    %208 = vector.broadcast %128 : vector<1x96xf32> to vector<8x96xf32>
    %209 = arith.addf %207, %208 : vector<8x96xf32>
    %210 = vector.extract_strided_slice %206 {offsets = [0, 0], sizes = [8, 64], strides = [1, 1]} : vector<8x96xf32> to vector<8x64xf32>
    %211 = vector.extract_strided_slice %209 {offsets = [0, 0], sizes = [8, 64], strides = [1, 1]} : vector<8x96xf32> to vector<8x64xf32>
    %212 = arith.addf %210, %211 : vector<8x64xf32>
    %213 = arith.negf %212 : vector<8x64xf32>
    %214 = math.exp %213 : vector<8x64xf32>
    %cst_101 = arith.constant 1.000000e+00 : f32
    %215 = vector.broadcast %cst_101 : f32 to vector<8x64xf32>
    %216 = arith.addf %215, %214 : vector<8x64xf32>
    %217 = arith.divf %215, %216 : vector<8x64xf32>
    %218 = vector.extract_strided_slice %217 {offsets = [0, 0], sizes = [8, 32], strides = [1, 1]} : vector<8x64xf32> to vector<8x32xf32>
    %219 = vector.extract_strided_slice %217 {offsets = [0, 32], sizes = [8, 32], strides = [1, 1]} : vector<8x64xf32> to vector<8x32xf32>
    %220 = vector.extract_strided_slice %206 {offsets = [0, 64], sizes = [8, 32], strides = [1, 1]} : vector<8x96xf32> to vector<8x32xf32>
    %221 = vector.extract_strided_slice %209 {offsets = [0, 64], sizes = [8, 32], strides = [1, 1]} : vector<8x96xf32> to vector<8x32xf32>
    %222 = arith.mulf %218, %221 : vector<8x32xf32>
    %223 = arith.addf %220, %222 : vector<8x32xf32>
    %224 = math.tanh %223 : vector<8x32xf32>
    %cst_102 = arith.constant 1.000000e+00 : f32
    %225 = vector.broadcast %cst_102 : f32 to vector<8x32xf32>
    %226 = arith.subf %225, %219 : vector<8x32xf32>
    %227 = arith.mulf %226, %224 : vector<8x32xf32>
    %228 = arith.mulf %219, %205 : vector<8x32xf32>
    %229 = arith.addf %227, %228 : vector<8x32xf32>
    %c32 = arith.constant 32 : index
    %c0_103 = arith.constant 0 : index
    %230 = vector.load %arg10[%c32, %c0_103] : memref<128x96xf32, #tpu.memory_space<vmem>>, vector<8x96xf32>
    %cst_104 = arith.constant dense<0.000000e+00> : vector<8x96xf32>
    %231 = tpu.matmul %229, %124, %cst_104 {dimension_numbers = #tpu.dot_dimension_numbers<[1], [0], [0], [1], [0, 0, 1, 1], [], []>} : vector<8x32xf32>, vector<32x96xf32>, vector<8x96xf32> -> vector<8x96xf32>
    %232 = vector.broadcast %128 : vector<1x96xf32> to vector<8x96xf32>
    %233 = arith.addf %231, %232 : vector<8x96xf32>
    %234 = vector.extract_strided_slice %230 {offsets = [0, 0], sizes = [8, 64], strides = [1, 1]} : vector<8x96xf32> to vector<8x64xf32>
    %235 = vector.extract_strided_slice %233 {offsets = [0, 0], sizes = [8, 64], strides = [1, 1]} : vector<8x96xf32> to vector<8x64xf32>
    %236 = arith.addf %234, %235 : vector<8x64xf32>
    %237 = arith.negf %236 : vector<8x64xf32>
    %238 = math.exp %237 : vector<8x64xf32>
    %cst_105 = arith.constant 1.000000e+00 : f32
    %239 = vector.broadcast %cst_105 : f32 to vector<8x64xf32>
    %240 = arith.addf %239, %238 : vector<8x64xf32>
    %241 = arith.divf %239, %240 : vector<8x64xf32>
    %242 = vector.extract_strided_slice %241 {offsets = [0, 0], sizes = [8, 32], strides = [1, 1]} : vector<8x64xf32> to vector<8x32xf32>
    %243 = vector.extract_strided_slice %241 {offsets = [0, 32], sizes = [8, 32], strides = [1, 1]} : vector<8x64xf32> to vector<8x32xf32>
    %244 = vector.extract_strided_slice %230 {offsets = [0, 64], sizes = [8, 32], strides = [1, 1]} : vector<8x96xf32> to vector<8x32xf32>
    %245 = vector.extract_strided_slice %233 {offsets = [0, 64], sizes = [8, 32], strides = [1, 1]} : vector<8x96xf32> to vector<8x32xf32>
    %246 = arith.mulf %242, %245 : vector<8x32xf32>
    %247 = arith.addf %244, %246 : vector<8x32xf32>
    %248 = math.tanh %247 : vector<8x32xf32>
    %cst_106 = arith.constant 1.000000e+00 : f32
    %249 = vector.broadcast %cst_106 : f32 to vector<8x32xf32>
    %250 = arith.subf %249, %243 : vector<8x32xf32>
    %251 = arith.mulf %250, %248 : vector<8x32xf32>
    %252 = arith.mulf %243, %229 : vector<8x32xf32>
    %253 = arith.addf %251, %252 : vector<8x32xf32>
    %c40 = arith.constant 40 : index
    %c0_107 = arith.constant 0 : index
    %254 = vector.load %arg10[%c40, %c0_107] : memref<128x96xf32, #tpu.memory_space<vmem>>, vector<8x96xf32>
    %cst_108 = arith.constant dense<0.000000e+00> : vector<8x96xf32>
    %255 = tpu.matmul %253, %124, %cst_108 {dimension_numbers = #tpu.dot_dimension_numbers<[1], [0], [0], [1], [0, 0, 1, 1], [], []>} : vector<8x32xf32>, vector<32x96xf32>, vector<8x96xf32> -> vector<8x96xf32>
    %256 = vector.broadcast %128 : vector<1x96xf32> to vector<8x96xf32>
    %257 = arith.addf %255, %256 : vector<8x96xf32>
    %258 = vector.extract_strided_slice %254 {offsets = [0, 0], sizes = [8, 64], strides = [1, 1]} : vector<8x96xf32> to vector<8x64xf32>
    %259 = vector.extract_strided_slice %257 {offsets = [0, 0], sizes = [8, 64], strides = [1, 1]} : vector<8x96xf32> to vector<8x64xf32>
    %260 = arith.addf %258, %259 : vector<8x64xf32>
    %261 = arith.negf %260 : vector<8x64xf32>
    %262 = math.exp %261 : vector<8x64xf32>
    %cst_109 = arith.constant 1.000000e+00 : f32
    %263 = vector.broadcast %cst_109 : f32 to vector<8x64xf32>
    %264 = arith.addf %263, %262 : vector<8x64xf32>
    %265 = arith.divf %263, %264 : vector<8x64xf32>
    %266 = vector.extract_strided_slice %265 {offsets = [0, 0], sizes = [8, 32], strides = [1, 1]} : vector<8x64xf32> to vector<8x32xf32>
    %267 = vector.extract_strided_slice %265 {offsets = [0, 32], sizes = [8, 32], strides = [1, 1]} : vector<8x64xf32> to vector<8x32xf32>
    %268 = vector.extract_strided_slice %254 {offsets = [0, 64], sizes = [8, 32], strides = [1, 1]} : vector<8x96xf32> to vector<8x32xf32>
    %269 = vector.extract_strided_slice %257 {offsets = [0, 64], sizes = [8, 32], strides = [1, 1]} : vector<8x96xf32> to vector<8x32xf32>
    %270 = arith.mulf %266, %269 : vector<8x32xf32>
    %271 = arith.addf %268, %270 : vector<8x32xf32>
    %272 = math.tanh %271 : vector<8x32xf32>
    %cst_110 = arith.constant 1.000000e+00 : f32
    %273 = vector.broadcast %cst_110 : f32 to vector<8x32xf32>
    %274 = arith.subf %273, %267 : vector<8x32xf32>
    %275 = arith.mulf %274, %272 : vector<8x32xf32>
    %276 = arith.mulf %267, %253 : vector<8x32xf32>
    %277 = arith.addf %275, %276 : vector<8x32xf32>
    %c48 = arith.constant 48 : index
    %c0_111 = arith.constant 0 : index
    %278 = vector.load %arg10[%c48, %c0_111] : memref<128x96xf32, #tpu.memory_space<vmem>>, vector<8x96xf32>
    %cst_112 = arith.constant dense<0.000000e+00> : vector<8x96xf32>
    %279 = tpu.matmul %277, %124, %cst_112 {dimension_numbers = #tpu.dot_dimension_numbers<[1], [0], [0], [1], [0, 0, 1, 1], [], []>} : vector<8x32xf32>, vector<32x96xf32>, vector<8x96xf32> -> vector<8x96xf32>
    %280 = vector.broadcast %128 : vector<1x96xf32> to vector<8x96xf32>
    %281 = arith.addf %279, %280 : vector<8x96xf32>
    %282 = vector.extract_strided_slice %278 {offsets = [0, 0], sizes = [8, 64], strides = [1, 1]} : vector<8x96xf32> to vector<8x64xf32>
    %283 = vector.extract_strided_slice %281 {offsets = [0, 0], sizes = [8, 64], strides = [1, 1]} : vector<8x96xf32> to vector<8x64xf32>
    %284 = arith.addf %282, %283 : vector<8x64xf32>
    %285 = arith.negf %284 : vector<8x64xf32>
    %286 = math.exp %285 : vector<8x64xf32>
    %cst_113 = arith.constant 1.000000e+00 : f32
    %287 = vector.broadcast %cst_113 : f32 to vector<8x64xf32>
    %288 = arith.addf %287, %286 : vector<8x64xf32>
    %289 = arith.divf %287, %288 : vector<8x64xf32>
    %290 = vector.extract_strided_slice %289 {offsets = [0, 0], sizes = [8, 32], strides = [1, 1]} : vector<8x64xf32> to vector<8x32xf32>
    %291 = vector.extract_strided_slice %289 {offsets = [0, 32], sizes = [8, 32], strides = [1, 1]} : vector<8x64xf32> to vector<8x32xf32>
    %292 = vector.extract_strided_slice %278 {offsets = [0, 64], sizes = [8, 32], strides = [1, 1]} : vector<8x96xf32> to vector<8x32xf32>
    %293 = vector.extract_strided_slice %281 {offsets = [0, 64], sizes = [8, 32], strides = [1, 1]} : vector<8x96xf32> to vector<8x32xf32>
    %294 = arith.mulf %290, %293 : vector<8x32xf32>
    %295 = arith.addf %292, %294 : vector<8x32xf32>
    %296 = math.tanh %295 : vector<8x32xf32>
    %cst_114 = arith.constant 1.000000e+00 : f32
    %297 = vector.broadcast %cst_114 : f32 to vector<8x32xf32>
    %298 = arith.subf %297, %291 : vector<8x32xf32>
    %299 = arith.mulf %298, %296 : vector<8x32xf32>
    %300 = arith.mulf %291, %277 : vector<8x32xf32>
    %301 = arith.addf %299, %300 : vector<8x32xf32>
    %c56 = arith.constant 56 : index
    %c0_115 = arith.constant 0 : index
    %302 = vector.load %arg10[%c56, %c0_115] : memref<128x96xf32, #tpu.memory_space<vmem>>, vector<8x96xf32>
    %cst_116 = arith.constant dense<0.000000e+00> : vector<8x96xf32>
    %303 = tpu.matmul %301, %124, %cst_116 {dimension_numbers = #tpu.dot_dimension_numbers<[1], [0], [0], [1], [0, 0, 1, 1], [], []>} : vector<8x32xf32>, vector<32x96xf32>, vector<8x96xf32> -> vector<8x96xf32>
    %304 = vector.broadcast %128 : vector<1x96xf32> to vector<8x96xf32>
    %305 = arith.addf %303, %304 : vector<8x96xf32>
    %306 = vector.extract_strided_slice %302 {offsets = [0, 0], sizes = [8, 64], strides = [1, 1]} : vector<8x96xf32> to vector<8x64xf32>
    %307 = vector.extract_strided_slice %305 {offsets = [0, 0], sizes = [8, 64], strides = [1, 1]} : vector<8x96xf32> to vector<8x64xf32>
    %308 = arith.addf %306, %307 : vector<8x64xf32>
    %309 = arith.negf %308 : vector<8x64xf32>
    %310 = math.exp %309 : vector<8x64xf32>
    %cst_117 = arith.constant 1.000000e+00 : f32
    %311 = vector.broadcast %cst_117 : f32 to vector<8x64xf32>
    %312 = arith.addf %311, %310 : vector<8x64xf32>
    %313 = arith.divf %311, %312 : vector<8x64xf32>
    %314 = vector.extract_strided_slice %313 {offsets = [0, 0], sizes = [8, 32], strides = [1, 1]} : vector<8x64xf32> to vector<8x32xf32>
    %315 = vector.extract_strided_slice %313 {offsets = [0, 32], sizes = [8, 32], strides = [1, 1]} : vector<8x64xf32> to vector<8x32xf32>
    %316 = vector.extract_strided_slice %302 {offsets = [0, 64], sizes = [8, 32], strides = [1, 1]} : vector<8x96xf32> to vector<8x32xf32>
    %317 = vector.extract_strided_slice %305 {offsets = [0, 64], sizes = [8, 32], strides = [1, 1]} : vector<8x96xf32> to vector<8x32xf32>
    %318 = arith.mulf %314, %317 : vector<8x32xf32>
    %319 = arith.addf %316, %318 : vector<8x32xf32>
    %320 = math.tanh %319 : vector<8x32xf32>
    %cst_118 = arith.constant 1.000000e+00 : f32
    %321 = vector.broadcast %cst_118 : f32 to vector<8x32xf32>
    %322 = arith.subf %321, %315 : vector<8x32xf32>
    %323 = arith.mulf %322, %320 : vector<8x32xf32>
    %324 = arith.mulf %315, %301 : vector<8x32xf32>
    %325 = arith.addf %323, %324 : vector<8x32xf32>
    %c64 = arith.constant 64 : index
    %c0_119 = arith.constant 0 : index
    %326 = vector.load %arg10[%c64, %c0_119] : memref<128x96xf32, #tpu.memory_space<vmem>>, vector<8x96xf32>
    %cst_120 = arith.constant dense<0.000000e+00> : vector<8x96xf32>
    %327 = tpu.matmul %325, %124, %cst_120 {dimension_numbers = #tpu.dot_dimension_numbers<[1], [0], [0], [1], [0, 0, 1, 1], [], []>} : vector<8x32xf32>, vector<32x96xf32>, vector<8x96xf32> -> vector<8x96xf32>
    %328 = vector.broadcast %128 : vector<1x96xf32> to vector<8x96xf32>
    %329 = arith.addf %327, %328 : vector<8x96xf32>
    %330 = vector.extract_strided_slice %326 {offsets = [0, 0], sizes = [8, 64], strides = [1, 1]} : vector<8x96xf32> to vector<8x64xf32>
    %331 = vector.extract_strided_slice %329 {offsets = [0, 0], sizes = [8, 64], strides = [1, 1]} : vector<8x96xf32> to vector<8x64xf32>
    %332 = arith.addf %330, %331 : vector<8x64xf32>
    %333 = arith.negf %332 : vector<8x64xf32>
    %334 = math.exp %333 : vector<8x64xf32>
    %cst_121 = arith.constant 1.000000e+00 : f32
    %335 = vector.broadcast %cst_121 : f32 to vector<8x64xf32>
    %336 = arith.addf %335, %334 : vector<8x64xf32>
    %337 = arith.divf %335, %336 : vector<8x64xf32>
    %338 = vector.extract_strided_slice %337 {offsets = [0, 0], sizes = [8, 32], strides = [1, 1]} : vector<8x64xf32> to vector<8x32xf32>
    %339 = vector.extract_strided_slice %337 {offsets = [0, 32], sizes = [8, 32], strides = [1, 1]} : vector<8x64xf32> to vector<8x32xf32>
    %340 = vector.extract_strided_slice %326 {offsets = [0, 64], sizes = [8, 32], strides = [1, 1]} : vector<8x96xf32> to vector<8x32xf32>
    %341 = vector.extract_strided_slice %329 {offsets = [0, 64], sizes = [8, 32], strides = [1, 1]} : vector<8x96xf32> to vector<8x32xf32>
    %342 = arith.mulf %338, %341 : vector<8x32xf32>
    %343 = arith.addf %340, %342 : vector<8x32xf32>
    %344 = math.tanh %343 : vector<8x32xf32>
    %cst_122 = arith.constant 1.000000e+00 : f32
    %345 = vector.broadcast %cst_122 : f32 to vector<8x32xf32>
    %346 = arith.subf %345, %339 : vector<8x32xf32>
    %347 = arith.mulf %346, %344 : vector<8x32xf32>
    %348 = arith.mulf %339, %325 : vector<8x32xf32>
    %349 = arith.addf %347, %348 : vector<8x32xf32>
    %c72 = arith.constant 72 : index
    %c0_123 = arith.constant 0 : index
    %350 = vector.load %arg10[%c72, %c0_123] : memref<128x96xf32, #tpu.memory_space<vmem>>, vector<8x96xf32>
    %cst_124 = arith.constant dense<0.000000e+00> : vector<8x96xf32>
    %351 = tpu.matmul %349, %124, %cst_124 {dimension_numbers = #tpu.dot_dimension_numbers<[1], [0], [0], [1], [0, 0, 1, 1], [], []>} : vector<8x32xf32>, vector<32x96xf32>, vector<8x96xf32> -> vector<8x96xf32>
    %352 = vector.broadcast %128 : vector<1x96xf32> to vector<8x96xf32>
    %353 = arith.addf %351, %352 : vector<8x96xf32>
    %354 = vector.extract_strided_slice %350 {offsets = [0, 0], sizes = [8, 64], strides = [1, 1]} : vector<8x96xf32> to vector<8x64xf32>
    %355 = vector.extract_strided_slice %353 {offsets = [0, 0], sizes = [8, 64], strides = [1, 1]} : vector<8x96xf32> to vector<8x64xf32>
    %356 = arith.addf %354, %355 : vector<8x64xf32>
    %357 = arith.negf %356 : vector<8x64xf32>
    %358 = math.exp %357 : vector<8x64xf32>
    %cst_125 = arith.constant 1.000000e+00 : f32
    %359 = vector.broadcast %cst_125 : f32 to vector<8x64xf32>
    %360 = arith.addf %359, %358 : vector<8x64xf32>
    %361 = arith.divf %359, %360 : vector<8x64xf32>
    %362 = vector.extract_strided_slice %361 {offsets = [0, 0], sizes = [8, 32], strides = [1, 1]} : vector<8x64xf32> to vector<8x32xf32>
    %363 = vector.extract_strided_slice %361 {offsets = [0, 32], sizes = [8, 32], strides = [1, 1]} : vector<8x64xf32> to vector<8x32xf32>
    %364 = vector.extract_strided_slice %350 {offsets = [0, 64], sizes = [8, 32], strides = [1, 1]} : vector<8x96xf32> to vector<8x32xf32>
    %365 = vector.extract_strided_slice %353 {offsets = [0, 64], sizes = [8, 32], strides = [1, 1]} : vector<8x96xf32> to vector<8x32xf32>
    %366 = arith.mulf %362, %365 : vector<8x32xf32>
    %367 = arith.addf %364, %366 : vector<8x32xf32>
    %368 = math.tanh %367 : vector<8x32xf32>
    %cst_126 = arith.constant 1.000000e+00 : f32
    %369 = vector.broadcast %cst_126 : f32 to vector<8x32xf32>
    %370 = arith.subf %369, %363 : vector<8x32xf32>
    %371 = arith.mulf %370, %368 : vector<8x32xf32>
    %372 = arith.mulf %363, %349 : vector<8x32xf32>
    %373 = arith.addf %371, %372 : vector<8x32xf32>
    %c80 = arith.constant 80 : index
    %c0_127 = arith.constant 0 : index
    %374 = vector.load %arg10[%c80, %c0_127] : memref<128x96xf32, #tpu.memory_space<vmem>>, vector<8x96xf32>
    %cst_128 = arith.constant dense<0.000000e+00> : vector<8x96xf32>
    %375 = tpu.matmul %373, %124, %cst_128 {dimension_numbers = #tpu.dot_dimension_numbers<[1], [0], [0], [1], [0, 0, 1, 1], [], []>} : vector<8x32xf32>, vector<32x96xf32>, vector<8x96xf32> -> vector<8x96xf32>
    %376 = vector.broadcast %128 : vector<1x96xf32> to vector<8x96xf32>
    %377 = arith.addf %375, %376 : vector<8x96xf32>
    %378 = vector.extract_strided_slice %374 {offsets = [0, 0], sizes = [8, 64], strides = [1, 1]} : vector<8x96xf32> to vector<8x64xf32>
    %379 = vector.extract_strided_slice %377 {offsets = [0, 0], sizes = [8, 64], strides = [1, 1]} : vector<8x96xf32> to vector<8x64xf32>
    %380 = arith.addf %378, %379 : vector<8x64xf32>
    %381 = arith.negf %380 : vector<8x64xf32>
    %382 = math.exp %381 : vector<8x64xf32>
    %cst_129 = arith.constant 1.000000e+00 : f32
    %383 = vector.broadcast %cst_129 : f32 to vector<8x64xf32>
    %384 = arith.addf %383, %382 : vector<8x64xf32>
    %385 = arith.divf %383, %384 : vector<8x64xf32>
    %386 = vector.extract_strided_slice %385 {offsets = [0, 0], sizes = [8, 32], strides = [1, 1]} : vector<8x64xf32> to vector<8x32xf32>
    %387 = vector.extract_strided_slice %385 {offsets = [0, 32], sizes = [8, 32], strides = [1, 1]} : vector<8x64xf32> to vector<8x32xf32>
    %388 = vector.extract_strided_slice %374 {offsets = [0, 64], sizes = [8, 32], strides = [1, 1]} : vector<8x96xf32> to vector<8x32xf32>
    %389 = vector.extract_strided_slice %377 {offsets = [0, 64], sizes = [8, 32], strides = [1, 1]} : vector<8x96xf32> to vector<8x32xf32>
    %390 = arith.mulf %386, %389 : vector<8x32xf32>
    %391 = arith.addf %388, %390 : vector<8x32xf32>
    %392 = math.tanh %391 : vector<8x32xf32>
    %cst_130 = arith.constant 1.000000e+00 : f32
    %393 = vector.broadcast %cst_130 : f32 to vector<8x32xf32>
    %394 = arith.subf %393, %387 : vector<8x32xf32>
    %395 = arith.mulf %394, %392 : vector<8x32xf32>
    %396 = arith.mulf %387, %373 : vector<8x32xf32>
    %397 = arith.addf %395, %396 : vector<8x32xf32>
    %c88 = arith.constant 88 : index
    %c0_131 = arith.constant 0 : index
    %398 = vector.load %arg10[%c88, %c0_131] : memref<128x96xf32, #tpu.memory_space<vmem>>, vector<8x96xf32>
    %cst_132 = arith.constant dense<0.000000e+00> : vector<8x96xf32>
    %399 = tpu.matmul %397, %124, %cst_132 {dimension_numbers = #tpu.dot_dimension_numbers<[1], [0], [0], [1], [0, 0, 1, 1], [], []>} : vector<8x32xf32>, vector<32x96xf32>, vector<8x96xf32> -> vector<8x96xf32>
    %400 = vector.broadcast %128 : vector<1x96xf32> to vector<8x96xf32>
    %401 = arith.addf %399, %400 : vector<8x96xf32>
    %402 = vector.extract_strided_slice %398 {offsets = [0, 0], sizes = [8, 64], strides = [1, 1]} : vector<8x96xf32> to vector<8x64xf32>
    %403 = vector.extract_strided_slice %401 {offsets = [0, 0], sizes = [8, 64], strides = [1, 1]} : vector<8x96xf32> to vector<8x64xf32>
    %404 = arith.addf %402, %403 : vector<8x64xf32>
    %405 = arith.negf %404 : vector<8x64xf32>
    %406 = math.exp %405 : vector<8x64xf32>
    %cst_133 = arith.constant 1.000000e+00 : f32
    %407 = vector.broadcast %cst_133 : f32 to vector<8x64xf32>
    %408 = arith.addf %407, %406 : vector<8x64xf32>
    %409 = arith.divf %407, %408 : vector<8x64xf32>
    %410 = vector.extract_strided_slice %409 {offsets = [0, 0], sizes = [8, 32], strides = [1, 1]} : vector<8x64xf32> to vector<8x32xf32>
    %411 = vector.extract_strided_slice %409 {offsets = [0, 32], sizes = [8, 32], strides = [1, 1]} : vector<8x64xf32> to vector<8x32xf32>
    %412 = vector.extract_strided_slice %398 {offsets = [0, 64], sizes = [8, 32], strides = [1, 1]} : vector<8x96xf32> to vector<8x32xf32>
    %413 = vector.extract_strided_slice %401 {offsets = [0, 64], sizes = [8, 32], strides = [1, 1]} : vector<8x96xf32> to vector<8x32xf32>
    %414 = arith.mulf %410, %413 : vector<8x32xf32>
    %415 = arith.addf %412, %414 : vector<8x32xf32>
    %416 = math.tanh %415 : vector<8x32xf32>
    %cst_134 = arith.constant 1.000000e+00 : f32
    %417 = vector.broadcast %cst_134 : f32 to vector<8x32xf32>
    %418 = arith.subf %417, %411 : vector<8x32xf32>
    %419 = arith.mulf %418, %416 : vector<8x32xf32>
    %420 = arith.mulf %411, %397 : vector<8x32xf32>
    %421 = arith.addf %419, %420 : vector<8x32xf32>
    %c96 = arith.constant 96 : index
    %c0_135 = arith.constant 0 : index
    %422 = vector.load %arg10[%c96, %c0_135] : memref<128x96xf32, #tpu.memory_space<vmem>>, vector<8x96xf32>
    %cst_136 = arith.constant dense<0.000000e+00> : vector<8x96xf32>
    %423 = tpu.matmul %421, %124, %cst_136 {dimension_numbers = #tpu.dot_dimension_numbers<[1], [0], [0], [1], [0, 0, 1, 1], [], []>} : vector<8x32xf32>, vector<32x96xf32>, vector<8x96xf32> -> vector<8x96xf32>
    %424 = vector.broadcast %128 : vector<1x96xf32> to vector<8x96xf32>
    %425 = arith.addf %423, %424 : vector<8x96xf32>
    %426 = vector.extract_strided_slice %422 {offsets = [0, 0], sizes = [8, 64], strides = [1, 1]} : vector<8x96xf32> to vector<8x64xf32>
    %427 = vector.extract_strided_slice %425 {offsets = [0, 0], sizes = [8, 64], strides = [1, 1]} : vector<8x96xf32> to vector<8x64xf32>
    %428 = arith.addf %426, %427 : vector<8x64xf32>
    %429 = arith.negf %428 : vector<8x64xf32>
    %430 = math.exp %429 : vector<8x64xf32>
    %cst_137 = arith.constant 1.000000e+00 : f32
    %431 = vector.broadcast %cst_137 : f32 to vector<8x64xf32>
    %432 = arith.addf %431, %430 : vector<8x64xf32>
    %433 = arith.divf %431, %432 : vector<8x64xf32>
    %434 = vector.extract_strided_slice %433 {offsets = [0, 0], sizes = [8, 32], strides = [1, 1]} : vector<8x64xf32> to vector<8x32xf32>
    %435 = vector.extract_strided_slice %433 {offsets = [0, 32], sizes = [8, 32], strides = [1, 1]} : vector<8x64xf32> to vector<8x32xf32>
    %436 = vector.extract_strided_slice %422 {offsets = [0, 64], sizes = [8, 32], strides = [1, 1]} : vector<8x96xf32> to vector<8x32xf32>
    %437 = vector.extract_strided_slice %425 {offsets = [0, 64], sizes = [8, 32], strides = [1, 1]} : vector<8x96xf32> to vector<8x32xf32>
    %438 = arith.mulf %434, %437 : vector<8x32xf32>
    %439 = arith.addf %436, %438 : vector<8x32xf32>
    %440 = math.tanh %439 : vector<8x32xf32>
    %cst_138 = arith.constant 1.000000e+00 : f32
    %441 = vector.broadcast %cst_138 : f32 to vector<8x32xf32>
    %442 = arith.subf %441, %435 : vector<8x32xf32>
    %443 = arith.mulf %442, %440 : vector<8x32xf32>
    %444 = arith.mulf %435, %421 : vector<8x32xf32>
    %445 = arith.addf %443, %444 : vector<8x32xf32>
    %c104 = arith.constant 104 : index
    %c0_139 = arith.constant 0 : index
    %446 = vector.load %arg10[%c104, %c0_139] : memref<128x96xf32, #tpu.memory_space<vmem>>, vector<8x96xf32>
    %cst_140 = arith.constant dense<0.000000e+00> : vector<8x96xf32>
    %447 = tpu.matmul %445, %124, %cst_140 {dimension_numbers = #tpu.dot_dimension_numbers<[1], [0], [0], [1], [0, 0, 1, 1], [], []>} : vector<8x32xf32>, vector<32x96xf32>, vector<8x96xf32> -> vector<8x96xf32>
    %448 = vector.broadcast %128 : vector<1x96xf32> to vector<8x96xf32>
    %449 = arith.addf %447, %448 : vector<8x96xf32>
    %450 = vector.extract_strided_slice %446 {offsets = [0, 0], sizes = [8, 64], strides = [1, 1]} : vector<8x96xf32> to vector<8x64xf32>
    %451 = vector.extract_strided_slice %449 {offsets = [0, 0], sizes = [8, 64], strides = [1, 1]} : vector<8x96xf32> to vector<8x64xf32>
    %452 = arith.addf %450, %451 : vector<8x64xf32>
    %453 = arith.negf %452 : vector<8x64xf32>
    %454 = math.exp %453 : vector<8x64xf32>
    %cst_141 = arith.constant 1.000000e+00 : f32
    %455 = vector.broadcast %cst_141 : f32 to vector<8x64xf32>
    %456 = arith.addf %455, %454 : vector<8x64xf32>
    %457 = arith.divf %455, %456 : vector<8x64xf32>
    %458 = vector.extract_strided_slice %457 {offsets = [0, 0], sizes = [8, 32], strides = [1, 1]} : vector<8x64xf32> to vector<8x32xf32>
    %459 = vector.extract_strided_slice %457 {offsets = [0, 32], sizes = [8, 32], strides = [1, 1]} : vector<8x64xf32> to vector<8x32xf32>
    %460 = vector.extract_strided_slice %446 {offsets = [0, 64], sizes = [8, 32], strides = [1, 1]} : vector<8x96xf32> to vector<8x32xf32>
    %461 = vector.extract_strided_slice %449 {offsets = [0, 64], sizes = [8, 32], strides = [1, 1]} : vector<8x96xf32> to vector<8x32xf32>
    %462 = arith.mulf %458, %461 : vector<8x32xf32>
    %463 = arith.addf %460, %462 : vector<8x32xf32>
    %464 = math.tanh %463 : vector<8x32xf32>
    %cst_142 = arith.constant 1.000000e+00 : f32
    %465 = vector.broadcast %cst_142 : f32 to vector<8x32xf32>
    %466 = arith.subf %465, %459 : vector<8x32xf32>
    %467 = arith.mulf %466, %464 : vector<8x32xf32>
    %468 = arith.mulf %459, %445 : vector<8x32xf32>
    %469 = arith.addf %467, %468 : vector<8x32xf32>
    %c112 = arith.constant 112 : index
    %c0_143 = arith.constant 0 : index
    %470 = vector.load %arg10[%c112, %c0_143] : memref<128x96xf32, #tpu.memory_space<vmem>>, vector<8x96xf32>
    %cst_144 = arith.constant dense<0.000000e+00> : vector<8x96xf32>
    %471 = tpu.matmul %469, %124, %cst_144 {dimension_numbers = #tpu.dot_dimension_numbers<[1], [0], [0], [1], [0, 0, 1, 1], [], []>} : vector<8x32xf32>, vector<32x96xf32>, vector<8x96xf32> -> vector<8x96xf32>
    %472 = vector.broadcast %128 : vector<1x96xf32> to vector<8x96xf32>
    %473 = arith.addf %471, %472 : vector<8x96xf32>
    %474 = vector.extract_strided_slice %470 {offsets = [0, 0], sizes = [8, 64], strides = [1, 1]} : vector<8x96xf32> to vector<8x64xf32>
    %475 = vector.extract_strided_slice %473 {offsets = [0, 0], sizes = [8, 64], strides = [1, 1]} : vector<8x96xf32> to vector<8x64xf32>
    %476 = arith.addf %474, %475 : vector<8x64xf32>
    %477 = arith.negf %476 : vector<8x64xf32>
    %478 = math.exp %477 : vector<8x64xf32>
    %cst_145 = arith.constant 1.000000e+00 : f32
    %479 = vector.broadcast %cst_145 : f32 to vector<8x64xf32>
    %480 = arith.addf %479, %478 : vector<8x64xf32>
    %481 = arith.divf %479, %480 : vector<8x64xf32>
    %482 = vector.extract_strided_slice %481 {offsets = [0, 0], sizes = [8, 32], strides = [1, 1]} : vector<8x64xf32> to vector<8x32xf32>
    %483 = vector.extract_strided_slice %481 {offsets = [0, 32], sizes = [8, 32], strides = [1, 1]} : vector<8x64xf32> to vector<8x32xf32>
    %484 = vector.extract_strided_slice %470 {offsets = [0, 64], sizes = [8, 32], strides = [1, 1]} : vector<8x96xf32> to vector<8x32xf32>
    %485 = vector.extract_strided_slice %473 {offsets = [0, 64], sizes = [8, 32], strides = [1, 1]} : vector<8x96xf32> to vector<8x32xf32>
    %486 = arith.mulf %482, %485 : vector<8x32xf32>
    %487 = arith.addf %484, %486 : vector<8x32xf32>
    %488 = math.tanh %487 : vector<8x32xf32>
    %cst_146 = arith.constant 1.000000e+00 : f32
    %489 = vector.broadcast %cst_146 : f32 to vector<8x32xf32>
    %490 = arith.subf %489, %483 : vector<8x32xf32>
    %491 = arith.mulf %490, %488 : vector<8x32xf32>
    %492 = arith.mulf %483, %469 : vector<8x32xf32>
    %493 = arith.addf %491, %492 : vector<8x32xf32>
    %c120 = arith.constant 120 : index
    %c0_147 = arith.constant 0 : index
    %494 = vector.load %arg10[%c120, %c0_147] : memref<128x96xf32, #tpu.memory_space<vmem>>, vector<8x96xf32>
    %cst_148 = arith.constant dense<0.000000e+00> : vector<8x96xf32>
    %495 = tpu.matmul %493, %124, %cst_148 {dimension_numbers = #tpu.dot_dimension_numbers<[1], [0], [0], [1], [0, 0, 1, 1], [], []>} : vector<8x32xf32>, vector<32x96xf32>, vector<8x96xf32> -> vector<8x96xf32>
    %496 = vector.broadcast %128 : vector<1x96xf32> to vector<8x96xf32>
    %497 = arith.addf %495, %496 : vector<8x96xf32>
    %498 = vector.extract_strided_slice %494 {offsets = [0, 0], sizes = [8, 64], strides = [1, 1]} : vector<8x96xf32> to vector<8x64xf32>
    %499 = vector.extract_strided_slice %497 {offsets = [0, 0], sizes = [8, 64], strides = [1, 1]} : vector<8x96xf32> to vector<8x64xf32>
    %500 = arith.addf %498, %499 : vector<8x64xf32>
    %501 = arith.negf %500 : vector<8x64xf32>
    %502 = math.exp %501 : vector<8x64xf32>
    %cst_149 = arith.constant 1.000000e+00 : f32
    %503 = vector.broadcast %cst_149 : f32 to vector<8x64xf32>
    %504 = arith.addf %503, %502 : vector<8x64xf32>
    %505 = arith.divf %503, %504 : vector<8x64xf32>
    %506 = vector.extract_strided_slice %505 {offsets = [0, 0], sizes = [8, 32], strides = [1, 1]} : vector<8x64xf32> to vector<8x32xf32>
    %507 = vector.extract_strided_slice %505 {offsets = [0, 32], sizes = [8, 32], strides = [1, 1]} : vector<8x64xf32> to vector<8x32xf32>
    %508 = vector.extract_strided_slice %494 {offsets = [0, 64], sizes = [8, 32], strides = [1, 1]} : vector<8x96xf32> to vector<8x32xf32>
    %509 = vector.extract_strided_slice %497 {offsets = [0, 64], sizes = [8, 32], strides = [1, 1]} : vector<8x96xf32> to vector<8x32xf32>
    %510 = arith.mulf %506, %509 : vector<8x32xf32>
    %511 = arith.addf %508, %510 : vector<8x32xf32>
    %512 = math.tanh %511 : vector<8x32xf32>
    %cst_150 = arith.constant 1.000000e+00 : f32
    %513 = vector.broadcast %cst_150 : f32 to vector<8x32xf32>
    %514 = arith.subf %513, %507 : vector<8x32xf32>
    %515 = arith.mulf %514, %512 : vector<8x32xf32>
    %516 = arith.mulf %507, %493 : vector<8x32xf32>
    %517 = arith.addf %515, %516 : vector<8x32xf32>
    %c0_151 = arith.constant 0 : index
    %c0_152 = arith.constant 0 : index
    %518 = vector.load %arg7[%c0_151, %c0_152] : memref<32x128xf32, #tpu.memory_space<vmem>>, vector<32x128xf32>
    %cst_153 = arith.constant dense<0.000000e+00> : vector<8x128xf32>
    %519 = tpu.matmul %517, %518, %cst_153 {dimension_numbers = #tpu.dot_dimension_numbers<[1], [0], [0], [1], [0, 0, 1, 1], [], []>} : vector<8x32xf32>, vector<32x128xf32>, vector<8x128xf32> -> vector<8x128xf32>
    %c0_154 = arith.constant 0 : index
    %c0_155 = arith.constant 0 : index
    %520 = vector.load %arg8[%c0_154, %c0_155] : memref<1x128xf32, #tpu.memory_space<vmem>>, vector<1x128xf32>
    %521 = vector.broadcast %520 : vector<1x128xf32> to vector<8x128xf32>
    %522 = arith.addf %519, %521 : vector<8x128xf32>
    %c0_156 = arith.constant 0 : index
    %c0_157 = arith.constant 0 : index
    %523 = vector.load %arg9[%c0_156, %c0_157] : memref<8x128xf32, #tpu.memory_space<vmem>>, vector<8x128xf32>
    tpu.vector_store %arg9[%c0_156, %c0_157], %522 {strides = array<i32>} : memref<8x128xf32, #tpu.memory_space<vmem>>, vector<8x128xf32>,
    return
  }
}

</mosaic_0001>

<llo_original>
// kernel: gated_wavenet_forward.1
$region0: #{gated_wavenet_forward.1}
  #allocation0 [shape = 'u32[]', space=smem, size = 0x4, offset = 0x4, fixed_abs, tag = 'smem constant byte address 0x4 - core index']
  #allocation1 [shape = 'u32[144,128]{1,0:T(1,128)}', space=vmem, size = 0x12000, scoped, tag = 'internal scratch']
  #allocation2 [shape = 'f32[128,96]{1,0:T(8,128)}', space=vmem, size = 0x10000, scoped, tag = 'scratch operand']
  %s0 = inlined_call_operand.vmem [shape: f32[128,32], index: 0, kind: input, shape index: {}]
  %s1 = inlined_call_operand.hbm [shape: f32[4,64,64], index: 1, kind: input, shape index: {}]
  %s2 = inlined_call_operand.hbm [shape: f32[4,1,64], index: 2, kind: input, shape index: {}]
  %s3 = inlined_call_operand.vmem [shape: f32[4,32,32], index: 3, kind: input, shape index: {}]
  %s4 = inlined_call_operand.hbm [shape: f32[4,1,32], index: 4, kind: input, shape index: {}]
  %s5 = inlined_call_operand.vmem [shape: f32[2,32,96], index: 5, kind: input, shape index: {}]
  %s6 = inlined_call_operand.hbm [shape: f32[2,1,96], index: 6, kind: input, shape index: {}]
  %s7 = inlined_call_operand.vmem [shape: f32[32,128], index: 7, kind: input, shape index: {}]
  %s8 = inlined_call_operand.vmem [shape: f32[1,128], index: 8, kind: input, shape index: {}]
  %s9 = inlined_call_operand.vmem [shape: f32[8,128], index: 9, kind: output, shape index: {}]
  %s10 = sld [smem:[#allocation0]]
  $region62: #{gated_wavenet_forward.1} parent=0
    _
  %s12 = ssub.s32 1, %s10
  %s13 = scalar_select 0, %s12, %s10
  $region1: #{gated_wavenet_forward.1} parent=0
    #allocation3 [shape = 'u8[131072]{0}', space=vmem, size = 0x20000, scoped, tag = 'input window, operand 1, single buffered']
    #allocation4 [shape = 's32[1]{0}', space=sflag, size = 0x4, scoped, tag = 'scoped memory for gated_wavenet_forward.1']
    #allocation5 [shape = 'u8[2048]{0}', space=vmem, size = 0x800, scoped, tag = 'input window, operand 2, single buffered']
    #allocation6 [shape = 's32[1]{0}', space=sflag, size = 0x4, scoped, tag = 'scoped memory for gated_wavenet_forward.1']
    #allocation7 [shape = 'u8[2048]{0}', space=vmem, size = 0x800, scoped, tag = 'input window, operand 4, single buffered']
    #allocation8 [shape = 'u8[1024]{0}', space=vmem, size = 0x400, scoped, tag = 'input window, operand 6, single buffered']
    #allocation9 [shape = 's32[1]{0}', space=sflag, size = 0x4, scoped, tag = 'scoped memory for gated_wavenet_forward.1']
    %14 = vsyncpa [#allocation4], 0
    %15 = vsyncpa [#allocation6], 0
    %16 = vsyncpa [#allocation9], 0
    // Predicated region
    $region2: #{gated_wavenet_forward.1} parent=1 // pred_check
      _
    $region3: #{gated_wavenet_forward.1} parent=1 // pred_check_branch
      %18 = sbr.rel (0) target = $region5
    $region4: #{gated_wavenet_forward.1} parent=1 // pred_region
      _
    $region5: #{gated_wavenet_forward.1} parent=1 // pred_fallthru
      _
    // Predicated region
    $region6: #{gated_wavenet_forward.1} parent=1 // pred_check
      _
    $region7: #{gated_wavenet_forward.1} parent=1 // pred_check_branch
      %20 = sbr.rel (0) target = $region9
    $region8: #{gated_wavenet_forward.1} parent=1 // pred_region
      %s22 = ssub.s32 4096, 4096
      %23 = vsyncadd [#allocation4], %s22
      %s24 = sshll.u32 [#allocation3], 4
      %s25 = int_to_ptr.vmem [resolvable:$true] %s24
      %30 = dma.hbm_to_vmem [thread:$0]  %s1, 4096, %s25, [#allocation4], 128, 128, 8
    $region9: #{gated_wavenet_forward.1} parent=1 // pred_fallthru
      _
    // Predicated region
    $region10: #{gated_wavenet_forward.1} parent=1 // pred_check
      _
    $region11: #{gated_wavenet_forward.1} parent=1 // pred_check_branch
      %32 = sbr.rel (0) target = $region13
    $region12: #{gated_wavenet_forward.1} parent=1 // pred_region
      %s34 = ssub.s32 64, 64
      %35 = vsyncadd [#allocation6], %s34
      %s36 = sshll.u32 [#allocation5], 4
      %s37 = int_to_ptr.vmem [resolvable:$true] %s36
      %42 = dma.hbm_to_vmem [thread:$0]  %s2, 64, %s37, [#allocation6], 16, 16, 1
    $region13: #{gated_wavenet_forward.1} parent=1 // pred_fallthru
      _
    // Predicated region
    $region14: #{gated_wavenet_forward.1} parent=1 // pred_check
      _
    $region15: #{gated_wavenet_forward.1} parent=1 // pred_check_branch
      %44 = sbr.rel (0) target = $region17
    $region16: #{gated_wavenet_forward.1} parent=1 // pred_region
      _
    $region17: #{gated_wavenet_forward.1} parent=1 // pred_fallthru
      _
    // Predicated region
    $region18: #{gated_wavenet_forward.1} parent=1 // pred_check
      _
    $region19: #{gated_wavenet_forward.1} parent=1 // pred_check_branch
      %46 = sbr.rel (0) target = $region21
    $region20: #{gated_wavenet_forward.1} parent=1 // pred_region
      %s48 = ssub.s32 64, 64
      %49 = vsyncadd [#allocation6], %s48
      %s50 = sshll.u32 [#allocation7], 4
      %s51 = int_to_ptr.vmem [resolvable:$true] %s50
      %56 = dma.hbm_to_vmem [thread:$0]  %s4, 64, %s51, [#allocation6], 16, 16, 1
    $region21: #{gated_wavenet_forward.1} parent=1 // pred_fallthru
      _
    // Predicated region
    $region22: #{gated_wavenet_forward.1} parent=1 // pred_check
      _
    $region23: #{gated_wavenet_forward.1} parent=1 // pred_check_branch
      %58 = sbr.rel (0) target = $region25
    $region24: #{gated_wavenet_forward.1} parent=1 // pred_region
      _
    $region25: #{gated_wavenet_forward.1} parent=1 // pred_fallthru
      _
    // Predicated region
    $region26: #{gated_wavenet_forward.1} parent=1 // pred_check
      _
    $region27: #{gated_wavenet_forward.1} parent=1 // pred_check_branch
      %60 = sbr.rel (0) target = $region29
    $region28: #{gated_wavenet_forward.1} parent=1 // pred_region
      %s62 = ssub.s32 32, 32
      %63 = vsyncadd [#allocation9], %s62
      %s64 = sshll.u32 [#allocation8], 4
      %s65 = int_to_ptr.vmem [resolvable:$true] %s64
      %70 = dma.hbm_to_vmem [thread:$0]  %s6, 32, %s65, [#allocation9], 16, 16, 1
    $region29: #{gated_wavenet_forward.1} parent=1 // pred_fallthru
      _
    // Predicated region
    $region30: #{gated_wavenet_forward.1} parent=1 // pred_check
      _
    $region31: #{gated_wavenet_forward.1} parent=1 // pred_check_branch
      %72 = sbr.rel (0) target = $region33
    $region32: #{gated_wavenet_forward.1} parent=1 // pred_region
      _
    $region33: #{gated_wavenet_forward.1} parent=1 // pred_fallthru
      _
    // Predicated region
    $region34: #{gated_wavenet_forward.1} parent=1 // pred_check
      _
    $region35: #{gated_wavenet_forward.1} parent=1 // pred_check_branch
      %74 = sbr.rel (0) target = $region37
    $region36: #{gated_wavenet_forward.1} parent=1 // pred_region
      _
    $region37: #{gated_wavenet_forward.1} parent=1 // pred_fallthru
      _
    // Predicated region
    $region38: #{gated_wavenet_forward.1} parent=1 // pred_check
      _
    $region39: #{gated_wavenet_forward.1} parent=1 // pred_check_branch
      %76 = sbr.rel (0) target = $region41
    $region40: #{gated_wavenet_forward.1} parent=1 // pred_region
      %77 = dma.done [#allocation4], 4096
    $region41: #{gated_wavenet_forward.1} parent=1 // pred_fallthru
      _
    // Predicated region
    $region42: #{gated_wavenet_forward.1} parent=1 // pred_check
      _
    $region43: #{gated_wavenet_forward.1} parent=1 // pred_check_branch
      %79 = sbr.rel (0) target = $region45
    $region44: #{gated_wavenet_forward.1} parent=1 // pred_region
      %80 = dma.done [#allocation6], 64
    $region45: #{gated_wavenet_forward.1} parent=1 // pred_fallthru
      _
    // Predicated region
    $region46: #{gated_wavenet_forward.1} parent=1 // pred_check
      _
    $region47: #{gated_wavenet_forward.1} parent=1 // pred_check_branch
      %82 = sbr.rel (0) target = $region49
    $region48: #{gated_wavenet_forward.1} parent=1 // pred_region
      %83 = dma.done [#allocation6], 64
    $region49: #{gated_wavenet_forward.1} parent=1 // pred_fallthru
      _
    // Predicated region
    $region50: #{gated_wavenet_forward.1} parent=1 // pred_check
      _
    $region51: #{gated_wavenet_forward.1} parent=1 // pred_check_branch
      %85 = sbr.rel (0) target = $region53
    $region52: #{gated_wavenet_forward.1} parent=1 // pred_region
      %86 = dma.done [#allocation9], 32
    $region53: #{gated_wavenet_forward.1} parent=1 // pred_fallthru
      _
    %v87 = vld [vmem:[%s0] sm:$0xff]
    %v88 = vld [vmem:[%s0 + $0x8] sm:$0xff]
    %v89 = vld [vmem:[%s0 + $0x10] sm:$0xff]
    %v90 = vld [vmem:[%s0 + $0x18] sm:$0xff]
    %v91 = vld [vmem:[%s0 + $0x20] sm:$0xff]
    %v92 = vld [vmem:[%s0 + $0x28] sm:$0xff]
    %v93 = vld [vmem:[%s0 + $0x30] sm:$0xff]
    %v94 = vld [vmem:[%s0 + $0x38] sm:$0xff]
    %v95 = vld [vmem:[%s0 + $0x40] sm:$0xff]
    %v96 = vld [vmem:[%s0 + $0x48] sm:$0xff]
    %v97 = vld [vmem:[%s0 + $0x50] sm:$0xff]
    %v98 = vld [vmem:[%s0 + $0x58] sm:$0xff]
    %v99 = vld [vmem:[%s0 + $0x60] sm:$0xff]
    %v100 = vld [vmem:[%s0 + $0x68] sm:$0xff]
    %v101 = vld [vmem:[%s0 + $0x70] sm:$0xff]
    %v102 = vld [vmem:[%s0 + $0x78] sm:$0xff]
    %v103 = vlaneseq
    %v104 = vshrl.u32 %v103, 7
    %v105 = vadd.s32 %v104, 8
    %v106 = vadd.s32 %v104, 16
    %v107 = vadd.s32 %v104, 24
    %v108 = vadd.s32 %v104, 32
    %v109 = vadd.s32 %v104, 40
    %v110 = vadd.s32 %v104, 48
    %v111 = vadd.s32 %v104, 56
    %v112 = vadd.s32 %v104, 64
    %v113 = vadd.s32 %v104, 72
    %v114 = vadd.s32 %v104, 80
    %v115 = vadd.s32 %v104, 88
    %v116 = vadd.s32 %v104, 96
    %v117 = vadd.s32 %v104, 104
    %v118 = vadd.s32 %v104, 112
    %v119 = vadd.s32 %v104, 120
    %vm120 = vcmp.lt.s32.totalorder %v104, 8
    %vm121 = vcmp.lt.s32.totalorder %v105, 8
    %vm122 = vcmp.lt.s32.totalorder %v106, 8
    %vm123 = vcmp.lt.s32.totalorder %v107, 8
    %vm124 = vcmp.lt.s32.totalorder %v108, 8
    %vm125 = vcmp.lt.s32.totalorder %v109, 8
    %vm126 = vcmp.lt.s32.totalorder %v110, 8
    %vm127 = vcmp.lt.s32.totalorder %v111, 8
    %vm128 = vcmp.lt.s32.totalorder %v112, 8
    %vm129 = vcmp.lt.s32.totalorder %v113, 8
    %vm130 = vcmp.lt.s32.totalorder %v114, 8
    %vm131 = vcmp.lt.s32.totalorder %v115, 8
    %vm132 = vcmp.lt.s32.totalorder %v116, 8
    %vm133 = vcmp.lt.s32.totalorder %v117, 8
    %vm134 = vcmp.lt.s32.totalorder %v118, 8
    %vm135 = vcmp.lt.s32.totalorder %v119, 8
    %v136 = vsel %vm120, 0.0, %v102
    %v137 = vsel %vm121, 0.0, %v87
    %v138 = vsel %vm122, 0.0, %v88
    %v139 = vsel %vm123, 0.0, %v89
    %v140 = vsel %vm124, 0.0, %v90
    %v141 = vsel %vm125, 0.0, %v91
    %v142 = vsel %vm126, 0.0, %v92
    %v143 = vsel %vm127, 0.0, %v93
    %v144 = vsel %vm128, 0.0, %v94
    %v145 = vsel %vm129, 0.0, %v95
    %v146 = vsel %vm130, 0.0, %v96
    %v147 = vsel %vm131, 0.0, %v97
    %v148 = vsel %vm132, 0.0, %v98
    %v149 = vsel %vm133, 0.0, %v99
    %v150 = vsel %vm134, 0.0, %v100
    %v151 = vsel %vm135, 0.0, %v101
    %168 = vrot.lane.b32.xlu0 %v136, 32
    %v169 = vpop.permute.xlu0 %168
    %170 = vrot.lane.b32.xlu0 %v137, 32
    %v171 = vpop.permute.xlu0 %170
    %172 = vrot.lane.b32.xlu0 %v138, 32
    %v173 = vpop.permute.xlu0 %172
    %174 = vrot.lane.b32.xlu0 %v139, 32
    %v175 = vpop.permute.xlu0 %174
    %176 = vrot.lane.b32.xlu0 %v140, 32
    %v177 = vpop.permute.xlu0 %176
    %178 = vrot.lane.b32.xlu0 %v141, 32
    %v179 = vpop.permute.xlu0 %178
    %180 = vrot.lane.b32.xlu0 %v142, 32
    %v181 = vpop.permute.xlu0 %180
    %182 = vrot.lane.b32.xlu0 %v143, 32
    %v183 = vpop.permute.xlu0 %182
    %184 = vrot.lane.b32.xlu0 %v144, 32
    %v185 = vpop.permute.xlu0 %184
    %186 = vrot.lane.b32.xlu0 %v145, 32
    %v187 = vpop.permute.xlu0 %186
    %188 = vrot.lane.b32.xlu0 %v146, 32
    %v189 = vpop.permute.xlu0 %188
    %190 = vrot.lane.b32.xlu0 %v147, 32
    %v191 = vpop.permute.xlu0 %190
    %192 = vrot.lane.b32.xlu0 %v148, 32
    %v193 = vpop.permute.xlu0 %192
    %194 = vrot.lane.b32.xlu0 %v149, 32
    %v195 = vpop.permute.xlu0 %194
    %196 = vrot.lane.b32.xlu0 %v150, 32
    %v197 = vpop.permute.xlu0 %196
    %198 = vrot.lane.b32.xlu0 %v151, 32
    %v199 = vpop.permute.xlu0 %198
    %vm216 = vcmask 261120
    %v217 = vsel %vm216, %v87, %v169
    %v218 = vsel %vm216, %v88, %v171
    %v219 = vsel %vm216, %v89, %v173
    %v220 = vsel %vm216, %v90, %v175
    %v221 = vsel %vm216, %v91, %v177
    %v222 = vsel %vm216, %v92, %v179
    %v223 = vsel %vm216, %v93, %v181
    %v224 = vsel %vm216, %v94, %v183
    %v225 = vsel %vm216, %v95, %v185
    %v226 = vsel %vm216, %v96, %v187
    %v227 = vsel %vm216, %v97, %v189
    %v228 = vsel %vm216, %v98, %v191
    %v229 = vsel %vm216, %v99, %v193
    %v230 = vsel %vm216, %v100, %v195
    %v231 = vsel %vm216, %v101, %v197
    %v232 = vsel %vm216, %v102, %v199
    %v233 = vld [vmem:[#allocation3] sm:$0xff]
    %v234 = vld [vmem:[#allocation3 + $0x8] sm:$0xff]
    %v235 = vld [vmem:[#allocation3 + $0x10] sm:$0xff]
    %v236 = vld [vmem:[#allocation3 + $0x18] sm:$0xff]
    %v237 = vld [vmem:[#allocation3 + $0x20] sm:$0xff]
    %v238 = vld [vmem:[#allocation3 + $0x28] sm:$0xff]
    %v239 = vld [vmem:[#allocation3 + $0x30] sm:$0xff]
    %v240 = vld [vmem:[#allocation3 + $0x38] sm:$0xff]
    %v241 = vld [vmem:[#allocation5] sm:$0x1]
    %v243 = vlaneseq
    %v244 = vshrl.u32 %v243, 7
    %v245 = vsub.s32 0, %v244
    %v246 = vrot.slane %v241, %v245
    %vm248 = vcmask 523264
    %v250 = vsel %vm248, %v217, 0
    %v253 = vsel %vm248, %v218, 0
    %v256 = vsel %vm248, %v219, 0
    %v259 = vsel %vm248, %v220, 0
    %v262 = vsel %vm248, %v221, 0
    %v265 = vsel %vm248, %v222, 0
    %v268 = vsel %vm248, %v223, 0
    %v271 = vsel %vm248, %v224, 0
    %v274 = vsel %vm248, %v225, 0
    %v277 = vsel %vm248, %v226, 0
    %v280 = vsel %vm248, %v227, 0
    %v283 = vsel %vm248, %v228, 0
    %v286 = vsel %vm248, %v229, 0
    %v289 = vsel %vm248, %v230, 0
    %v292 = vsel %vm248, %v231, 0
    %v295 = vsel %vm248, %v232, 0
    %297 = vmatprep.subr.mxu0 0.0
    %298 = vmatpush1.msra.mxu0 %v233
    %299 = vmatprep.subr.mxu0 0.0
    %300 = vmatpush1.msra.mxu0 %v234
    %301 = vmatprep.subr.mxu0 0.0
    %302 = vmatpush1.msra.mxu0 %v235
    %303 = vmatprep.subr.mxu0 0.0
    %304 = vmatpush1.msra.mxu0 %v236
    %305 = vmatprep.subr.mxu0 0.0
    %306 = vmatpush1.msra.mxu0 %v237
    %307 = vmatprep.subr.mxu0 0.0
    %308 = vmatpush1.msra.mxu0 %v238
    %309 = vmatprep.subr.mxu0 0.0
    %310 = vmatpush1.msra.mxu0 %v239
    %311 = vmatprep.subr.mxu0 0.0
    %312 = vmatpush1.msra.mxu0 %v240
    %313 = vmatprep.subr.mxu0 0.0
    %314 = vmatpush1.msra.mxu0 0.0
    %315 = vmatprep.subr.mxu0 0.0
    %316 = vmatpush1.msra.mxu0 0.0
    %317 = vmatprep.subr.mxu0 0.0
    %318 = vmatpush1.msra.mxu0 0.0
    %319 = vmatprep.subr.mxu0 0.0
    %320 = vmatpush1.msra.mxu0 0.0
    %321 = vmatprep.subr.mxu0 0.0
    %322 = vmatpush1.msra.mxu0 0.0
    %323 = vmatprep.subr.mxu0 0.0
    %324 = vmatpush1.msra.mxu0 0.0
    %325 = vmatprep.subr.mxu0 0.0
    %326 = vmatpush1.msra.mxu0 0.0
    %327 = vmatprep.subr.mxu0 0.0
    %328 = vmatpush1.msra.mxu0 0.0
    %329 = vmatprep.subr.mxu0 0.0
    %330 = vmatpush1.msra.mxu0 0.0
    %331 = vmatprep.subr.mxu0 0.0
    %332 = vmatpush1.msra.mxu0 0.0
    %333 = vmatprep.subr.mxu0 0.0
    %334 = vmatpush1.msra.mxu0 0.0
    %335 = vmatprep.subr.mxu0 0.0
    %336 = vmatpush1.msra.mxu0 0.0
    %337 = vmatprep.subr.mxu0 0.0
    %338 = vmatpush1.msra.mxu0 0.0
    %339 = vmatprep.subr.mxu0 0.0
    %340 = vmatpush1.msra.mxu0 0.0
    %341 = vmatprep.subr.mxu0 0.0
    %342 = vmatpush1.msra.mxu0 0.0
    %343 = vmatprep.subr.mxu0 0.0
    %344 = vmatpush1.msra.mxu0 0.0
    %345 = vmatprep.subr.mxu0 0.0
    %346 = vmatpush1.msra.mxu0 0.0
    %347 = vmatprep.subr.mxu0 0.0
    %348 = vmatpush1.msra.mxu0 0.0
    %349 = vmatprep.subr.mxu0 0.0
    %350 = vmatpush1.msra.mxu0 0.0
    %351 = vmatprep.subr.mxu0 0.0
    %352 = vmatpush1.msra.mxu0 0.0
    %353 = vmatprep.subr.mxu0 0.0
    %354 = vmatpush1.msra.mxu0 0.0
    %355 = vmatprep.subr.mxu0 0.0
    %356 = vmatpush1.msra.mxu0 0.0
    %357 = vmatprep.subr.mxu0 0.0
    %358 = vmatpush1.msra.mxu0 0.0
    %359 = vmatprep.subr.mxu0 0.0
    %360 = vmatpush1.msra.mxu0 0.0
    %361 = vmatprep.mubr.f32.mxu0 0.0
    %362 = vmatmul.mubr.f32.gmra.mrb[0].mxu0 %v250
    %v363 = vpop.f32.mrb[0].mxu0
    %v364 = vadd.f32 %v246, %v363
    %v365 = vpop.f32.mrb[0].mxu0
    %366 = vmatprep.mubr.f32.mxu0 0.0
    %367 = vmatmul.mubr.f32.gmra.mrb[0].mxu0 %v253
    %v368 = vpop.f32.mrb[0].mxu0
    %v369 = vadd.f32 %v246, %v368
    %v370 = vpop.f32.mrb[0].mxu0
    %371 = vmatprep.mubr.f32.mxu0 0.0
    %372 = vmatmul.mubr.f32.gmra.mrb[0].mxu0 %v256
    %v373 = vpop.f32.mrb[0].mxu0
    %v374 = vadd.f32 %v246, %v373
    %v375 = vpop.f32.mrb[0].mxu0
    %376 = vmatprep.mubr.f32.mxu0 0.0
    %377 = vmatmul.mubr.f32.gmra.mrb[0].mxu0 %v259
    %v378 = vpop.f32.mrb[0].mxu0
    %v379 = vadd.f32 %v246, %v378
    %v380 = vpop.f32.mrb[0].mxu0
    %381 = vmatprep.mubr.f32.mxu0 0.0
    %382 = vmatmul.mubr.f32.gmra.mrb[0].mxu0 %v262
    %v383 = vpop.f32.mrb[0].mxu0
    %v384 = vadd.f32 %v246, %v383
    %v385 = vpop.f32.mrb[0].mxu0
    %386 = vmatprep.mubr.f32.mxu0 0.0
    %387 = vmatmul.mubr.f32.gmra.mrb[0].mxu0 %v265
    %v388 = vpop.f32.mrb[0].mxu0
    %v389 = vadd.f32 %v246, %v388
    %v390 = vpop.f32.mrb[0].mxu0
    %391 = vmatprep.mubr.f32.mxu0 0.0
    %392 = vmatmul.mubr.f32.gmra.mrb[0].mxu0 %v268
    %v393 = vpop.f32.mrb[0].mxu0
    %v394 = vadd.f32 %v246, %v393
    %v395 = vpop.f32.mrb[0].mxu0
    %396 = vmatprep.mubr.f32.mxu0 0.0
    %397 = vmatmul.mubr.f32.gmra.mrb[0].mxu0 %v271
    %v398 = vpop.f32.mrb[0].mxu0
    %v399 = vadd.f32 %v246, %v398
    %v400 = vpop.f32.mrb[0].mxu0
    %401 = vmatprep.mubr.f32.mxu0 0.0
    %402 = vmatmul.mubr.f32.gmra.mrb[0].mxu0 %v274
    %v403 = vpop.f32.mrb[0].mxu0
    %v404 = vadd.f32 %v246, %v403
    %v405 = vpop.f32.mrb[0].mxu0
    %406 = vmatprep.mubr.f32.mxu0 0.0
    %407 = vmatmul.mubr.f32.gmra.mrb[0].mxu0 %v277
    %v408 = vpop.f32.mrb[0].mxu0
    %v409 = vadd.f32 %v246, %v408
    %v410 = vpop.f32.mrb[0].mxu0
    %411 = vmatprep.mubr.f32.mxu0 0.0
    %412 = vmatmul.mubr.f32.gmra.mrb[0].mxu0 %v280
    %v413 = vpop.f32.mrb[0].mxu0
    %v414 = vadd.f32 %v246, %v413
    %v415 = vpop.f32.mrb[0].mxu0
    %416 = vmatprep.mubr.f32.mxu0 0.0
    %417 = vmatmul.mubr.f32.gmra.mrb[0].mxu0 %v283
    %v418 = vpop.f32.mrb[0].mxu0
    %v419 = vadd.f32 %v246, %v418
    %v420 = vpop.f32.mrb[0].mxu0
    %421 = vmatprep.mubr.f32.mxu0 0.0
    %422 = vmatmul.mubr.f32.gmra.mrb[0].mxu0 %v286
    %v423 = vpop.f32.mrb[0].mxu0
    %v424 = vadd.f32 %v246, %v423
    %v425 = vpop.f32.mrb[0].mxu0
    %426 = vmatprep.mubr.f32.mxu0 0.0
    %427 = vmatmul.mubr.f32.gmra.mrb[0].mxu0 %v289
    %v428 = vpop.f32.mrb[0].mxu0
    %v429 = vadd.f32 %v246, %v428
    %v430 = vpop.f32.mrb[0].mxu0
    %431 = vmatprep.mubr.f32.mxu0 0.0
    %432 = vmatmul.mubr.f32.gmra.mrb[0].mxu0 %v292
    %v433 = vpop.f32.mrb[0].mxu0
    %v434 = vadd.f32 %v246, %v433
    %v435 = vpop.f32.mrb[0].mxu0
    %436 = vmatprep.mubr.f32.mxu0 0.0
    %437 = vmatmul.mubr.f32.gmra.mrb[0].mxu0 %v295
    %v438 = vpop.f32.mrb[0].mxu0
    %v439 = vadd.f32 %v246, %v438
    %v440 = vpop.f32.mrb[0].mxu0
    %441 = vdwg.mxu0
    %v442 = vtanh.pop %v364
    %v443 = vtanh.pop %v369
    %v444 = vtanh.pop %v374
    %v445 = vtanh.pop %v379
    %v446 = vtanh.pop %v384
    %v447 = vtanh.pop %v389
    %v448 = vtanh.pop %v394
    %v449 = vtanh.pop %v399
    %v450 = vtanh.pop %v404
    %v451 = vtanh.pop %v409
    %v452 = vtanh.pop %v414
    %v453 = vtanh.pop %v419
    %v454 = vtanh.pop %v424
    %v455 = vtanh.pop %v429
    %v456 = vtanh.pop %v434
    %v457 = vtanh.pop %v439
    %v458 = vmul.f32 %v442, 0.5
    %v459 = vmul.f32 %v443, 0.5
    %v460 = vmul.f32 %v444, 0.5
    %v461 = vmul.f32 %v445, 0.5
    %v462 = vmul.f32 %v446, 0.5
    %v463 = vmul.f32 %v447, 0.5
    %v464 = vmul.f32 %v448, 0.5
    %v465 = vmul.f32 %v449, 0.5
    %v466 = vmul.f32 %v450, 0.5
    %v467 = vmul.f32 %v451, 0.5
    %v468 = vmul.f32 %v452, 0.5
    %v469 = vmul.f32 %v453, 0.5
    %v470 = vmul.f32 %v454, 0.5
    %v471 = vmul.f32 %v455, 0.5
    %v472 = vmul.f32 %v456, 0.5
    %v473 = vmul.f32 %v457, 0.5
    %v474 = vadd.f32 %v458, 0.5
    %v475 = vadd.f32 %v459, 0.5
    %v476 = vadd.f32 %v460, 0.5
    %v477 = vadd.f32 %v461, 0.5
    %v478 = vadd.f32 %v462, 0.5
    %v479 = vadd.f32 %v463, 0.5
    %v480 = vadd.f32 %v464, 0.5
    %v481 = vadd.f32 %v465, 0.5
    %v482 = vadd.f32 %v466, 0.5
    %v483 = vadd.f32 %v467, 0.5
    %v484 = vadd.f32 %v468, 0.5
    %v485 = vadd.f32 %v469, 0.5
    %v486 = vadd.f32 %v470, 0.5
    %v487 = vadd.f32 %v471, 0.5
    %v488 = vadd.f32 %v472, 0.5
    %v489 = vadd.f32 %v473, 0.5
    %506 = vrot.lane.b32.xlu0 %v474, 96
    %v507 = vpop.permute.xlu0 %506
    %508 = vrot.lane.b32.xlu0 %v475, 96
    %v509 = vpop.permute.xlu0 %508
    %510 = vrot.lane.b32.xlu0 %v476, 96
    %v511 = vpop.permute.xlu0 %510
    %512 = vrot.lane.b32.xlu0 %v477, 96
    %v513 = vpop.permute.xlu0 %512
    %514 = vrot.lane.b32.xlu0 %v478, 96
    %v515 = vpop.permute.xlu0 %514
    %516 = vrot.lane.b32.xlu0 %v479, 96
    %v517 = vpop.permute.xlu0 %516
    %518 = vrot.lane.b32.xlu0 %v480, 96
    %v519 = vpop.permute.xlu0 %518
    %520 = vrot.lane.b32.xlu0 %v481, 96
    %v521 = vpop.permute.xlu0 %520
    %522 = vrot.lane.b32.xlu0 %v482, 96
    %v523 = vpop.permute.xlu0 %522
    %524 = vrot.lane.b32.xlu0 %v483, 96
    %v525 = vpop.permute.xlu0 %524
    %526 = vrot.lane.b32.xlu0 %v484, 96
    %v527 = vpop.permute.xlu0 %526
    %528 = vrot.lane.b32.xlu0 %v485, 96
    %v529 = vpop.permute.xlu0 %528
    %530 = vrot.lane.b32.xlu0 %v486, 96
    %v531 = vpop.permute.xlu0 %530
    %532 = vrot.lane.b32.xlu0 %v487, 96
    %v533 = vpop.permute.xlu0 %532
    %534 = vrot.lane.b32.xlu0 %v488, 96
    %v535 = vpop.permute.xlu0 %534
    %536 = vrot.lane.b32.xlu0 %v489, 96
    %v537 = vpop.permute.xlu0 %536
    %v554 = vmul.f32 %v442, %v507
    %v555 = vmul.f32 %v443, %v509
    %v556 = vmul.f32 %v444, %v511
    %v557 = vmul.f32 %v445, %v513
    %v558 = vmul.f32 %v446, %v515
    %v559 = vmul.f32 %v447, %v517
    %v560 = vmul.f32 %v448, %v519
    %v561 = vmul.f32 %v449, %v521
    %v562 = vmul.f32 %v450, %v523
    %v563 = vmul.f32 %v451, %v525
    %v564 = vmul.f32 %v452, %v527
    %v565 = vmul.f32 %v453, %v529
    %v566 = vmul.f32 %v454, %v531
    %v567 = vmul.f32 %v455, %v533
    %v568 = vmul.f32 %v456, %v535
    %v569 = vmul.f32 %v457, %v537
    %v570 = vld [vmem:[%s3] sm:$0xff]
    %v571 = vld [vmem:[%s3 + $0x8] sm:$0xff]
    %v572 = vld [vmem:[%s3 + $0x10] sm:$0xff]
    %v573 = vld [vmem:[%s3 + $0x18] sm:$0xff]
    %v574 = vld [vmem:[#allocation7] sm:$0x1]
    %v576 = vlaneseq
    %v577 = vshrl.u32 %v576, 7
    %v578 = vsub.s32 0, %v577
    %v579 = vrot.slane %v574, %v578
    %v582 = vsel %vm216, %v554, 0
    %v585 = vsel %vm216, %v555, 0
    %v588 = vsel %vm216, %v556, 0
    %v591 = vsel %vm216, %v557, 0
    %v594 = vsel %vm216, %v558, 0
    %v597 = vsel %vm216, %v559, 0
    %v600 = vsel %vm216, %v560, 0
    %v603 = vsel %vm216, %v561, 0
    %v606 = vsel %vm216, %v562, 0
    %v609 = vsel %vm216, %v563, 0
    %v612 = vsel %vm216, %v564, 0
    %v615 = vsel %vm216, %v565, 0
    %v618 = vsel %vm216, %v566, 0
    %v621 = vsel %vm216, %v567, 0
    %v624 = vsel %vm216, %v568, 0
    %v627 = vsel %vm216, %v569, 0
    %629 = vmatprep.subr.mxu0 0.0
    %630 = vmatpush1.msra.mxu0 %v570
    %631 = vmatprep.subr.mxu0 0.0
    %632 = vmatpush1.msra.mxu0 %v571
    %633 = vmatprep.subr.mxu0 0.0
    %634 = vmatpush1.msra.mxu0 %v572
    %635 = vmatprep.subr.mxu0 0.0
    %636 = vmatpush1.msra.mxu0 %v573
    %637 = vmatprep.subr.mxu0 0.0
    %638 = vmatpush1.msra.mxu0 0.0
    %639 = vmatprep.subr.mxu0 0.0
    %640 = vmatpush1.msra.mxu0 0.0
    %641 = vmatprep.subr.mxu0 0.0
    %642 = vmatpush1.msra.mxu0 0.0
    %643 = vmatprep.subr.mxu0 0.0
    %644 = vmatpush1.msra.mxu0 0.0
    %645 = vmatprep.subr.mxu0 0.0
    %646 = vmatpush1.msra.mxu0 0.0
    %647 = vmatprep.subr.mxu0 0.0
    %648 = vmatpush1.msra.mxu0 0.0
    %649 = vmatprep.subr.mxu0 0.0
    %650 = vmatpush1.msra.mxu0 0.0
    %651 = vmatprep.subr.mxu0 0.0
    %652 = vmatpush1.msra.mxu0 0.0
    %653 = vmatprep.subr.mxu0 0.0
    %654 = vmatpush1.msra.mxu0 0.0
    %655 = vmatprep.subr.mxu0 0.0
    %656 = vmatpush1.msra.mxu0 0.0
    %657 = vmatprep.subr.mxu0 0.0
    %658 = vmatpush1.msra.mxu0 0.0
    %659 = vmatprep.subr.mxu0 0.0
    %660 = vmatpush1.msra.mxu0 0.0
    %661 = vmatprep.subr.mxu0 0.0
    %662 = vmatpush1.msra.mxu0 0.0
    %663 = vmatprep.subr.mxu0 0.0
    %664 = vmatpush1.msra.mxu0 0.0
    %665 = vmatprep.subr.mxu0 0.0
    %666 = vmatpush1.msra.mxu0 0.0
    %667 = vmatprep.subr.mxu0 0.0
    %668 = vmatpush1.msra.mxu0 0.0
    %669 = vmatprep.subr.mxu0 0.0
    %670 = vmatpush1.msra.mxu0 0.0
    %671 = vmatprep.subr.mxu0 0.0
    %672 = vmatpush1.msra.mxu0 0.0
    %673 = vmatprep.subr.mxu0 0.0
    %674 = vmatpush1.msra.mxu0 0.0
    %675 = vmatprep.subr.mxu0 0.0
    %676 = vmatpush1.msra.mxu0 0.0
    %677 = vmatprep.subr.mxu0 0.0
    %678 = vmatpush1.msra.mxu0 0.0
    %679 = vmatprep.subr.mxu0 0.0
    %680 = vmatpush1.msra.mxu0 0.0
    %681 = vmatprep.subr.mxu0 0.0
    %682 = vmatpush1.msra.mxu0 0.0
    %683 = vmatprep.subr.mxu0 0.0
    %684 = vmatpush1.msra.mxu0 0.0
    %685 = vmatprep.subr.mxu0 0.0
    %686 = vmatpush1.msra.mxu0 0.0
    %687 = vmatprep.subr.mxu0 0.0
    %688 = vmatpush1.msra.mxu0 0.0
    %689 = vmatprep.subr.mxu0 0.0
    %690 = vmatpush1.msra.mxu0 0.0
    %691 = vmatprep.subr.mxu0 0.0
    %692 = vmatpush1.msra.mxu0 0.0
    %693 = vmatprep.mubr.f32.mxu0 0.0
    %694 = vmatmul.mubr.f32.gmra.mrb[0].mxu0 %v582
    %v695 = vpop.f32.mrb[0].mxu0
    %v696 = vadd.f32 %v579, %v695
    %v697 = vpop.f32.mrb[0].mxu0
    %698 = vmatprep.mubr.f32.mxu0 0.0
    %699 = vmatmul.mubr.f32.gmra.mrb[0].mxu0 %v585
    %v700 = vpop.f32.mrb[0].mxu0
    %v701 = vadd.f32 %v579, %v700
    %v702 = vpop.f32.mrb[0].mxu0
    %703 = vmatprep.mubr.f32.mxu0 0.0
    %704 = vmatmul.mubr.f32.gmra.mrb[0].mxu0 %v588
    %v705 = vpop.f32.mrb[0].mxu0
    %v706 = vadd.f32 %v579, %v705
    %v707 = vpop.f32.mrb[0].mxu0
    %708 = vmatprep.mubr.f32.mxu0 0.0
    %709 = vmatmul.mubr.f32.gmra.mrb[0].mxu0 %v591
    %v710 = vpop.f32.mrb[0].mxu0
    %v711 = vadd.f32 %v579, %v710
    %v712 = vpop.f32.mrb[0].mxu0
    %713 = vmatprep.mubr.f32.mxu0 0.0
    %714 = vmatmul.mubr.f32.gmra.mrb[0].mxu0 %v594
    %v715 = vpop.f32.mrb[0].mxu0
    %v716 = vadd.f32 %v579, %v715
    %v717 = vpop.f32.mrb[0].mxu0
    %718 = vmatprep.mubr.f32.mxu0 0.0
    %719 = vmatmul.mubr.f32.gmra.mrb[0].mxu0 %v597
    %v720 = vpop.f32.mrb[0].mxu0
    %v721 = vadd.f32 %v579, %v720
    %v722 = vpop.f32.mrb[0].mxu0
    %723 = vmatprep.mubr.f32.mxu0 0.0
    %724 = vmatmul.mubr.f32.gmra.mrb[0].mxu0 %v600
    %v725 = vpop.f32.mrb[0].mxu0
    %v726 = vadd.f32 %v579, %v725
    %v727 = vpop.f32.mrb[0].mxu0
    %728 = vmatprep.mubr.f32.mxu0 0.0
    %729 = vmatmul.mubr.f32.gmra.mrb[0].mxu0 %v603
    %v730 = vpop.f32.mrb[0].mxu0
    %v731 = vadd.f32 %v579, %v730
    %v732 = vpop.f32.mrb[0].mxu0
    %733 = vmatprep.mubr.f32.mxu0 0.0
    %734 = vmatmul.mubr.f32.gmra.mrb[0].mxu0 %v606
    %v735 = vpop.f32.mrb[0].mxu0
    %v736 = vadd.f32 %v579, %v735
    %v737 = vpop.f32.mrb[0].mxu0
    %738 = vmatprep.mubr.f32.mxu0 0.0
    %739 = vmatmul.mubr.f32.gmra.mrb[0].mxu0 %v609
    %v740 = vpop.f32.mrb[0].mxu0
    %v741 = vadd.f32 %v579, %v740
    %v742 = vpop.f32.mrb[0].mxu0
    %743 = vmatprep.mubr.f32.mxu0 0.0
    %744 = vmatmul.mubr.f32.gmra.mrb[0].mxu0 %v612
    %v745 = vpop.f32.mrb[0].mxu0
    %v746 = vadd.f32 %v579, %v745
    %v747 = vpop.f32.mrb[0].mxu0
    %748 = vmatprep.mubr.f32.mxu0 0.0
    %749 = vmatmul.mubr.f32.gmra.mrb[0].mxu0 %v615
    %v750 = vpop.f32.mrb[0].mxu0
    %v751 = vadd.f32 %v579, %v750
    %v752 = vpop.f32.mrb[0].mxu0
    %753 = vmatprep.mubr.f32.mxu0 0.0
    %754 = vmatmul.mubr.f32.gmra.mrb[0].mxu0 %v618
    %v755 = vpop.f32.mrb[0].mxu0
    %v756 = vadd.f32 %v579, %v755
    %v757 = vpop.f32.mrb[0].mxu0
    %758 = vmatprep.mubr.f32.mxu0 0.0
    %759 = vmatmul.mubr.f32.gmra.mrb[0].mxu0 %v621
    %v760 = vpop.f32.mrb[0].mxu0
    %v761 = vadd.f32 %v579, %v760
    %v762 = vpop.f32.mrb[0].mxu0
    %763 = vmatprep.mubr.f32.mxu0 0.0
    %764 = vmatmul.mubr.f32.gmra.mrb[0].mxu0 %v624
    %v765 = vpop.f32.mrb[0].mxu0
    %v766 = vadd.f32 %v579, %v765
    %v767 = vpop.f32.mrb[0].mxu0
    %768 = vmatprep.mubr.f32.mxu0 0.0
    %769 = vmatmul.mubr.f32.gmra.mrb[0].mxu0 %v627
    %v770 = vpop.f32.mrb[0].mxu0
    %v771 = vadd.f32 %v579, %v770
    %v772 = vpop.f32.mrb[0].mxu0
    %773 = vdwg.mxu0
    %vm774 = vcmp.lt.s32.totalorder %v104, 16
    %vm775 = vcmp.lt.s32.totalorder %v105, 16
    %vm776 = vcmp.lt.s32.totalorder %v106, 16
    %vm777 = vcmp.lt.s32.totalorder %v107, 16
    %vm778 = vcmp.lt.s32.totalorder %v108, 16
    %vm779 = vcmp.lt.s32.totalorder %v109, 16
    %vm780 = vcmp.lt.s32.totalorder %v110, 16
    %vm781 = vcmp.lt.s32.totalorder %v111, 16
    %vm782 = vcmp.lt.s32.totalorder %v112, 16
    %vm783 = vcmp.lt.s32.totalorder %v113, 16
    %vm784 = vcmp.lt.s32.totalorder %v114, 16
    %vm785 = vcmp.lt.s32.totalorder %v115, 16
    %vm786 = vcmp.lt.s32.totalorder %v116, 16
    %vm787 = vcmp.lt.s32.totalorder %v117, 16
    %vm788 = vcmp.lt.s32.totalorder %v118, 16
    %vm789 = vcmp.lt.s32.totalorder %v119, 16
    %v790 = vsel %vm774, 0.0, %v568
    %v791 = vsel %vm775, 0.0, %v569
    %v792 = vsel %vm776, 0.0, %v554
    %v793 = vsel %vm777, 0.0, %v555
    %v794 = vsel %vm778, 0.0, %v556
    %v795 = vsel %vm779, 0.0, %v557
    %v796 = vsel %vm780, 0.0, %v558
    %v797 = vsel %vm781, 0.0, %v559
    %v798 = vsel %vm782, 0.0, %v560
    %v799 = vsel %vm783, 0.0, %v561
    %v800 = vsel %vm784, 0.0, %v562
    %v801 = vsel %vm785, 0.0, %v563
    %v802 = vsel %vm786, 0.0, %v564
    %v803 = vsel %vm787, 0.0, %v565
    %v804 = vsel %vm788, 0.0, %v566
    %v805 = vsel %vm789, 0.0, %v567
    %822 = vrot.lane.b32.xlu0 %v790, 32
    %v823 = vpop.permute.xlu0 %822
    %824 = vrot.lane.b32.xlu0 %v791, 32
    %v825 = vpop.permute.xlu0 %824
    %826 = vrot.lane.b32.xlu0 %v792, 32
    %v827 = vpop.permute.xlu0 %826
    %828 = vrot.lane.b32.xlu0 %v793, 32
    %v829 = vpop.permute.xlu0 %828
    %830 = vrot.lane.b32.xlu0 %v794, 32
    %v831 = vpop.permute.xlu0 %830
    %832 = vrot.lane.b32.xlu0 %v795, 32
    %v833 = vpop.permute.xlu0 %832
    %834 = vrot.lane.b32.xlu0 %v796, 32
    %v835 = vpop.permute.xlu0 %834
    %836 = vrot.lane.b32.xlu0 %v797, 32
    %v837 = vpop.permute.xlu0 %836
    %838 = vrot.lane.b32.xlu0 %v798, 32
    %v839 = vpop.permute.xlu0 %838
    %840 = vrot.lane.b32.xlu0 %v799, 32
    %v841 = vpop.permute.xlu0 %840
    %842 = vrot.lane.b32.xlu0 %v800, 32
    %v843 = vpop.permute.xlu0 %842
    %844 = vrot.lane.b32.xlu0 %v801, 32
    %v845 = vpop.permute.xlu0 %844
    %846 = vrot.lane.b32.xlu0 %v802, 32
    %v847 = vpop.permute.xlu0 %846
    %848 = vrot.lane.b32.xlu0 %v803, 32
    %v849 = vpop.permute.xlu0 %848
    %850 = vrot.lane.b32.xlu0 %v804, 32
    %v851 = vpop.permute.xlu0 %850
    %852 = vrot.lane.b32.xlu0 %v805, 32
    %v853 = vpop.permute.xlu0 %852
    %v870 = vsel %vm216, %v554, %v823
    %v871 = vsel %vm216, %v555, %v825
    %v872 = vsel %vm216, %v556, %v827
    %v873 = vsel %vm216, %v557, %v829
    %v874 = vsel %vm216, %v558, %v831
    %v875 = vsel %vm216, %v559, %v833
    %v876 = vsel %vm216, %v560, %v835
    %v877 = vsel %vm216, %v561, %v837
    %v878 = vsel %vm216, %v562, %v839
    %v879 = vsel %vm216, %v563, %v841
    %v880 = vsel %vm216, %v564, %v843
    %v881 = vsel %vm216, %v565, %v845
    %v882 = vsel %vm216, %v566, %v847
    %v883 = vsel %vm216, %v567, %v849
    %v884 = vsel %vm216, %v568, %v851
    %v885 = vsel %vm216, %v569, %v853
    %s886 = scalar_lea.vmem [#allocation3], 64
    %v887 = vld [vmem:[%s886] sm:$0xff]
    %v888 = vld [vmem:[%s886 + $0x8] sm:$0xff]
    %v889 = vld [vmem:[%s886 + $0x10] sm:$0xff]
    %v890 = vld [vmem:[%s886 + $0x18] sm:$0xff]
    %v891 = vld [vmem:[%s886 + $0x20] sm:$0xff]
    %v892 = vld [vmem:[%s886 + $0x28] sm:$0xff]
    %v893 = vld [vmem:[%s886 + $0x30] sm:$0xff]
    %v894 = vld [vmem:[%s886 + $0x38] sm:$0xff]
    %s895 = scalar_lea.vmem [#allocation5], 1
    %v896 = vld [vmem:[%s895] sm:$0x1]
    %v898 = vlaneseq
    %v899 = vshrl.u32 %v898, 7
    %v900 = vsub.s32 0, %v899
    %v901 = vrot.slane %v896, %v900
    %v904 = vsel %vm248, %v870, 0
    %v907 = vsel %vm248, %v871, 0
    %v910 = vsel %vm248, %v872, 0
    %v913 = vsel %vm248, %v873, 0
    %v916 = vsel %vm248, %v874, 0
    %v919 = vsel %vm248, %v875, 0
    %v922 = vsel %vm248, %v876, 0
    %v925 = vsel %vm248, %v877, 0
    %v928 = vsel %vm248, %v878, 0
    %v931 = vsel %vm248, %v879, 0
    %v934 = vsel %vm248, %v880, 0
    %v937 = vsel %vm248, %v881, 0
    %v940 = vsel %vm248, %v882, 0
    %v943 = vsel %vm248, %v883, 0
    %v946 = vsel %vm248, %v884, 0
    %v949 = vsel %vm248, %v885, 0
    %951 = vmatprep.subr.mxu0 0.0
    %952 = vmatpush1.msra.mxu0 %v887
    %953 = vmatprep.subr.mxu0 0.0
    %954 = vmatpush1.msra.mxu0 %v888
    %955 = vmatprep.subr.mxu0 0.0
    %956 = vmatpush1.msra.mxu0 %v889
    %957 = vmatprep.subr.mxu0 0.0
    %958 = vmatpush1.msra.mxu0 %v890
    %959 = vmatprep.subr.mxu0 0.0
    %960 = vmatpush1.msra.mxu0 %v891
    %961 = vmatprep.subr.mxu0 0.0
    %962 = vmatpush1.msra.mxu0 %v892
    %963 = vmatprep.subr.mxu0 0.0
    %964 = vmatpush1.msra.mxu0 %v893
    %965 = vmatprep.subr.mxu0 0.0
    %966 = vmatpush1.msra.mxu0 %v894
    %967 = vmatprep.subr.mxu0 0.0
    %968 = vmatpush1.msra.mxu0 0.0
    %969 = vmatprep.subr.mxu0 0.0
    %970 = vmatpush1.msra.mxu0 0.0
    %971 = vmatprep.subr.mxu0 0.0
    %972 = vmatpush1.msra.mxu0 0.0
    %973 = vmatprep.subr.mxu0 0.0
    %974 = vmatpush1.msra.mxu0 0.0
    %975 = vmatprep.subr.mxu0 0.0
    %976 = vmatpush1.msra.mxu0 0.0
    %977 = vmatprep.subr.mxu0 0.0
    %978 = vmatpush1.msra.mxu0 0.0
    %979 = vmatprep.subr.mxu0 0.0
    %980 = vmatpush1.msra.mxu0 0.0
    %981 = vmatprep.subr.mxu0 0.0
    %982 = vmatpush1.msra.mxu0 0.0
    %983 = vmatprep.subr.mxu0 0.0
    %984 = vmatpush1.msra.mxu0 0.0
    %985 = vmatprep.subr.mxu0 0.0
    %986 = vmatpush1.msra.mxu0 0.0
    %987 = vmatprep.subr.mxu0 0.0
    %988 = vmatpush1.msra.mxu0 0.0
    %989 = vmatprep.subr.mxu0 0.0
    %990 = vmatpush1.msra.mxu0 0.0
    %991 = vmatprep.subr.mxu0 0.0
    %992 = vmatpush1.msra.mxu0 0.0
    %993 = vmatprep.subr.mxu0 0.0
    %994 = vmatpush1.msra.mxu0 0.0
    %995 = vmatprep.subr.mxu0 0.0
    %996 = vmatpush1.msra.mxu0 0.0
    %997 = vmatprep.subr.mxu0 0.0
    %998 = vmatpush1.msra.mxu0 0.0
    %999 = vmatprep.subr.mxu0 0.0
    %1000 = vmatpush1.msra.mxu0 0.0
    %1001 = vmatprep.subr.mxu0 0.0
    %1002 = vmatpush1.msra.mxu0 0.0
    %1003 = vmatprep.subr.mxu0 0.0
    %1004 = vmatpush1.msra.mxu0 0.0
    %1005 = vmatprep.subr.mxu0 0.0
    %1006 = vmatpush1.msra.mxu0 0.0
    %1007 = vmatprep.subr.mxu0 0.0
    %1008 = vmatpush1.msra.mxu0 0.0
    %1009 = vmatprep.subr.mxu0 0.0
    %1010 = vmatpush1.msra.mxu0 0.0
    %1011 = vmatprep.subr.mxu0 0.0
    %1012 = vmatpush1.msra.mxu0 0.0
    %1013 = vmatprep.subr.mxu0 0.0
    %1014 = vmatpush1.msra.mxu0 0.0
    %1015 = vmatprep.mubr.f32.mxu0 0.0
    %1016 = vmatmul.mubr.f32.gmra.mrb[0].mxu0 %v904
    %v1017 = vpop.f32.mrb[0].mxu0
    %v1018 = vadd.f32 %v901, %v1017
    %v1019 = vpop.f32.mrb[0].mxu0
    %1020 = vmatprep.mubr.f32.mxu0 0.0
    %1021 = vmatmul.mubr.f32.gmra.mrb[0].mxu0 %v907
    %v1022 = vpop.f32.mrb[0].mxu0
    %v1023 = vadd.f32 %v901, %v1022
    %v1024 = vpop.f32.mrb[0].mxu0
    %1025 = vmatprep.mubr.f32.mxu0 0.0
    %1026 = vmatmul.mubr.f32.gmra.mrb[0].mxu0 %v910
    %v1027 = vpop.f32.mrb[0].mxu0
    %v1028 = vadd.f32 %v901, %v1027
    %v1029 = vpop.f32.mrb[0].mxu0
    %1030 = vmatprep.mubr.f32.mxu0 0.0
    %1031 = vmatmul.mubr.f32.gmra.mrb[0].mxu0 %v913
    %v1032 = vpop.f32.mrb[0].mxu0
    %v1033 = vadd.f32 %v901, %v1032
    %v1034 = vpop.f32.mrb[0].mxu0
    %1035 = vmatprep.mubr.f32.mxu0 0.0
    %1036 = vmatmul.mubr.f32.gmra.mrb[0].mxu0 %v916
    %v1037 = vpop.f32.mrb[0].mxu0
    %v1038 = vadd.f32 %v901, %v1037
    %v1039 = vpop.f32.mrb[0].mxu0
    %1040 = vmatprep.mubr.f32.mxu0 0.0
    %1041 = vmatmul.mubr.f32.gmra.mrb[0].mxu0 %v919
    %v1042 = vpop.f32.mrb[0].mxu0
    %v1043 = vadd.f32 %v901, %v1042
    %v1044 = vpop.f32.mrb[0].mxu0
    %1045 = vmatprep.mubr.f32.mxu0 0.0
    %1046 = vmatmul.mubr.f32.gmra.mrb[0].mxu0 %v922
    %v1047 = vpop.f32.mrb[0].mxu0
    %v1048 = vadd.f32 %v901, %v1047
    %v1049 = vpop.f32.mrb[0].mxu0
    %1050 = vmatprep.mubr.f32.mxu0 0.0
    %1051 = vmatmul.mubr.f32.gmra.mrb[0].mxu0 %v925
    %v1052 = vpop.f32.mrb[0].mxu0
    %v1053 = vadd.f32 %v901, %v1052
    %v1054 = vpop.f32.mrb[0].mxu0
    %1055 = vmatprep.mubr.f32.mxu0 0.0
    %1056 = vmatmul.mubr.f32.gmra.mrb[0].mxu0 %v928
    %v1057 = vpop.f32.mrb[0].mxu0
    %v1058 = vadd.f32 %v901, %v1057
    %v1059 = vpop.f32.mrb[0].mxu0
    %1060 = vmatprep.mubr.f32.mxu0 0.0
    %1061 = vmatmul.mubr.f32.gmra.mrb[0].mxu0 %v931
    %v1062 = vpop.f32.mrb[0].mxu0
    %v1063 = vadd.f32 %v901, %v1062
    %v1064 = vpop.f32.mrb[0].mxu0
    %1065 = vmatprep.mubr.f32.mxu0 0.0
    %1066 = vmatmul.mubr.f32.gmra.mrb[0].mxu0 %v934
    %v1067 = vpop.f32.mrb[0].mxu0
    %v1068 = vadd.f32 %v901, %v1067
    %v1069 = vpop.f32.mrb[0].mxu0
    %1070 = vmatprep.mubr.f32.mxu0 0.0
    %1071 = vmatmul.mubr.f32.gmra.mrb[0].mxu0 %v937
    %v1072 = vpop.f32.mrb[0].mxu0
    %v1073 = vadd.f32 %v901, %v1072
    %v1074 = vpop.f32.mrb[0].mxu0
    %1075 = vmatprep.mubr.f32.mxu0 0.0
    %1076 = vmatmul.mubr.f32.gmra.mrb[0].mxu0 %v940
    %v1077 = vpop.f32.mrb[0].mxu0
    %v1078 = vadd.f32 %v901, %v1077
    %v1079 = vpop.f32.mrb[0].mxu0
    %1080 = vmatprep.mubr.f32.mxu0 0.0
    %1081 = vmatmul.mubr.f32.gmra.mrb[0].mxu0 %v943
    %v1082 = vpop.f32.mrb[0].mxu0
    %v1083 = vadd.f32 %v901, %v1082
    %v1084 = vpop.f32.mrb[0].mxu0
    %1085 = vmatprep.mubr.f32.mxu0 0.0
    %1086 = vmatmul.mubr.f32.gmra.mrb[0].mxu0 %v946
    %v1087 = vpop.f32.mrb[0].mxu0
    %v1088 = vadd.f32 %v901, %v1087
    %v1089 = vpop.f32.mrb[0].mxu0
    %1090 = vmatprep.mubr.f32.mxu0 0.0
    %1091 = vmatmul.mubr.f32.gmra.mrb[0].mxu0 %v949
    %v1092 = vpop.f32.mrb[0].mxu0
    %v1093 = vadd.f32 %v901, %v1092
    %v1094 = vpop.f32.mrb[0].mxu0
    %1095 = vdwg.mxu0
    %v1096 = vtanh.pop %v1018
    %v1097 = vtanh.pop %v1023
    %v1098 = vtanh.pop %v1028
    %v1099 = vtanh.pop %v1033
    %v1100 = vtanh.pop %v1038
    %v1101 = vtanh.pop %v1043
    %v1102 = vtanh.pop %v1048
    %v1103 = vtanh.pop %v1053
    %v1104 = vtanh.pop %v1058
    %v1105 = vtanh.pop %v1063
    %v1106 = vtanh.pop %v1068
    %v1107 = vtanh.pop %v1073
    %v1108 = vtanh.pop %v1078
    %v1109 = vtanh.pop %v1083
    %v1110 = vtanh.pop %v1088
    %v1111 = vtanh.pop %v1093
    %v1112 = vmul.f32 %v1096, 0.5
    %v1113 = vmul.f32 %v1097, 0.5
    %v1114 = vmul.f32 %v1098, 0.5
    %v1115 = vmul.f32 %v1099, 0.5
    %v1116 = vmul.f32 %v1100, 0.5
    %v1117 = vmul.f32 %v1101, 0.5
    %v1118 = vmul.f32 %v1102, 0.5
    %v1119 = vmul.f32 %v1103, 0.5
    %v1120 = vmul.f32 %v1104, 0.5
    %v1121 = vmul.f32 %v1105, 0.5
    %v1122 = vmul.f32 %v1106, 0.5
    %v1123 = vmul.f32 %v1107, 0.5
    %v1124 = vmul.f32 %v1108, 0.5
    %v1125 = vmul.f32 %v1109, 0.5
    %v1126 = vmul.f32 %v1110, 0.5
    %v1127 = vmul.f32 %v1111, 0.5
    %v1128 = vadd.f32 %v1112, 0.5
    %v1129 = vadd.f32 %v1113, 0.5
    %v1130 = vadd.f32 %v1114, 0.5
    %v1131 = vadd.f32 %v1115, 0.5
    %v1132 = vadd.f32 %v1116, 0.5
    %v1133 = vadd.f32 %v1117, 0.5
    %v1134 = vadd.f32 %v1118, 0.5
    %v1135 = vadd.f32 %v1119, 0.5
    %v1136 = vadd.f32 %v1120, 0.5
    %v1137 = vadd.f32 %v1121, 0.5
    %v1138 = vadd.f32 %v1122, 0.5
    %v1139 = vadd.f32 %v1123, 0.5
    %v1140 = vadd.f32 %v1124, 0.5
    %v1141 = vadd.f32 %v1125, 0.5
    %v1142 = vadd.f32 %v1126, 0.5
    %v1143 = vadd.f32 %v1127, 0.5
    %1160 = vrot.lane.b32.xlu0 %v1128, 96
    %v1161 = vpop.permute.xlu0 %1160
    %1162 = vrot.lane.b32.xlu0 %v1129, 96
    %v1163 = vpop.permute.xlu0 %1162
    %1164 = vrot.lane.b32.xlu0 %v1130, 96
    %v1165 = vpop.permute.xlu0 %1164
    %1166 = vrot.lane.b32.xlu0 %v1131, 96
    %v1167 = vpop.permute.xlu0 %1166
    %1168 = vrot.lane.b32.xlu0 %v1132, 96
    %v1169 = vpop.permute.xlu0 %1168
    %1170 = vrot.lane.b32.xlu0 %v1133, 96
    %v1171 = vpop.permute.xlu0 %1170
    %1172 = vrot.lane.b32.xlu0 %v1134, 96
    %v1173 = vpop.permute.xlu0 %1172
    %1174 = vrot.lane.b32.xlu0 %v1135, 96
    %v1175 = vpop.permute.xlu0 %1174
    %1176 = vrot.lane.b32.xlu0 %v1136, 96
    %v1177 = vpop.permute.xlu0 %1176
    %1178 = vrot.lane.b32.xlu0 %v1137, 96
    %v1179 = vpop.permute.xlu0 %1178
    %1180 = vrot.lane.b32.xlu0 %v1138, 96
    %v1181 = vpop.permute.xlu0 %1180
    %1182 = vrot.lane.b32.xlu0 %v1139, 96
    %v1183 = vpop.permute.xlu0 %1182
    %1184 = vrot.lane.b32.xlu0 %v1140, 96
    %v1185 = vpop.permute.xlu0 %1184
    %1186 = vrot.lane.b32.xlu0 %v1141, 96
    %v1187 = vpop.permute.xlu0 %1186
    %1188 = vrot.lane.b32.xlu0 %v1142, 96
    %v1189 = vpop.permute.xlu0 %1188
    %1190 = vrot.lane.b32.xlu0 %v1143, 96
    %v1191 = vpop.permute.xlu0 %1190
    %v1208 = vmul.f32 %v1096, %v1161
    %v1209 = vmul.f32 %v1097, %v1163
    %v1210 = vmul.f32 %v1098, %v1165
    %v1211 = vmul.f32 %v1099, %v1167
    %v1212 = vmul.f32 %v1100, %v1169
    %v1213 = vmul.f32 %v1101, %v1171
    %v1214 = vmul.f32 %v1102, %v1173
    %v1215 = vmul.f32 %v1103, %v1175
    %v1216 = vmul.f32 %v1104, %v1177
    %v1217 = vmul.f32 %v1105, %v1179
    %v1218 = vmul.f32 %v1106, %v1181
    %v1219 = vmul.f32 %v1107, %v1183
    %v1220 = vmul.f32 %v1108, %v1185
    %v1221 = vmul.f32 %v1109, %v1187
    %v1222 = vmul.f32 %v1110, %v1189
    %v1223 = vmul.f32 %v1111, %v1191
    %s1224 = scalar_lea.vmem %s3, 32
    %v1225 = vld [vmem:[%s1224] sm:$0xff]
    %v1226 = vld [vmem:[%s1224 + $0x8] sm:$0xff]
    %v1227 = vld [vmem:[%s1224 + $0x10] sm:$0xff]
    %v1228 = vld [vmem:[%s1224 + $0x18] sm:$0xff]
    %v1230 = vsel %vm216, %v1208, 0
    %v1233 = vsel %vm216, %v1209, 0
    %v1236 = vsel %vm216, %v1210, 0
    %v1239 = vsel %vm216, %v1211, 0
    %v1242 = vsel %vm216, %v1212, 0
    %v1245 = vsel %vm216, %v1213, 0
    %v1248 = vsel %vm216, %v1214, 0
    %v1251 = vsel %vm216, %v1215, 0
    %v1254 = vsel %vm216, %v1216, 0
    %v1257 = vsel %vm216, %v1217, 0
    %v1260 = vsel %vm216, %v1218, 0
    %v1263 = vsel %vm216, %v1219, 0
    %v1266 = vsel %vm216, %v1220, 0
    %v1269 = vsel %vm216, %v1221, 0
    %v1272 = vsel %vm216, %v1222, 0
    %v1275 = vsel %vm216, %v1223, 0
    %1277 = vmatprep.subr.mxu0 0.0
    %1278 = vmatpush1.msra.mxu0 %v1225
    %1279 = vmatprep.subr.mxu0 0.0
    %1280 = vmatpush1.msra.mxu0 %v1226
    %1281 = vmatprep.subr.mxu0 0.0
    %1282 = vmatpush1.msra.mxu0 %v1227
    %1283 = vmatprep.subr.mxu0 0.0
    %1284 = vmatpush1.msra.mxu0 %v1228
    %1285 = vmatprep.subr.mxu0 0.0
    %1286 = vmatpush1.msra.mxu0 0.0
    %1287 = vmatprep.subr.mxu0 0.0
    %1288 = vmatpush1.msra.mxu0 0.0
    %1289 = vmatprep.subr.mxu0 0.0
    %1290 = vmatpush1.msra.mxu0 0.0
    %1291 = vmatprep.subr.mxu0 0.0
    %1292 = vmatpush1.msra.mxu0 0.0
    %1293 = vmatprep.subr.mxu0 0.0
    %1294 = vmatpush1.msra.mxu0 0.0
    %1295 = vmatprep.subr.mxu0 0.0
    %1296 = vmatpush1.msra.mxu0 0.0
    %1297 = vmatprep.subr.mxu0 0.0
    %1298 = vmatpush1.msra.mxu0 0.0
    %1299 = vmatprep.subr.mxu0 0.0
    %1300 = vmatpush1.msra.mxu0 0.0
    %1301 = vmatprep.subr.mxu0 0.0
    %1302 = vmatpush1.msra.mxu0 0.0
    %1303 = vmatprep.subr.mxu0 0.0
    %1304 = vmatpush1.msra.mxu0 0.0
    %1305 = vmatprep.subr.mxu0 0.0
    %1306 = vmatpush1.msra.mxu0 0.0
    %1307 = vmatprep.subr.mxu0 0.0
    %1308 = vmatpush1.msra.mxu0 0.0
    %1309 = vmatprep.subr.mxu0 0.0
    %1310 = vmatpush1.msra.mxu0 0.0
    %1311 = vmatprep.subr.mxu0 0.0
    %1312 = vmatpush1.msra.mxu0 0.0
    %1313 = vmatprep.subr.mxu0 0.0
    %1314 = vmatpush1.msra.mxu0 0.0
    %1315 = vmatprep.subr.mxu0 0.0
    %1316 = vmatpush1.msra.mxu0 0.0
    %1317 = vmatprep.subr.mxu0 0.0
    %1318 = vmatpush1.msra.mxu0 0.0
    %1319 = vmatprep.subr.mxu0 0.0
    %1320 = vmatpush1.msra.mxu0 0.0
    %1321 = vmatprep.subr.mxu0 0.0
    %1322 = vmatpush1.msra.mxu0 0.0
    %1323 = vmatprep.subr.mxu0 0.0
    %1324 = vmatpush1.msra.mxu0 0.0
    %1325 = vmatprep.subr.mxu0 0.0
    %1326 = vmatpush1.msra.mxu0 0.0
    %1327 = vmatprep.subr.mxu0 0.0
    %1328 = vmatpush1.msra.mxu0 0.0
    %1329 = vmatprep.subr.mxu0 0.0
    %1330 = vmatpush1.msra.mxu0 0.0
    %1331 = vmatprep.subr.mxu0 0.0
    %1332 = vmatpush1.msra.mxu0 0.0
    %1333 = vmatprep.subr.mxu0 0.0
    %1334 = vmatpush1.msra.mxu0 0.0
    %1335 = vmatprep.subr.mxu0 0.0
    %1336 = vmatpush1.msra.mxu0 0.0
    %1337 = vmatprep.subr.mxu0 0.0
    %1338 = vmatpush1.msra.mxu0 0.0
    %1339 = vmatprep.subr.mxu0 0.0
    %1340 = vmatpush1.msra.mxu0 0.0
    %1341 = vmatprep.mubr.f32.mxu0 0.0
    %1342 = vmatmul.mubr.f32.gmra.mrb[0].mxu0 %v1230
    %v1343 = vpop.f32.mrb[0].mxu0
    %v1344 = vadd.f32 0.0, %v1343
    %v1345 = vpop.f32.mrb[0].mxu0
    %1346 = vmatprep.mubr.f32.mxu0 0.0
    %1347 = vmatmul.mubr.f32.gmra.mrb[0].mxu0 %v1233
    %v1348 = vpop.f32.mrb[0].mxu0
    %v1349 = vadd.f32 0.0, %v1348
    %v1350 = vpop.f32.mrb[0].mxu0
    %1351 = vmatprep.mubr.f32.mxu0 0.0
    %1352 = vmatmul.mubr.f32.gmra.mrb[0].mxu0 %v1236
    %v1353 = vpop.f32.mrb[0].mxu0
    %v1354 = vadd.f32 0.0, %v1353
    %v1355 = vpop.f32.mrb[0].mxu0
    %1356 = vmatprep.mubr.f32.mxu0 0.0
    %1357 = vmatmul.mubr.f32.gmra.mrb[0].mxu0 %v1239
    %v1358 = vpop.f32.mrb[0].mxu0
    %v1359 = vadd.f32 0.0, %v1358
    %v1360 = vpop.f32.mrb[0].mxu0
    %1361 = vmatprep.mubr.f32.mxu0 0.0
    %1362 = vmatmul.mubr.f32.gmra.mrb[0].mxu0 %v1242
    %v1363 = vpop.f32.mrb[0].mxu0
    %v1364 = vadd.f32 0.0, %v1363
    %v1365 = vpop.f32.mrb[0].mxu0
    %1366 = vmatprep.mubr.f32.mxu0 0.0
    %1367 = vmatmul.mubr.f32.gmra.mrb[0].mxu0 %v1245
    %v1368 = vpop.f32.mrb[0].mxu0
    %v1369 = vadd.f32 0.0, %v1368
    %v1370 = vpop.f32.mrb[0].mxu0
    %1371 = vmatprep.mubr.f32.mxu0 0.0
    %1372 = vmatmul.mubr.f32.gmra.mrb[0].mxu0 %v1248
    %v1373 = vpop.f32.mrb[0].mxu0
    %v1374 = vadd.f32 0.0, %v1373
    %v1375 = vpop.f32.mrb[0].mxu0
    %1376 = vmatprep.mubr.f32.mxu0 0.0
    %1377 = vmatmul.mubr.f32.gmra.mrb[0].mxu0 %v1251
    %v1378 = vpop.f32.mrb[0].mxu0
    %v1379 = vadd.f32 0.0, %v1378
    %v1380 = vpop.f32.mrb[0].mxu0
    %1381 = vmatprep.mubr.f32.mxu0 0.0
    %1382 = vmatmul.mubr.f32.gmra.mrb[0].mxu0 %v1254
    %v1383 = vpop.f32.mrb[0].mxu0
    %v1384 = vadd.f32 0.0, %v1383
    %v1385 = vpop.f32.mrb[0].mxu0
    %1386 = vmatprep.mubr.f32.mxu0 0.0
    %1387 = vmatmul.mubr.f32.gmra.mrb[0].mxu0 %v1257
    %v1388 = vpop.f32.mrb[0].mxu0
    %v1389 = vadd.f32 0.0, %v1388
    %v1390 = vpop.f32.mrb[0].mxu0
    %1391 = vmatprep.mubr.f32.mxu0 0.0
    %1392 = vmatmul.mubr.f32.gmra.mrb[0].mxu0 %v1260
    %v1393 = vpop.f32.mrb[0].mxu0
    %v1394 = vadd.f32 0.0, %v1393
    %v1395 = vpop.f32.mrb[0].mxu0
    %1396 = vmatprep.mubr.f32.mxu0 0.0
    %1397 = vmatmul.mubr.f32.gmra.mrb[0].mxu0 %v1263
    %v1398 = vpop.f32.mrb[0].mxu0
    %v1399 = vadd.f32 0.0, %v1398
    %v1400 = vpop.f32.mrb[0].mxu0
    %1401 = vmatprep.mubr.f32.mxu0 0.0
    %1402 = vmatmul.mubr.f32.gmra.mrb[0].mxu0 %v1266
    %v1403 = vpop.f32.mrb[0].mxu0
    %v1404 = vadd.f32 0.0, %v1403
    %v1405 = vpop.f32.mrb[0].mxu0
    %1406 = vmatprep.mubr.f32.mxu0 0.0
    %1407 = vmatmul.mubr.f32.gmra.mrb[0].mxu0 %v1269
    %v1408 = vpop.f32.mrb[0].mxu0
    %v1409 = vadd.f32 0.0, %v1408
    %v1410 = vpop.f32.mrb[0].mxu0
    %1411 = vmatprep.mubr.f32.mxu0 0.0
    %1412 = vmatmul.mubr.f32.gmra.mrb[0].mxu0 %v1272
    %v1413 = vpop.f32.mrb[0].mxu0
    %v1414 = vadd.f32 0.0, %v1413
    %v1415 = vpop.f32.mrb[0].mxu0
    %1416 = vmatprep.mubr.f32.mxu0 0.0
    %1417 = vmatmul.mubr.f32.gmra.mrb[0].mxu0 %v1275
    %v1418 = vpop.f32.mrb[0].mxu0
    %v1419 = vadd.f32 0.0, %v1418
    %v1420 = vpop.f32.mrb[0].mxu0
    %1421 = vdwg.mxu0
    %v1422 = vadd.f32 %v696, %v1344
    %v1423 = vadd.f32 %v701, %v1349
    %v1424 = vadd.f32 %v706, %v1354
    %v1425 = vadd.f32 %v711, %v1359
    %v1426 = vadd.f32 %v716, %v1364
    %v1427 = vadd.f32 %v721, %v1369
    %v1428 = vadd.f32 %v726, %v1374
    %v1429 = vadd.f32 %v731, %v1379
    %v1430 = vadd.f32 %v736, %v1384
    %v1431 = vadd.f32 %v741, %v1389
    %v1432 = vadd.f32 %v746, %v1394
    %v1433 = vadd.f32 %v751, %v1399
    %v1434 = vadd.f32 %v756, %v1404
    %v1435 = vadd.f32 %v761, %v1409
    %v1436 = vadd.f32 %v766, %v1414
    %v1437 = vadd.f32 %v771, %v1419
    %s1438 = scalar_lea.vmem [#allocation7], 1
    %v1439 = vld [vmem:[%s1438] sm:$0x1]
    %v1441 = vlaneseq
    %v1442 = vshrl.u32 %v1441, 7
    %v1443 = vsub.s32 0, %v1442
    %v1444 = vrot.slane %v1439, %v1443
    %v1446 = vadd.f32 %v1422, %v1444
    %v1447 = vadd.f32 %v1423, %v1444
    %v1448 = vadd.f32 %v1424, %v1444
    %v1449 = vadd.f32 %v1425, %v1444
    %v1450 = vadd.f32 %v1426, %v1444
    %v1451 = vadd.f32 %v1427, %v1444
    %v1452 = vadd.f32 %v1428, %v1444
    %v1453 = vadd.f32 %v1429, %v1444
    %v1454 = vadd.f32 %v1430, %v1444
    %v1455 = vadd.f32 %v1431, %v1444
    %v1456 = vadd.f32 %v1432, %v1444
    %v1457 = vadd.f32 %v1433, %v1444
    %v1458 = vadd.f32 %v1434, %v1444
    %v1459 = vadd.f32 %v1435, %v1444
    %v1460 = vadd.f32 %v1436, %v1444
    %v1461 = vadd.f32 %v1437, %v1444
    %v1462 = vadd.f32 %v554, %v1208
    %v1463 = vadd.f32 %v555, %v1209
    %v1464 = vadd.f32 %v556, %v1210
    %v1465 = vadd.f32 %v557, %v1211
    %v1466 = vadd.f32 %v558, %v1212
    %v1467 = vadd.f32 %v559, %v1213
    %v1468 = vadd.f32 %v560, %v1214
    %v1469 = vadd.f32 %v561, %v1215
    %v1470 = vadd.f32 %v562, %v1216
    %v1471 = vadd.f32 %v563, %v1217
    %v1472 = vadd.f32 %v564, %v1218
    %v1473 = vadd.f32 %v565, %v1219
    %v1474 = vadd.f32 %v566, %v1220
    %v1475 = vadd.f32 %v567, %v1221
    %v1476 = vadd.f32 %v568, %v1222
    %v1477 = vadd.f32 %v569, %v1223
    %vm1478 = vcmp.lt.s32.totalorder %v104, 32
    %vm1479 = vcmp.lt.s32.totalorder %v105, 32
    %vm1480 = vcmp.lt.s32.totalorder %v106, 32
    %vm1481 = vcmp.lt.s32.totalorder %v107, 32
    %vm1482 = vcmp.lt.s32.totalorder %v108, 32
    %vm1483 = vcmp.lt.s32.totalorder %v109, 32
    %vm1484 = vcmp.lt.s32.totalorder %v110, 32
    %vm1485 = vcmp.lt.s32.totalorder %v111, 32
    %vm1486 = vcmp.lt.s32.totalorder %v112, 32
    %vm1487 = vcmp.lt.s32.totalorder %v113, 32
    %vm1488 = vcmp.lt.s32.totalorder %v114, 32
    %vm1489 = vcmp.lt.s32.totalorder %v115, 32
    %vm1490 = vcmp.lt.s32.totalorder %v116, 32
    %vm1491 = vcmp.lt.s32.totalorder %v117, 32
    %vm1492 = vcmp.lt.s32.totalorder %v118, 32
    %vm1493 = vcmp.lt.s32.totalorder %v119, 32
    %v1494 = vsel %vm1478, 0.0, %v1474
    %v1495 = vsel %vm1479, 0.0, %v1475
    %v1496 = vsel %vm1480, 0.0, %v1476
    %v1497 = vsel %vm1481, 0.0, %v1477
    %v1498 = vsel %vm1482, 0.0, %v1462
    %v1499 = vsel %vm1483, 0.0, %v1463
    %v1500 = vsel %vm1484, 0.0, %v1464
    %v1501 = vsel %vm1485, 0.0, %v1465
    %v1502 = vsel %vm1486, 0.0, %v1466
    %v1503 = vsel %vm1487, 0.0, %v1467
    %v1504 = vsel %vm1488, 0.0, %v1468
    %v1505 = vsel %vm1489, 0.0, %v1469
    %v1506 = vsel %vm1490, 0.0, %v1470
    %v1507 = vsel %vm1491, 0.0, %v1471
    %v1508 = vsel %vm1492, 0.0, %v1472
    %v1509 = vsel %vm1493, 0.0, %v1473
    %1526 = vrot.lane.b32.xlu0 %v1494, 32
    %v1527 = vpop.permute.xlu0 %1526
    %1528 = vrot.lane.b32.xlu0 %v1495, 32
    %v1529 = vpop.permute.xlu0 %1528
    %1530 = vrot.lane.b32.xlu0 %v1496, 32
    %v1531 = vpop.permute.xlu0 %1530
    %1532 = vrot.lane.b32.xlu0 %v1497, 32
    %v1533 = vpop.permute.xlu0 %1532
    %1534 = vrot.lane.b32.xlu0 %v1498, 32
    %v1535 = vpop.permute.xlu0 %1534
    %1536 = vrot.lane.b32.xlu0 %v1499, 32
    %v1537 = vpop.permute.xlu0 %1536
    %1538 = vrot.lane.b32.xlu0 %v1500, 32
    %v1539 = vpop.permute.xlu0 %1538
    %1540 = vrot.lane.b32.xlu0 %v1501, 32
    %v1541 = vpop.permute.xlu0 %1540
    %1542 = vrot.lane.b32.xlu0 %v1502, 32
    %v1543 = vpop.permute.xlu0 %1542
    %1544 = vrot.lane.b32.xlu0 %v1503, 32
    %v1545 = vpop.permute.xlu0 %1544
    %1546 = vrot.lane.b32.xlu0 %v1504, 32
    %v1547 = vpop.permute.xlu0 %1546
    %1548 = vrot.lane.b32.xlu0 %v1505, 32
    %v1549 = vpop.permute.xlu0 %1548
    %1550 = vrot.lane.b32.xlu0 %v1506, 32
    %v1551 = vpop.permute.xlu0 %1550
    %1552 = vrot.lane.b32.xlu0 %v1507, 32
    %v1553 = vpop.permute.xlu0 %1552
    %1554 = vrot.lane.b32.xlu0 %v1508, 32
    %v1555 = vpop.permute.xlu0 %1554
    %1556 = vrot.lane.b32.xlu0 %v1509, 32
    %v1557 = vpop.permute.xlu0 %1556
    %v1574 = vsel %vm216, %v1462, %v1527
    %v1575 = vsel %vm216, %v1463, %v1529
    %v1576 = vsel %vm216, %v1464, %v1531
    %v1577 = vsel %vm216, %v1465, %v1533
    %v1578 = vsel %vm216, %v1466, %v1535
    %v1579 = vsel %vm216, %v1467, %v1537
    %v1580 = vsel %vm216, %v1468, %v1539
    %v1581 = vsel %vm216, %v1469, %v1541
    %v1582 = vsel %vm216, %v1470, %v1543
    %v1583 = vsel %vm216, %v1471, %v1545
    %v1584 = vsel %vm216, %v1472, %v1547
    %v1585 = vsel %vm216, %v1473, %v1549
    %v1586 = vsel %vm216, %v1474, %v1551
    %v1587 = vsel %vm216, %v1475, %v1553
    %v1588 = vsel %vm216, %v1476, %v1555
    %v1589 = vsel %vm216, %v1477, %v1557
    %s1590 = scalar_lea.vmem [#allocation3], 128
    %v1591 = vld [vmem:[%s1590] sm:$0xff]
    %v1592 = vld [vmem:[%s1590 + $0x8] sm:$0xff]
    %v1593 = vld [vmem:[%s1590 + $0x10] sm:$0xff]
    %v1594 = vld [vmem:[%s1590 + $0x18] sm:$0xff]
    %v1595 = vld [vmem:[%s1590 + $0x20] sm:$0xff]
    %v1596 = vld [vmem:[%s1590 + $0x28] sm:$0xff]
    %v1597 = vld [vmem:[%s1590 + $0x30] sm:$0xff]
    %v1598 = vld [vmem:[%s1590 + $0x38] sm:$0xff]
    %s1599 = scalar_lea.vmem [#allocation5], 2
    %v1600 = vld [vmem:[%s1599] sm:$0x1]
    %v1602 = vlaneseq
    %v1603 = vshrl.u32 %v1602, 7
    %v1604 = vsub.s32 0, %v1603
    %v1605 = vrot.slane %v1600, %v1604
    %v1608 = vsel %vm248, %v1574, 0
    %v1611 = vsel %vm248, %v1575, 0
    %v1614 = vsel %vm248, %v1576, 0
    %v1617 = vsel %vm248, %v1577, 0
    %v1620 = vsel %vm248, %v1578, 0
    %v1623 = vsel %vm248, %v1579, 0
    %v1626 = vsel %vm248, %v1580, 0
    %v1629 = vsel %vm248, %v1581, 0
    %v1632 = vsel %vm248, %v1582, 0
    %v1635 = vsel %vm248, %v1583, 0
    %v1638 = vsel %vm248, %v1584, 0
    %v1641 = vsel %vm248, %v1585, 0
    %v1644 = vsel %vm248, %v1586, 0
    %v1647 = vsel %vm248, %v1587, 0
    %v1650 = vsel %vm248, %v1588, 0
    %v1653 = vsel %vm248, %v1589, 0
    %1655 = vmatprep.subr.mxu0 0.0
    %1656 = vmatpush1.msra.mxu0 %v1591
    %1657 = vmatprep.subr.mxu0 0.0
    %1658 = vmatpush1.msra.mxu0 %v1592
    %1659 = vmatprep.subr.mxu0 0.0
    %1660 = vmatpush1.msra.mxu0 %v1593
    %1661 = vmatprep.subr.mxu0 0.0
    %1662 = vmatpush1.msra.mxu0 %v1594
    %1663 = vmatprep.subr.mxu0 0.0
    %1664 = vmatpush1.msra.mxu0 %v1595
    %1665 = vmatprep.subr.mxu0 0.0
    %1666 = vmatpush1.msra.mxu0 %v1596
    %1667 = vmatprep.subr.mxu0 0.0
    %1668 = vmatpush1.msra.mxu0 %v1597
    %1669 = vmatprep.subr.mxu0 0.0
    %1670 = vmatpush1.msra.mxu0 %v1598
    %1671 = vmatprep.subr.mxu0 0.0
    %1672 = vmatpush1.msra.mxu0 0.0
    %1673 = vmatprep.subr.mxu0 0.0
    %1674 = vmatpush1.msra.mxu0 0.0
    %1675 = vmatprep.subr.mxu0 0.0
    %1676 = vmatpush1.msra.mxu0 0.0
    %1677 = vmatprep.subr.mxu0 0.0
    %1678 = vmatpush1.msra.mxu0 0.0
    %1679 = vmatprep.subr.mxu0 0.0
    %1680 = vmatpush1.msra.mxu0 0.0
    %1681 = vmatprep.subr.mxu0 0.0
    %1682 = vmatpush1.msra.mxu0 0.0
    %1683 = vmatprep.subr.mxu0 0.0
    %1684 = vmatpush1.msra.mxu0 0.0
    %1685 = vmatprep.subr.mxu0 0.0
    %1686 = vmatpush1.msra.mxu0 0.0
    %1687 = vmatprep.subr.mxu0 0.0
    %1688 = vmatpush1.msra.mxu0 0.0
    %1689 = vmatprep.subr.mxu0 0.0
    %1690 = vmatpush1.msra.mxu0 0.0
    %1691 = vmatprep.subr.mxu0 0.0
    %1692 = vmatpush1.msra.mxu0 0.0
    %1693 = vmatprep.subr.mxu0 0.0
    %1694 = vmatpush1.msra.mxu0 0.0
    %1695 = vmatprep.subr.mxu0 0.0
    %1696 = vmatpush1.msra.mxu0 0.0
    %1697 = vmatprep.subr.mxu0 0.0
    %1698 = vmatpush1.msra.mxu0 0.0
    %1699 = vmatprep.subr.mxu0 0.0
    %1700 = vmatpush1.msra.mxu0 0.0
    %1701 = vmatprep.subr.mxu0 0.0
    %1702 = vmatpush1.msra.mxu0 0.0
    %1703 = vmatprep.subr.mxu0 0.0
    %1704 = vmatpush1.msra.mxu0 0.0
    %1705 = vmatprep.subr.mxu0 0.0
    %1706 = vmatpush1.msra.mxu0 0.0
    %1707 = vmatprep.subr.mxu0 0.0
    %1708 = vmatpush1.msra.mxu0 0.0
    %1709 = vmatprep.subr.mxu0 0.0
    %1710 = vmatpush1.msra.mxu0 0.0
    %1711 = vmatprep.subr.mxu0 0.0
    %1712 = vmatpush1.msra.mxu0 0.0
    %1713 = vmatprep.subr.mxu0 0.0
    %1714 = vmatpush1.msra.mxu0 0.0
    %1715 = vmatprep.subr.mxu0 0.0
    %1716 = vmatpush1.msra.mxu0 0.0
    %1717 = vmatprep.subr.mxu0 0.0
    %1718 = vmatpush1.msra.mxu0 0.0
    %1719 = vmatprep.mubr.f32.mxu0 0.0
    %1720 = vmatmul.mubr.f32.gmra.mrb[0].mxu0 %v1608
    %v1721 = vpop.f32.mrb[0].mxu0
    %v1722 = vadd.f32 %v1605, %v1721
    %v1723 = vpop.f32.mrb[0].mxu0
    %1724 = vmatprep.mubr.f32.mxu0 0.0
    %1725 = vmatmul.mubr.f32.gmra.mrb[0].mxu0 %v1611
    %v1726 = vpop.f32.mrb[0].mxu0
    %v1727 = vadd.f32 %v1605, %v1726
    %v1728 = vpop.f32.mrb[0].mxu0
    %1729 = vmatprep.mubr.f32.mxu0 0.0
    %1730 = vmatmul.mubr.f32.gmra.mrb[0].mxu0 %v1614
    %v1731 = vpop.f32.mrb[0].mxu0
    %v1732 = vadd.f32 %v1605, %v1731
    %v1733 = vpop.f32.mrb[0].mxu0
    %1734 = vmatprep.mubr.f32.mxu0 0.0
    %1735 = vmatmul.mubr.f32.gmra.mrb[0].mxu0 %v1617
    %v1736 = vpop.f32.mrb[0].mxu0
    %v1737 = vadd.f32 %v1605, %v1736
    %v1738 = vpop.f32.mrb[0].mxu0
    %1739 = vmatprep.mubr.f32.mxu0 0.0
    %1740 = vmatmul.mubr.f32.gmra.mrb[0].mxu0 %v1620
    %v1741 = vpop.f32.mrb[0].mxu0
    %v1742 = vadd.f32 %v1605, %v1741
    %v1743 = vpop.f32.mrb[0].mxu0
    %1744 = vmatprep.mubr.f32.mxu0 0.0
    %1745 = vmatmul.mubr.f32.gmra.mrb[0].mxu0 %v1623
    %v1746 = vpop.f32.mrb[0].mxu0
    %v1747 = vadd.f32 %v1605, %v1746
    %v1748 = vpop.f32.mrb[0].mxu0
    %1749 = vmatprep.mubr.f32.mxu0 0.0
    %1750 = vmatmul.mubr.f32.gmra.mrb[0].mxu0 %v1626
    %v1751 = vpop.f32.mrb[0].mxu0
    %v1752 = vadd.f32 %v1605, %v1751
    %v1753 = vpop.f32.mrb[0].mxu0
    %1754 = vmatprep.mubr.f32.mxu0 0.0
    %1755 = vmatmul.mubr.f32.gmra.mrb[0].mxu0 %v1629
    %v1756 = vpop.f32.mrb[0].mxu0
    %v1757 = vadd.f32 %v1605, %v1756
    %v1758 = vpop.f32.mrb[0].mxu0
    %1759 = vmatprep.mubr.f32.mxu0 0.0
    %1760 = vmatmul.mubr.f32.gmra.mrb[0].mxu0 %v1632
    %v1761 = vpop.f32.mrb[0].mxu0
    %v1762 = vadd.f32 %v1605, %v1761
    %v1763 = vpop.f32.mrb[0].mxu0
    %1764 = vmatprep.mubr.f32.mxu0 0.0
    %1765 = vmatmul.mubr.f32.gmra.mrb[0].mxu0 %v1635
    %v1766 = vpop.f32.mrb[0].mxu0
    %v1767 = vadd.f32 %v1605, %v1766
    %v1768 = vpop.f32.mrb[0].mxu0
    %1769 = vmatprep.mubr.f32.mxu0 0.0
    %1770 = vmatmul.mubr.f32.gmra.mrb[0].mxu0 %v1638
    %v1771 = vpop.f32.mrb[0].mxu0
    %v1772 = vadd.f32 %v1605, %v1771
    %v1773 = vpop.f32.mrb[0].mxu0
    %1774 = vmatprep.mubr.f32.mxu0 0.0
    %1775 = vmatmul.mubr.f32.gmra.mrb[0].mxu0 %v1641
    %v1776 = vpop.f32.mrb[0].mxu0
    %v1777 = vadd.f32 %v1605, %v1776
    %v1778 = vpop.f32.mrb[0].mxu0
    %1779 = vmatprep.mubr.f32.mxu0 0.0
    %1780 = vmatmul.mubr.f32.gmra.mrb[0].mxu0 %v1644
    %v1781 = vpop.f32.mrb[0].mxu0
    %v1782 = vadd.f32 %v1605, %v1781
    %v1783 = vpop.f32.mrb[0].mxu0
    %1784 = vmatprep.mubr.f32.mxu0 0.0
    %1785 = vmatmul.mubr.f32.gmra.mrb[0].mxu0 %v1647
    %v1786 = vpop.f32.mrb[0].mxu0
    %v1787 = vadd.f32 %v1605, %v1786
    %v1788 = vpop.f32.mrb[0].mxu0
    %1789 = vmatprep.mubr.f32.mxu0 0.0
    %1790 = vmatmul.mubr.f32.gmra.mrb[0].mxu0 %v1650
    %v1791 = vpop.f32.mrb[0].mxu0
    %v1792 = vadd.f32 %v1605, %v1791
    %v1793 = vpop.f32.mrb[0].mxu0
    %1794 = vmatprep.mubr.f32.mxu0 0.0
    %1795 = vmatmul.mubr.f32.gmra.mrb[0].mxu0 %v1653
    %v1796 = vpop.f32.mrb[0].mxu0
    %v1797 = vadd.f32 %v1605, %v1796
    %v1798 = vpop.f32.mrb[0].mxu0
    %1799 = vdwg.mxu0
    %v1800 = vtanh.pop %v1722
    %v1801 = vtanh.pop %v1727
    %v1802 = vtanh.pop %v1732
    %v1803 = vtanh.pop %v1737
    %v1804 = vtanh.pop %v1742
    %v1805 = vtanh.pop %v1747
    %v1806 = vtanh.pop %v1752
    %v1807 = vtanh.pop %v1757
    %v1808 = vtanh.pop %v1762
    %v1809 = vtanh.pop %v1767
    %v1810 = vtanh.pop %v1772
    %v1811 = vtanh.pop %v1777
    %v1812 = vtanh.pop %v1782
    %v1813 = vtanh.pop %v1787
    %v1814 = vtanh.pop %v1792
    %v1815 = vtanh.pop %v1797
    %v1816 = vmul.f32 %v1800, 0.5
    %v1817 = vmul.f32 %v1801, 0.5
    %v1818 = vmul.f32 %v1802, 0.5
    %v1819 = vmul.f32 %v1803, 0.5
    %v1820 = vmul.f32 %v1804, 0.5
    %v1821 = vmul.f32 %v1805, 0.5
    %v1822 = vmul.f32 %v1806, 0.5
    %v1823 = vmul.f32 %v1807, 0.5
    %v1824 = vmul.f32 %v1808, 0.5
    %v1825 = vmul.f32 %v1809, 0.5
    %v1826 = vmul.f32 %v1810, 0.5
    %v1827 = vmul.f32 %v1811, 0.5
    %v1828 = vmul.f32 %v1812, 0.5
    %v1829 = vmul.f32 %v1813, 0.5
    %v1830 = vmul.f32 %v1814, 0.5
    %v1831 = vmul.f32 %v1815, 0.5
    %v1832 = vadd.f32 %v1816, 0.5
    %v1833 = vadd.f32 %v1817, 0.5
    %v1834 = vadd.f32 %v1818, 0.5
    %v1835 = vadd.f32 %v1819, 0.5
    %v1836 = vadd.f32 %v1820, 0.5
    %v1837 = vadd.f32 %v1821, 0.5
    %v1838 = vadd.f32 %v1822, 0.5
    %v1839 = vadd.f32 %v1823, 0.5
    %v1840 = vadd.f32 %v1824, 0.5
    %v1841 = vadd.f32 %v1825, 0.5
    %v1842 = vadd.f32 %v1826, 0.5
    %v1843 = vadd.f32 %v1827, 0.5
    %v1844 = vadd.f32 %v1828, 0.5
    %v1845 = vadd.f32 %v1829, 0.5
    %v1846 = vadd.f32 %v1830, 0.5
    %v1847 = vadd.f32 %v1831, 0.5
    %1864 = vrot.lane.b32.xlu0 %v1832, 96
    %v1865 = vpop.permute.xlu0 %1864
    %1866 = vrot.lane.b32.xlu0 %v1833, 96
    %v1867 = vpop.permute.xlu0 %1866
    %1868 = vrot.lane.b32.xlu0 %v1834, 96
    %v1869 = vpop.permute.xlu0 %1868
    %1870 = vrot.lane.b32.xlu0 %v1835, 96
    %v1871 = vpop.permute.xlu0 %1870
    %1872 = vrot.lane.b32.xlu0 %v1836, 96
    %v1873 = vpop.permute.xlu0 %1872
    %1874 = vrot.lane.b32.xlu0 %v1837, 96
    %v1875 = vpop.permute.xlu0 %1874
    %1876 = vrot.lane.b32.xlu0 %v1838, 96
    %v1877 = vpop.permute.xlu0 %1876
    %1878 = vrot.lane.b32.xlu0 %v1839, 96
    %v1879 = vpop.permute.xlu0 %1878
    %1880 = vrot.lane.b32.xlu0 %v1840, 96
    %v1881 = vpop.permute.xlu0 %1880
    %1882 = vrot.lane.b32.xlu0 %v1841, 96
    %v1883 = vpop.permute.xlu0 %1882
    %1884 = vrot.lane.b32.xlu0 %v1842, 96
    %v1885 = vpop.permute.xlu0 %1884
    %1886 = vrot.lane.b32.xlu0 %v1843, 96
    %v1887 = vpop.permute.xlu0 %1886
    %1888 = vrot.lane.b32.xlu0 %v1844, 96
    %v1889 = vpop.permute.xlu0 %1888
    %1890 = vrot.lane.b32.xlu0 %v1845, 96
    %v1891 = vpop.permute.xlu0 %1890
    %1892 = vrot.lane.b32.xlu0 %v1846, 96
    %v1893 = vpop.permute.xlu0 %1892
    %1894 = vrot.lane.b32.xlu0 %v1847, 96
    %v1895 = vpop.permute.xlu0 %1894
    %v1912 = vmul.f32 %v1800, %v1865
    %v1913 = vmul.f32 %v1801, %v1867
    %v1914 = vmul.f32 %v1802, %v1869
    %v1915 = vmul.f32 %v1803, %v1871
    %v1916 = vmul.f32 %v1804, %v1873
    %v1917 = vmul.f32 %v1805, %v1875
    %v1918 = vmul.f32 %v1806, %v1877
    %v1919 = vmul.f32 %v1807, %v1879
    %v1920 = vmul.f32 %v1808, %v1881
    %v1921 = vmul.f32 %v1809, %v1883
    %v1922 = vmul.f32 %v1810, %v1885
    %v1923 = vmul.f32 %v1811, %v1887
    %v1924 = vmul.f32 %v1812, %v1889
    %v1925 = vmul.f32 %v1813, %v1891
    %v1926 = vmul.f32 %v1814, %v1893
    %v1927 = vmul.f32 %v1815, %v1895
    %s1928 = scalar_lea.vmem %s3, 64
    %v1929 = vld [vmem:[%s1928] sm:$0xff]
    %v1930 = vld [vmem:[%s1928 + $0x8] sm:$0xff]
    %v1931 = vld [vmem:[%s1928 + $0x10] sm:$0xff]
    %v1932 = vld [vmem:[%s1928 + $0x18] sm:$0xff]
    %v1934 = vsel %vm216, %v1912, 0
    %v1937 = vsel %vm216, %v1913, 0
    %v1940 = vsel %vm216, %v1914, 0
    %v1943 = vsel %vm216, %v1915, 0
    %v1946 = vsel %vm216, %v1916, 0
    %v1949 = vsel %vm216, %v1917, 0
    %v1952 = vsel %vm216, %v1918, 0
    %v1955 = vsel %vm216, %v1919, 0
    %v1958 = vsel %vm216, %v1920, 0
    %v1961 = vsel %vm216, %v1921, 0
    %v1964 = vsel %vm216, %v1922, 0
    %v1967 = vsel %vm216, %v1923, 0
    %v1970 = vsel %vm216, %v1924, 0
    %v1973 = vsel %vm216, %v1925, 0
    %v1976 = vsel %vm216, %v1926, 0
    %v1979 = vsel %vm216, %v1927, 0
    %1981 = vmatprep.subr.mxu0 0.0
    %1982 = vmatpush1.msra.mxu0 %v1929
    %1983 = vmatprep.subr.mxu0 0.0
    %1984 = vmatpush1.msra.mxu0 %v1930
    %1985 = vmatprep.subr.mxu0 0.0
    %1986 = vmatpush1.msra.mxu0 %v1931
    %1987 = vmatprep.subr.mxu0 0.0
    %1988 = vmatpush1.msra.mxu0 %v1932
    %1989 = vmatprep.subr.mxu0 0.0
    %1990 = vmatpush1.msra.mxu0 0.0
    %1991 = vmatprep.subr.mxu0 0.0
    %1992 = vmatpush1.msra.mxu0 0.0
    %1993 = vmatprep.subr.mxu0 0.0
    %1994 = vmatpush1.msra.mxu0 0.0
    %1995 = vmatprep.subr.mxu0 0.0
    %1996 = vmatpush1.msra.mxu0 0.0
    %1997 = vmatprep.subr.mxu0 0.0
    %1998 = vmatpush1.msra.mxu0 0.0
    %1999 = vmatprep.subr.mxu0 0.0
    %2000 = vmatpush1.msra.mxu0 0.0
    %2001 = vmatprep.subr.mxu0 0.0
    %2002 = vmatpush1.msra.mxu0 0.0
    %2003 = vmatprep.subr.mxu0 0.0
    %2004 = vmatpush1.msra.mxu0 0.0
    %2005 = vmatprep.subr.mxu0 0.0
    %2006 = vmatpush1.msra.mxu0 0.0
    %2007 = vmatprep.subr.mxu0 0.0
    %2008 = vmatpush1.msra.mxu0 0.0
    %2009 = vmatprep.subr.mxu0 0.0
    %2010 = vmatpush1.msra.mxu0 0.0
    %2011 = vmatprep.subr.mxu0 0.0
    %2012 = vmatpush1.msra.mxu0 0.0
    %2013 = vmatprep.subr.mxu0 0.0
    %2014 = vmatpush1.msra.mxu0 0.0
    %2015 = vmatprep.subr.mxu0 0.0
    %2016 = vmatpush1.msra.mxu0 0.0
    %2017 = vmatprep.subr.mxu0 0.0
    %2018 = vmatpush1.msra.mxu0 0.0
    %2019 = vmatprep.subr.mxu0 0.0
    %2020 = vmatpush1.msra.mxu0 0.0
    %2021 = vmatprep.subr.mxu0 0.0
    %2022 = vmatpush1.msra.mxu0 0.0
    %2023 = vmatprep.subr.mxu0 0.0
    %2024 = vmatpush1.msra.mxu0 0.0
    %2025 = vmatprep.subr.mxu0 0.0
    %2026 = vmatpush1.msra.mxu0 0.0
    %2027 = vmatprep.subr.mxu0 0.0
    %2028 = vmatpush1.msra.mxu0 0.0
    %2029 = vmatprep.subr.mxu0 0.0
    %2030 = vmatpush1.msra.mxu0 0.0
    %2031 = vmatprep.subr.mxu0 0.0
    %2032 = vmatpush1.msra.mxu0 0.0
    %2033 = vmatprep.subr.mxu0 0.0
    %2034 = vmatpush1.msra.mxu0 0.0
    %2035 = vmatprep.subr.mxu0 0.0
    %2036 = vmatpush1.msra.mxu0 0.0
    %2037 = vmatprep.subr.mxu0 0.0
    %2038 = vmatpush1.msra.mxu0 0.0
    %2039 = vmatprep.subr.mxu0 0.0
    %2040 = vmatpush1.msra.mxu0 0.0
    %2041 = vmatprep.subr.mxu0 0.0
    %2042 = vmatpush1.msra.mxu0 0.0
    %2043 = vmatprep.subr.mxu0 0.0
    %2044 = vmatpush1.msra.mxu0 0.0
    %2045 = vmatprep.mubr.f32.mxu0 0.0
    %2046 = vmatmul.mubr.f32.gmra.mrb[0].mxu0 %v1934
    %v2047 = vpop.f32.mrb[0].mxu0
    %v2048 = vadd.f32 0.0, %v2047
    %v2049 = vpop.f32.mrb[0].mxu0
    %2050 = vmatprep.mubr.f32.mxu0 0.0
    %2051 = vmatmul.mubr.f32.gmra.mrb[0].mxu0 %v1937
    %v2052 = vpop.f32.mrb[0].mxu0
    %v2053 = vadd.f32 0.0, %v2052
    %v2054 = vpop.f32.mrb[0].mxu0
    %2055 = vmatprep.mubr.f32.mxu0 0.0
    %2056 = vmatmul.mubr.f32.gmra.mrb[0].mxu0 %v1940
    %v2057 = vpop.f32.mrb[0].mxu0
    %v2058 = vadd.f32 0.0, %v2057
    %v2059 = vpop.f32.mrb[0].mxu0
    %2060 = vmatprep.mubr.f32.mxu0 0.0
    %2061 = vmatmul.mubr.f32.gmra.mrb[0].mxu0 %v1943
    %v2062 = vpop.f32.mrb[0].mxu0
    %v2063 = vadd.f32 0.0, %v2062
    %v2064 = vpop.f32.mrb[0].mxu0
    %2065 = vmatprep.mubr.f32.mxu0 0.0
    %2066 = vmatmul.mubr.f32.gmra.mrb[0].mxu0 %v1946
    %v2067 = vpop.f32.mrb[0].mxu0
    %v2068 = vadd.f32 0.0, %v2067
    %v2069 = vpop.f32.mrb[0].mxu0
    %2070 = vmatprep.mubr.f32.mxu0 0.0
    %2071 = vmatmul.mubr.f32.gmra.mrb[0].mxu0 %v1949
    %v2072 = vpop.f32.mrb[0].mxu0
    %v2073 = vadd.f32 0.0, %v2072
    %v2074 = vpop.f32.mrb[0].mxu0
    %2075 = vmatprep.mubr.f32.mxu0 0.0
    %2076 = vmatmul.mubr.f32.gmra.mrb[0].mxu0 %v1952
    %v2077 = vpop.f32.mrb[0].mxu0
    %v2078 = vadd.f32 0.0, %v2077
    %v2079 = vpop.f32.mrb[0].mxu0
    %2080 = vmatprep.mubr.f32.mxu0 0.0
    %2081 = vmatmul.mubr.f32.gmra.mrb[0].mxu0 %v1955
    %v2082 = vpop.f32.mrb[0].mxu0
    %v2083 = vadd.f32 0.0, %v2082
    %v2084 = vpop.f32.mrb[0].mxu0
    %2085 = vmatprep.mubr.f32.mxu0 0.0
    %2086 = vmatmul.mubr.f32.gmra.mrb[0].mxu0 %v1958
    %v2087 = vpop.f32.mrb[0].mxu0
    %v2088 = vadd.f32 0.0, %v2087
    %v2089 = vpop.f32.mrb[0].mxu0
    %2090 = vmatprep.mubr.f32.mxu0 0.0
    %2091 = vmatmul.mubr.f32.gmra.mrb[0].mxu0 %v1961
    %v2092 = vpop.f32.mrb[0].mxu0
    %v2093 = vadd.f32 0.0, %v2092
    %v2094 = vpop.f32.mrb[0].mxu0
    %2095 = vmatprep.mubr.f32.mxu0 0.0
    %2096 = vmatmul.mubr.f32.gmra.mrb[0].mxu0 %v1964
    %v2097 = vpop.f32.mrb[0].mxu0
    %v2098 = vadd.f32 0.0, %v2097
    %v2099 = vpop.f32.mrb[0].mxu0
    %2100 = vmatprep.mubr.f32.mxu0 0.0
    %2101 = vmatmul.mubr.f32.gmra.mrb[0].mxu0 %v1967
    %v2102 = vpop.f32.mrb[0].mxu0
    %v2103 = vadd.f32 0.0, %v2102
    %v2104 = vpop.f32.mrb[0].mxu0
    %2105 = vmatprep.mubr.f32.mxu0 0.0
    %2106 = vmatmul.mubr.f32.gmra.mrb[0].mxu0 %v1970
    %v2107 = vpop.f32.mrb[0].mxu0
    %v2108 = vadd.f32 0.0, %v2107
    %v2109 = vpop.f32.mrb[0].mxu0
    %2110 = vmatprep.mubr.f32.mxu0 0.0
    %2111 = vmatmul.mubr.f32.gmra.mrb[0].mxu0 %v1973
    %v2112 = vpop.f32.mrb[0].mxu0
    %v2113 = vadd.f32 0.0, %v2112
    %v2114 = vpop.f32.mrb[0].mxu0
    %2115 = vmatprep.mubr.f32.mxu0 0.0
    %2116 = vmatmul.mubr.f32.gmra.mrb[0].mxu0 %v1976
    %v2117 = vpop.f32.mrb[0].mxu0
    %v2118 = vadd.f32 0.0, %v2117
    %v2119 = vpop.f32.mrb[0].mxu0
    %2120 = vmatprep.mubr.f32.mxu0 0.0
    %2121 = vmatmul.mubr.f32.gmra.mrb[0].mxu0 %v1979
    %v2122 = vpop.f32.mrb[0].mxu0
    %v2123 = vadd.f32 0.0, %v2122
    %v2124 = vpop.f32.mrb[0].mxu0
    %2125 = vdwg.mxu0
    %v2126 = vadd.f32 %v1446, %v2048
    %v2127 = vadd.f32 %v1447, %v2053
    %v2128 = vadd.f32 %v1448, %v2058
    %v2129 = vadd.f32 %v1449, %v2063
    %v2130 = vadd.f32 %v1450, %v2068
    %v2131 = vadd.f32 %v1451, %v2073
    %v2132 = vadd.f32 %v1452, %v2078
    %v2133 = vadd.f32 %v1453, %v2083
    %v2134 = vadd.f32 %v1454, %v2088
    %v2135 = vadd.f32 %v1455, %v2093
    %v2136 = vadd.f32 %v1456, %v2098
    %v2137 = vadd.f32 %v1457, %v2103
    %v2138 = vadd.f32 %v1458, %v2108
    %v2139 = vadd.f32 %v1459, %v2113
    %v2140 = vadd.f32 %v1460, %v2118
    %v2141 = vadd.f32 %v1461, %v2123
    %s2142 = scalar_lea.vmem [#allocation7], 2
    %v2143 = vld [vmem:[%s2142] sm:$0x1]
    %v2145 = vlaneseq
    %v2146 = vshrl.u32 %v2145, 7
    %v2147 = vsub.s32 0, %v2146
    %v2148 = vrot.slane %v2143, %v2147
    %v2150 = vadd.f32 %v2126, %v2148
    %v2151 = vadd.f32 %v2127, %v2148
    %v2152 = vadd.f32 %v2128, %v2148
    %v2153 = vadd.f32 %v2129, %v2148
    %v2154 = vadd.f32 %v2130, %v2148
    %v2155 = vadd.f32 %v2131, %v2148
    %v2156 = vadd.f32 %v2132, %v2148
    %v2157 = vadd.f32 %v2133, %v2148
    %v2158 = vadd.f32 %v2134, %v2148
    %v2159 = vadd.f32 %v2135, %v2148
    %v2160 = vadd.f32 %v2136, %v2148
    %v2161 = vadd.f32 %v2137, %v2148
    %v2162 = vadd.f32 %v2138, %v2148
    %v2163 = vadd.f32 %v2139, %v2148
    %v2164 = vadd.f32 %v2140, %v2148
    %v2165 = vadd.f32 %v2141, %v2148
    %v2166 = vadd.f32 %v1462, %v1912
    %v2167 = vadd.f32 %v1463, %v1913
    %v2168 = vadd.f32 %v1464, %v1914
    %v2169 = vadd.f32 %v1465, %v1915
    %v2170 = vadd.f32 %v1466, %v1916
    %v2171 = vadd.f32 %v1467, %v1917
    %v2172 = vadd.f32 %v1468, %v1918
    %v2173 = vadd.f32 %v1469, %v1919
    %v2174 = vadd.f32 %v1470, %v1920
    %v2175 = vadd.f32 %v1471, %v1921
    %v2176 = vadd.f32 %v1472, %v1922
    %v2177 = vadd.f32 %v1473, %v1923
    %v2178 = vadd.f32 %v1474, %v1924
    %v2179 = vadd.f32 %v1475, %v1925
    %v2180 = vadd.f32 %v1476, %v1926
    %v2181 = vadd.f32 %v1477, %v1927
    %vm2182 = vcmp.lt.s32.totalorder %v104, 64
    %vm2183 = vcmp.lt.s32.totalorder %v105, 64
    %vm2184 = vcmp.lt.s32.totalorder %v106, 64
    %vm2185 = vcmp.lt.s32.totalorder %v107, 64
    %vm2186 = vcmp.lt.s32.totalorder %v108, 64
    %vm2187 = vcmp.lt.s32.totalorder %v109, 64
    %vm2188 = vcmp.lt.s32.totalorder %v110, 64
    %vm2189 = vcmp.lt.s32.totalorder %v111, 64
    %vm2190 = vcmp.lt.s32.totalorder %v112, 64
    %vm2191 = vcmp.lt.s32.totalorder %v113, 64
    %vm2192 = vcmp.lt.s32.totalorder %v114, 64
    %vm2193 = vcmp.lt.s32.totalorder %v115, 64
    %vm2194 = vcmp.lt.s32.totalorder %v116, 64
    %vm2195 = vcmp.lt.s32.totalorder %v117, 64
    %vm2196 = vcmp.lt.s32.totalorder %v118, 64
    %vm2197 = vcmp.lt.s32.totalorder %v119, 64
    %v2198 = vsel %vm2182, 0.0, %v2174
    %v2199 = vsel %vm2183, 0.0, %v2175
    %v2200 = vsel %vm2184, 0.0, %v2176
    %v2201 = vsel %vm2185, 0.0, %v2177
    %v2202 = vsel %vm2186, 0.0, %v2178
    %v2203 = vsel %vm2187, 0.0, %v2179
    %v2204 = vsel %vm2188, 0.0, %v2180
    %v2205 = vsel %vm2189, 0.0, %v2181
    %v2206 = vsel %vm2190, 0.0, %v2166
    %v2207 = vsel %vm2191, 0.0, %v2167
    %v2208 = vsel %vm2192, 0.0, %v2168
    %v2209 = vsel %vm2193, 0.0, %v2169
    %v2210 = vsel %vm2194, 0.0, %v2170
    %v2211 = vsel %vm2195, 0.0, %v2171
    %v2212 = vsel %vm2196, 0.0, %v2172
    %v2213 = vsel %vm2197, 0.0, %v2173
    %2230 = vrot.lane.b32.xlu0 %v2198, 32
    %v2231 = vpop.permute.xlu0 %2230
    %2232 = vrot.lane.b32.xlu0 %v2199, 32
    %v2233 = vpop.permute.xlu0 %2232
    %2234 = vrot.lane.b32.xlu0 %v2200, 32
    %v2235 = vpop.permute.xlu0 %2234
    %2236 = vrot.lane.b32.xlu0 %v2201, 32
    %v2237 = vpop.permute.xlu0 %2236
    %2238 = vrot.lane.b32.xlu0 %v2202, 32
    %v2239 = vpop.permute.xlu0 %2238
    %2240 = vrot.lane.b32.xlu0 %v2203, 32
    %v2241 = vpop.permute.xlu0 %2240
    %2242 = vrot.lane.b32.xlu0 %v2204, 32
    %v2243 = vpop.permute.xlu0 %2242
    %2244 = vrot.lane.b32.xlu0 %v2205, 32
    %v2245 = vpop.permute.xlu0 %2244
    %2246 = vrot.lane.b32.xlu0 %v2206, 32
    %v2247 = vpop.permute.xlu0 %2246
    %2248 = vrot.lane.b32.xlu0 %v2207, 32
    %v2249 = vpop.permute.xlu0 %2248
    %2250 = vrot.lane.b32.xlu0 %v2208, 32
    %v2251 = vpop.permute.xlu0 %2250
    %2252 = vrot.lane.b32.xlu0 %v2209, 32
    %v2253 = vpop.permute.xlu0 %2252
    %2254 = vrot.lane.b32.xlu0 %v2210, 32
    %v2255 = vpop.permute.xlu0 %2254
    %2256 = vrot.lane.b32.xlu0 %v2211, 32
    %v2257 = vpop.permute.xlu0 %2256
    %2258 = vrot.lane.b32.xlu0 %v2212, 32
    %v2259 = vpop.permute.xlu0 %2258
    %2260 = vrot.lane.b32.xlu0 %v2213, 32
    %v2261 = vpop.permute.xlu0 %2260
    %v2278 = vsel %vm216, %v2166, %v2231
    %v2279 = vsel %vm216, %v2167, %v2233
    %v2280 = vsel %vm216, %v2168, %v2235
    %v2281 = vsel %vm216, %v2169, %v2237
    %v2282 = vsel %vm216, %v2170, %v2239
    %v2283 = vsel %vm216, %v2171, %v2241
    %v2284 = vsel %vm216, %v2172, %v2243
    %v2285 = vsel %vm216, %v2173, %v2245
    %v2286 = vsel %vm216, %v2174, %v2247
    %v2287 = vsel %vm216, %v2175, %v2249
    %v2288 = vsel %vm216, %v2176, %v2251
    %v2289 = vsel %vm216, %v2177, %v2253
    %v2290 = vsel %vm216, %v2178, %v2255
    %v2291 = vsel %vm216, %v2179, %v2257
    %v2292 = vsel %vm216, %v2180, %v2259
    %v2293 = vsel %vm216, %v2181, %v2261
    %s2294 = scalar_lea.vmem [#allocation3], 192
    %v2295 = vld [vmem:[%s2294] sm:$0xff]
    %v2296 = vld [vmem:[%s2294 + $0x8] sm:$0xff]
    %v2297 = vld [vmem:[%s2294 + $0x10] sm:$0xff]
    %v2298 = vld [vmem:[%s2294 + $0x18] sm:$0xff]
    %v2299 = vld [vmem:[%s2294 + $0x20] sm:$0xff]
    %v2300 = vld [vmem:[%s2294 + $0x28] sm:$0xff]
    %v2301 = vld [vmem:[%s2294 + $0x30] sm:$0xff]
    %v2302 = vld [vmem:[%s2294 + $0x38] sm:$0xff]
    %s2303 = scalar_lea.vmem [#allocation5], 3
    %v2304 = vld [vmem:[%s2303] sm:$0x1]
    %v2306 = vlaneseq
    %v2307 = vshrl.u32 %v2306, 7
    %v2308 = vsub.s32 0, %v2307
    %v2309 = vrot.slane %v2304, %v2308
    %v2312 = vsel %vm248, %v2278, 0
    %v2315 = vsel %vm248, %v2279, 0
    %v2318 = vsel %vm248, %v2280, 0
    %v2321 = vsel %vm248, %v2281, 0
    %v2324 = vsel %vm248, %v2282, 0
    %v2327 = vsel %vm248, %v2283, 0
    %v2330 = vsel %vm248, %v2284, 0
    %v2333 = vsel %vm248, %v2285, 0
    %v2336 = vsel %vm248, %v2286, 0
    %v2339 = vsel %vm248, %v2287, 0
    %v2342 = vsel %vm248, %v2288, 0
    %v2345 = vsel %vm248, %v2289, 0
    %v2348 = vsel %vm248, %v2290, 0
    %v2351 = vsel %vm248, %v2291, 0
    %v2354 = vsel %vm248, %v2292, 0
    %v2357 = vsel %vm248, %v2293, 0
    %2359 = vmatprep.subr.mxu0 0.0
    %2360 = vmatpush1.msra.mxu0 %v2295
    %2361 = vmatprep.subr.mxu0 0.0
    %2362 = vmatpush1.msra.mxu0 %v2296
    %2363 = vmatprep.subr.mxu0 0.0
    %2364 = vmatpush1.msra.mxu0 %v2297
    %2365 = vmatprep.subr.mxu0 0.0
    %2366 = vmatpush1.msra.mxu0 %v2298
    %2367 = vmatprep.subr.mxu0 0.0
    %2368 = vmatpush1.msra.mxu0 %v2299
    %2369 = vmatprep.subr.mxu0 0.0
    %2370 = vmatpush1.msra.mxu0 %v2300
    %2371 = vmatprep.subr.mxu0 0.0
    %2372 = vmatpush1.msra.mxu0 %v2301
    %2373 = vmatprep.subr.mxu0 0.0
    %2374 = vmatpush1.msra.mxu0 %v2302
    %2375 = vmatprep.subr.mxu0 0.0
    %2376 = vmatpush1.msra.mxu0 0.0
    %2377 = vmatprep.subr.mxu0 0.0
    %2378 = vmatpush1.msra.mxu0 0.0
    %2379 = vmatprep.subr.mxu0 0.0
    %2380 = vmatpush1.msra.mxu0 0.0
    %2381 = vmatprep.subr.mxu0 0.0
    %2382 = vmatpush1.msra.mxu0 0.0
    %2383 = vmatprep.subr.mxu0 0.0
    %2384 = vmatpush1.msra.mxu0 0.0
    %2385 = vmatprep.subr.mxu0 0.0
    %2386 = vmatpush1.msra.mxu0 0.0
    %2387 = vmatprep.subr.mxu0 0.0
    %2388 = vmatpush1.msra.mxu0 0.0
    %2389 = vmatprep.subr.mxu0 0.0
    %2390 = vmatpush1.msra.mxu0 0.0
    %2391 = vmatprep.subr.mxu0 0.0
    %2392 = vmatpush1.msra.mxu0 0.0
    %2393 = vmatprep.subr.mxu0 0.0
    %2394 = vmatpush1.msra.mxu0 0.0
    %2395 = vmatprep.subr.mxu0 0.0
    %2396 = vmatpush1.msra.mxu0 0.0
    %2397 = vmatprep.subr.mxu0 0.0
    %2398 = vmatpush1.msra.mxu0 0.0
    %2399 = vmatprep.subr.mxu0 0.0
    %2400 = vmatpush1.msra.mxu0 0.0
    %2401 = vmatprep.subr.mxu0 0.0
    %2402 = vmatpush1.msra.mxu0 0.0
    %2403 = vmatprep.subr.mxu0 0.0
    %2404 = vmatpush1.msra.mxu0 0.0
    %2405 = vmatprep.subr.mxu0 0.0
    %2406 = vmatpush1.msra.mxu0 0.0
    %2407 = vmatprep.subr.mxu0 0.0
    %2408 = vmatpush1.msra.mxu0 0.0
    %2409 = vmatprep.subr.mxu0 0.0
    %2410 = vmatpush1.msra.mxu0 0.0
    %2411 = vmatprep.subr.mxu0 0.0
    %2412 = vmatpush1.msra.mxu0 0.0
    %2413 = vmatprep.subr.mxu0 0.0
    %2414 = vmatpush1.msra.mxu0 0.0
    %2415 = vmatprep.subr.mxu0 0.0
    %2416 = vmatpush1.msra.mxu0 0.0
    %2417 = vmatprep.subr.mxu0 0.0
    %2418 = vmatpush1.msra.mxu0 0.0
    %2419 = vmatprep.subr.mxu0 0.0
    %2420 = vmatpush1.msra.mxu0 0.0
    %2421 = vmatprep.subr.mxu0 0.0
    %2422 = vmatpush1.msra.mxu0 0.0
    %2423 = vmatprep.mubr.f32.mxu0 0.0
    %2424 = vmatmul.mubr.f32.gmra.mrb[0].mxu0 %v2312
    %v2425 = vpop.f32.mrb[0].mxu0
    %v2426 = vadd.f32 %v2309, %v2425
    %v2427 = vpop.f32.mrb[0].mxu0
    %2428 = vmatprep.mubr.f32.mxu0 0.0
    %2429 = vmatmul.mubr.f32.gmra.mrb[0].mxu0 %v2315
    %v2430 = vpop.f32.mrb[0].mxu0
    %v2431 = vadd.f32 %v2309, %v2430
    %v2432 = vpop.f32.mrb[0].mxu0
    %2433 = vmatprep.mubr.f32.mxu0 0.0
    %2434 = vmatmul.mubr.f32.gmra.mrb[0].mxu0 %v2318
    %v2435 = vpop.f32.mrb[0].mxu0
    %v2436 = vadd.f32 %v2309, %v2435
    %v2437 = vpop.f32.mrb[0].mxu0
    %2438 = vmatprep.mubr.f32.mxu0 0.0
    %2439 = vmatmul.mubr.f32.gmra.mrb[0].mxu0 %v2321
    %v2440 = vpop.f32.mrb[0].mxu0
    %v2441 = vadd.f32 %v2309, %v2440
    %v2442 = vpop.f32.mrb[0].mxu0
    %2443 = vmatprep.mubr.f32.mxu0 0.0
    %2444 = vmatmul.mubr.f32.gmra.mrb[0].mxu0 %v2324
    %v2445 = vpop.f32.mrb[0].mxu0
    %v2446 = vadd.f32 %v2309, %v2445
    %v2447 = vpop.f32.mrb[0].mxu0
    %2448 = vmatprep.mubr.f32.mxu0 0.0
    %2449 = vmatmul.mubr.f32.gmra.mrb[0].mxu0 %v2327
    %v2450 = vpop.f32.mrb[0].mxu0
    %v2451 = vadd.f32 %v2309, %v2450
    %v2452 = vpop.f32.mrb[0].mxu0
    %2453 = vmatprep.mubr.f32.mxu0 0.0
    %2454 = vmatmul.mubr.f32.gmra.mrb[0].mxu0 %v2330
    %v2455 = vpop.f32.mrb[0].mxu0
    %v2456 = vadd.f32 %v2309, %v2455
    %v2457 = vpop.f32.mrb[0].mxu0
    %2458 = vmatprep.mubr.f32.mxu0 0.0
    %2459 = vmatmul.mubr.f32.gmra.mrb[0].mxu0 %v2333
    %v2460 = vpop.f32.mrb[0].mxu0
    %v2461 = vadd.f32 %v2309, %v2460
    %v2462 = vpop.f32.mrb[0].mxu0
    %2463 = vmatprep.mubr.f32.mxu0 0.0
    %2464 = vmatmul.mubr.f32.gmra.mrb[0].mxu0 %v2336
    %v2465 = vpop.f32.mrb[0].mxu0
    %v2466 = vadd.f32 %v2309, %v2465
    %v2467 = vpop.f32.mrb[0].mxu0
    %2468 = vmatprep.mubr.f32.mxu0 0.0
    %2469 = vmatmul.mubr.f32.gmra.mrb[0].mxu0 %v2339
    %v2470 = vpop.f32.mrb[0].mxu0
    %v2471 = vadd.f32 %v2309, %v2470
    %v2472 = vpop.f32.mrb[0].mxu0
    %2473 = vmatprep.mubr.f32.mxu0 0.0
    %2474 = vmatmul.mubr.f32.gmra.mrb[0].mxu0 %v2342
    %v2475 = vpop.f32.mrb[0].mxu0
    %v2476 = vadd.f32 %v2309, %v2475
    %v2477 = vpop.f32.mrb[0].mxu0
    %2478 = vmatprep.mubr.f32.mxu0 0.0
    %2479 = vmatmul.mubr.f32.gmra.mrb[0].mxu0 %v2345
    %v2480 = vpop.f32.mrb[0].mxu0
    %v2481 = vadd.f32 %v2309, %v2480
    %v2482 = vpop.f32.mrb[0].mxu0
    %2483 = vmatprep.mubr.f32.mxu0 0.0
    %2484 = vmatmul.mubr.f32.gmra.mrb[0].mxu0 %v2348
    %v2485 = vpop.f32.mrb[0].mxu0
    %v2486 = vadd.f32 %v2309, %v2485
    %v2487 = vpop.f32.mrb[0].mxu0
    %2488 = vmatprep.mubr.f32.mxu0 0.0
    %2489 = vmatmul.mubr.f32.gmra.mrb[0].mxu0 %v2351
    %v2490 = vpop.f32.mrb[0].mxu0
    %v2491 = vadd.f32 %v2309, %v2490
    %v2492 = vpop.f32.mrb[0].mxu0
    %2493 = vmatprep.mubr.f32.mxu0 0.0
    %2494 = vmatmul.mubr.f32.gmra.mrb[0].mxu0 %v2354
    %v2495 = vpop.f32.mrb[0].mxu0
    %v2496 = vadd.f32 %v2309, %v2495
    %v2497 = vpop.f32.mrb[0].mxu0
    %2498 = vmatprep.mubr.f32.mxu0 0.0
    %2499 = vmatmul.mubr.f32.gmra.mrb[0].mxu0 %v2357
    %v2500 = vpop.f32.mrb[0].mxu0
    %v2501 = vadd.f32 %v2309, %v2500
    %v2502 = vpop.f32.mrb[0].mxu0
    %2503 = vdwg.mxu0
    %v2504 = vtanh.pop %v2426
    %v2505 = vtanh.pop %v2431
    %v2506 = vtanh.pop %v2436
    %v2507 = vtanh.pop %v2441
    %v2508 = vtanh.pop %v2446
    %v2509 = vtanh.pop %v2451
    %v2510 = vtanh.pop %v2456
    %v2511 = vtanh.pop %v2461
    %v2512 = vtanh.pop %v2466
    %v2513 = vtanh.pop %v2471
    %v2514 = vtanh.pop %v2476
    %v2515 = vtanh.pop %v2481
    %v2516 = vtanh.pop %v2486
    %v2517 = vtanh.pop %v2491
    %v2518 = vtanh.pop %v2496
    %v2519 = vtanh.pop %v2501
    %v2520 = vmul.f32 %v2504, 0.5
    %v2521 = vmul.f32 %v2505, 0.5
    %v2522 = vmul.f32 %v2506, 0.5
    %v2523 = vmul.f32 %v2507, 0.5
    %v2524 = vmul.f32 %v2508, 0.5
    %v2525 = vmul.f32 %v2509, 0.5
    %v2526 = vmul.f32 %v2510, 0.5
    %v2527 = vmul.f32 %v2511, 0.5
    %v2528 = vmul.f32 %v2512, 0.5
    %v2529 = vmul.f32 %v2513, 0.5
    %v2530 = vmul.f32 %v2514, 0.5
    %v2531 = vmul.f32 %v2515, 0.5
    %v2532 = vmul.f32 %v2516, 0.5
    %v2533 = vmul.f32 %v2517, 0.5
    %v2534 = vmul.f32 %v2518, 0.5
    %v2535 = vmul.f32 %v2519, 0.5
    %v2536 = vadd.f32 %v2520, 0.5
    %v2537 = vadd.f32 %v2521, 0.5
    %v2538 = vadd.f32 %v2522, 0.5
    %v2539 = vadd.f32 %v2523, 0.5
    %v2540 = vadd.f32 %v2524, 0.5
    %v2541 = vadd.f32 %v2525, 0.5
    %v2542 = vadd.f32 %v2526, 0.5
    %v2543 = vadd.f32 %v2527, 0.5
    %v2544 = vadd.f32 %v2528, 0.5
    %v2545 = vadd.f32 %v2529, 0.5
    %v2546 = vadd.f32 %v2530, 0.5
    %v2547 = vadd.f32 %v2531, 0.5
    %v2548 = vadd.f32 %v2532, 0.5
    %v2549 = vadd.f32 %v2533, 0.5
    %v2550 = vadd.f32 %v2534, 0.5
    %v2551 = vadd.f32 %v2535, 0.5
    %2568 = vrot.lane.b32.xlu0 %v2536, 96
    %v2569 = vpop.permute.xlu0 %2568
    %2570 = vrot.lane.b32.xlu0 %v2537, 96
    %v2571 = vpop.permute.xlu0 %2570
    %2572 = vrot.lane.b32.xlu0 %v2538, 96
    %v2573 = vpop.permute.xlu0 %2572
    %2574 = vrot.lane.b32.xlu0 %v2539, 96
    %v2575 = vpop.permute.xlu0 %2574
    %2576 = vrot.lane.b32.xlu0 %v2540, 96
    %v2577 = vpop.permute.xlu0 %2576
    %2578 = vrot.lane.b32.xlu0 %v2541, 96
    %v2579 = vpop.permute.xlu0 %2578
    %2580 = vrot.lane.b32.xlu0 %v2542, 96
    %v2581 = vpop.permute.xlu0 %2580
    %2582 = vrot.lane.b32.xlu0 %v2543, 96
    %v2583 = vpop.permute.xlu0 %2582
    %2584 = vrot.lane.b32.xlu0 %v2544, 96
    %v2585 = vpop.permute.xlu0 %2584
    %2586 = vrot.lane.b32.xlu0 %v2545, 96
    %v2587 = vpop.permute.xlu0 %2586
    %2588 = vrot.lane.b32.xlu0 %v2546, 96
    %v2589 = vpop.permute.xlu0 %2588
    %2590 = vrot.lane.b32.xlu0 %v2547, 96
    %v2591 = vpop.permute.xlu0 %2590
    %2592 = vrot.lane.b32.xlu0 %v2548, 96
    %v2593 = vpop.permute.xlu0 %2592
    %2594 = vrot.lane.b32.xlu0 %v2549, 96
    %v2595 = vpop.permute.xlu0 %2594
    %2596 = vrot.lane.b32.xlu0 %v2550, 96
    %v2597 = vpop.permute.xlu0 %2596
    %2598 = vrot.lane.b32.xlu0 %v2551, 96
    %v2599 = vpop.permute.xlu0 %2598
    %v2616 = vmul.f32 %v2504, %v2569
    %v2617 = vmul.f32 %v2505, %v2571
    %v2618 = vmul.f32 %v2506, %v2573
    %v2619 = vmul.f32 %v2507, %v2575
    %v2620 = vmul.f32 %v2508, %v2577
    %v2621 = vmul.f32 %v2509, %v2579
    %v2622 = vmul.f32 %v2510, %v2581
    %v2623 = vmul.f32 %v2511, %v2583
    %v2624 = vmul.f32 %v2512, %v2585
    %v2625 = vmul.f32 %v2513, %v2587
    %v2626 = vmul.f32 %v2514, %v2589
    %v2627 = vmul.f32 %v2515, %v2591
    %v2628 = vmul.f32 %v2516, %v2593
    %v2629 = vmul.f32 %v2517, %v2595
    %v2630 = vmul.f32 %v2518, %v2597
    %v2631 = vmul.f32 %v2519, %v2599
    %s2632 = scalar_lea.vmem %s3, 96
    %v2633 = vld [vmem:[%s2632] sm:$0xff]
    %v2634 = vld [vmem:[%s2632 + $0x8] sm:$0xff]
    %v2635 = vld [vmem:[%s2632 + $0x10] sm:$0xff]
    %v2636 = vld [vmem:[%s2632 + $0x18] sm:$0xff]
    %v2638 = vsel %vm216, %v2616, 0
    %v2641 = vsel %vm216, %v2617, 0
    %v2644 = vsel %vm216, %v2618, 0
    %v2647 = vsel %vm216, %v2619, 0
    %v2650 = vsel %vm216, %v2620, 0
    %v2653 = vsel %vm216, %v2621, 0
    %v2656 = vsel %vm216, %v2622, 0
    %v2659 = vsel %vm216, %v2623, 0
    %v2662 = vsel %vm216, %v2624, 0
    %v2665 = vsel %vm216, %v2625, 0
    %v2668 = vsel %vm216, %v2626, 0
    %v2671 = vsel %vm216, %v2627, 0
    %v2674 = vsel %vm216, %v2628, 0
    %v2677 = vsel %vm216, %v2629, 0
    %v2680 = vsel %vm216, %v2630, 0
    %v2683 = vsel %vm216, %v2631, 0
    %2685 = vmatprep.subr.mxu0 0.0
    %2686 = vmatpush1.msra.mxu0 %v2633
    %2687 = vmatprep.subr.mxu0 0.0
    %2688 = vmatpush1.msra.mxu0 %v2634
    %2689 = vmatprep.subr.mxu0 0.0
    %2690 = vmatpush1.msra.mxu0 %v2635
    %2691 = vmatprep.subr.mxu0 0.0
    %2692 = vmatpush1.msra.mxu0 %v2636
    %2693 = vmatprep.subr.mxu0 0.0
    %2694 = vmatpush1.msra.mxu0 0.0
    %2695 = vmatprep.subr.mxu0 0.0
    %2696 = vmatpush1.msra.mxu0 0.0
    %2697 = vmatprep.subr.mxu0 0.0
    %2698 = vmatpush1.msra.mxu0 0.0
    %2699 = vmatprep.subr.mxu0 0.0
    %2700 = vmatpush1.msra.mxu0 0.0
    %2701 = vmatprep.subr.mxu0 0.0
    %2702 = vmatpush1.msra.mxu0 0.0
    %2703 = vmatprep.subr.mxu0 0.0
    %2704 = vmatpush1.msra.mxu0 0.0
    %2705 = vmatprep.subr.mxu0 0.0
    %2706 = vmatpush1.msra.mxu0 0.0
    %2707 = vmatprep.subr.mxu0 0.0
    %2708 = vmatpush1.msra.mxu0 0.0
    %2709 = vmatprep.subr.mxu0 0.0
    %2710 = vmatpush1.msra.mxu0 0.0
    %2711 = vmatprep.subr.mxu0 0.0
    %2712 = vmatpush1.msra.mxu0 0.0
    %2713 = vmatprep.subr.mxu0 0.0
    %2714 = vmatpush1.msra.mxu0 0.0
    %2715 = vmatprep.subr.mxu0 0.0
    %2716 = vmatpush1.msra.mxu0 0.0
    %2717 = vmatprep.subr.mxu0 0.0
    %2718 = vmatpush1.msra.mxu0 0.0
    %2719 = vmatprep.subr.mxu0 0.0
    %2720 = vmatpush1.msra.mxu0 0.0
    %2721 = vmatprep.subr.mxu0 0.0
    %2722 = vmatpush1.msra.mxu0 0.0
    %2723 = vmatprep.subr.mxu0 0.0
    %2724 = vmatpush1.msra.mxu0 0.0
    %2725 = vmatprep.subr.mxu0 0.0
    %2726 = vmatpush1.msra.mxu0 0.0
    %2727 = vmatprep.subr.mxu0 0.0
    %2728 = vmatpush1.msra.mxu0 0.0
    %2729 = vmatprep.subr.mxu0 0.0
    %2730 = vmatpush1.msra.mxu0 0.0
    %2731 = vmatprep.subr.mxu0 0.0
    %2732 = vmatpush1.msra.mxu0 0.0
    %2733 = vmatprep.subr.mxu0 0.0
    %2734 = vmatpush1.msra.mxu0 0.0
    %2735 = vmatprep.subr.mxu0 0.0
    %2736 = vmatpush1.msra.mxu0 0.0
    %2737 = vmatprep.subr.mxu0 0.0
    %2738 = vmatpush1.msra.mxu0 0.0
    %2739 = vmatprep.subr.mxu0 0.0
    %2740 = vmatpush1.msra.mxu0 0.0
    %2741 = vmatprep.subr.mxu0 0.0
    %2742 = vmatpush1.msra.mxu0 0.0
    %2743 = vmatprep.subr.mxu0 0.0
    %2744 = vmatpush1.msra.mxu0 0.0
    %2745 = vmatprep.subr.mxu0 0.0
    %2746 = vmatpush1.msra.mxu0 0.0
    %2747 = vmatprep.subr.mxu0 0.0
    %2748 = vmatpush1.msra.mxu0 0.0
    %2749 = vmatprep.mubr.f32.mxu0 0.0
    %2750 = vmatmul.mubr.f32.gmra.mrb[0].mxu0 %v2638
    %v2751 = vpop.f32.mrb[0].mxu0
    %v2752 = vadd.f32 0.0, %v2751
    %v2753 = vpop.f32.mrb[0].mxu0
    %2754 = vmatprep.mubr.f32.mxu0 0.0
    %2755 = vmatmul.mubr.f32.gmra.mrb[0].mxu0 %v2641
    %v2756 = vpop.f32.mrb[0].mxu0
    %v2757 = vadd.f32 0.0, %v2756
    %v2758 = vpop.f32.mrb[0].mxu0
    %2759 = vmatprep.mubr.f32.mxu0 0.0
    %2760 = vmatmul.mubr.f32.gmra.mrb[0].mxu0 %v2644
    %v2761 = vpop.f32.mrb[0].mxu0
    %v2762 = vadd.f32 0.0, %v2761
    %v2763 = vpop.f32.mrb[0].mxu0
    %2764 = vmatprep.mubr.f32.mxu0 0.0
    %2765 = vmatmul.mubr.f32.gmra.mrb[0].mxu0 %v2647
    %v2766 = vpop.f32.mrb[0].mxu0
    %v2767 = vadd.f32 0.0, %v2766
    %v2768 = vpop.f32.mrb[0].mxu0
    %2769 = vmatprep.mubr.f32.mxu0 0.0
    %2770 = vmatmul.mubr.f32.gmra.mrb[0].mxu0 %v2650
    %v2771 = vpop.f32.mrb[0].mxu0
    %v2772 = vadd.f32 0.0, %v2771
    %v2773 = vpop.f32.mrb[0].mxu0
    %2774 = vmatprep.mubr.f32.mxu0 0.0
    %2775 = vmatmul.mubr.f32.gmra.mrb[0].mxu0 %v2653
    %v2776 = vpop.f32.mrb[0].mxu0
    %v2777 = vadd.f32 0.0, %v2776
    %v2778 = vpop.f32.mrb[0].mxu0
    %2779 = vmatprep.mubr.f32.mxu0 0.0
    %2780 = vmatmul.mubr.f32.gmra.mrb[0].mxu0 %v2656
    %v2781 = vpop.f32.mrb[0].mxu0
    %v2782 = vadd.f32 0.0, %v2781
    %v2783 = vpop.f32.mrb[0].mxu0
    %2784 = vmatprep.mubr.f32.mxu0 0.0
    %2785 = vmatmul.mubr.f32.gmra.mrb[0].mxu0 %v2659
    %v2786 = vpop.f32.mrb[0].mxu0
    %v2787 = vadd.f32 0.0, %v2786
    %v2788 = vpop.f32.mrb[0].mxu0
    %2789 = vmatprep.mubr.f32.mxu0 0.0
    %2790 = vmatmul.mubr.f32.gmra.mrb[0].mxu0 %v2662
    %v2791 = vpop.f32.mrb[0].mxu0
    %v2792 = vadd.f32 0.0, %v2791
    %v2793 = vpop.f32.mrb[0].mxu0
    %2794 = vmatprep.mubr.f32.mxu0 0.0
    %2795 = vmatmul.mubr.f32.gmra.mrb[0].mxu0 %v2665
    %v2796 = vpop.f32.mrb[0].mxu0
    %v2797 = vadd.f32 0.0, %v2796
    %v2798 = vpop.f32.mrb[0].mxu0
    %2799 = vmatprep.mubr.f32.mxu0 0.0
    %2800 = vmatmul.mubr.f32.gmra.mrb[0].mxu0 %v2668
    %v2801 = vpop.f32.mrb[0].mxu0
    %v2802 = vadd.f32 0.0, %v2801
    %v2803 = vpop.f32.mrb[0].mxu0
    %2804 = vmatprep.mubr.f32.mxu0 0.0
    %2805 = vmatmul.mubr.f32.gmra.mrb[0].mxu0 %v2671
    %v2806 = vpop.f32.mrb[0].mxu0
    %v2807 = vadd.f32 0.0, %v2806
    %v2808 = vpop.f32.mrb[0].mxu0
    %2809 = vmatprep.mubr.f32.mxu0 0.0
    %2810 = vmatmul.mubr.f32.gmra.mrb[0].mxu0 %v2674
    %v2811 = vpop.f32.mrb[0].mxu0
    %v2812 = vadd.f32 0.0, %v2811
    %v2813 = vpop.f32.mrb[0].mxu0
    %2814 = vmatprep.mubr.f32.mxu0 0.0
    %2815 = vmatmul.mubr.f32.gmra.mrb[0].mxu0 %v2677
    %v2816 = vpop.f32.mrb[0].mxu0
    %v2817 = vadd.f32 0.0, %v2816
    %v2818 = vpop.f32.mrb[0].mxu0
    %2819 = vmatprep.mubr.f32.mxu0 0.0
    %2820 = vmatmul.mubr.f32.gmra.mrb[0].mxu0 %v2680
    %v2821 = vpop.f32.mrb[0].mxu0
    %v2822 = vadd.f32 0.0, %v2821
    %v2823 = vpop.f32.mrb[0].mxu0
    %2824 = vmatprep.mubr.f32.mxu0 0.0
    %2825 = vmatmul.mubr.f32.gmra.mrb[0].mxu0 %v2683
    %v2826 = vpop.f32.mrb[0].mxu0
    %v2827 = vadd.f32 0.0, %v2826
    %v2828 = vpop.f32.mrb[0].mxu0
    %2829 = vdwg.mxu0
    %v2830 = vadd.f32 %v2150, %v2752
    %v2831 = vadd.f32 %v2151, %v2757
    %v2832 = vadd.f32 %v2152, %v2762
    %v2833 = vadd.f32 %v2153, %v2767
    %v2834 = vadd.f32 %v2154, %v2772
    %v2835 = vadd.f32 %v2155, %v2777
    %v2836 = vadd.f32 %v2156, %v2782
    %v2837 = vadd.f32 %v2157, %v2787
    %v2838 = vadd.f32 %v2158, %v2792
    %v2839 = vadd.f32 %v2159, %v2797
    %v2840 = vadd.f32 %v2160, %v2802
    %v2841 = vadd.f32 %v2161, %v2807
    %v2842 = vadd.f32 %v2162, %v2812
    %v2843 = vadd.f32 %v2163, %v2817
    %v2844 = vadd.f32 %v2164, %v2822
    %v2845 = vadd.f32 %v2165, %v2827
    %s2846 = scalar_lea.vmem [#allocation7], 3
    %v2847 = vld [vmem:[%s2846] sm:$0x1]
    %v2849 = vlaneseq
    %v2850 = vshrl.u32 %v2849, 7
    %v2851 = vsub.s32 0, %v2850
    %v2852 = vrot.slane %v2847, %v2851
    %v2854 = vadd.f32 %v2830, %v2852
    %v2855 = vadd.f32 %v2831, %v2852
    %v2856 = vadd.f32 %v2832, %v2852
    %v2857 = vadd.f32 %v2833, %v2852
    %v2858 = vadd.f32 %v2834, %v2852
    %v2859 = vadd.f32 %v2835, %v2852
    %v2860 = vadd.f32 %v2836, %v2852
    %v2861 = vadd.f32 %v2837, %v2852
    %v2862 = vadd.f32 %v2838, %v2852
    %v2863 = vadd.f32 %v2839, %v2852
    %v2864 = vadd.f32 %v2840, %v2852
    %v2865 = vadd.f32 %v2841, %v2852
    %v2866 = vadd.f32 %v2842, %v2852
    %v2867 = vadd.f32 %v2843, %v2852
    %v2868 = vadd.f32 %v2844, %v2852
    %v2869 = vadd.f32 %v2845, %v2852
    %v2870 = vld [vmem:[%s5] sm:$0xff]
    %v2871 = vld [vmem:[%s5 + $0x8] sm:$0xff]
    %v2872 = vld [vmem:[%s5 + $0x10] sm:$0xff]
    %v2873 = vld [vmem:[%s5 + $0x18] sm:$0xff]
    %s2874 = scalar_lea.vmem %s5, 32
    %v2875 = vld [vmem:[%s2874] sm:$0xff]
    %v2876 = vld [vmem:[%s2874 + $0x8] sm:$0xff]
    %v2877 = vld [vmem:[%s2874 + $0x10] sm:$0xff]
    %v2878 = vld [vmem:[%s2874 + $0x18] sm:$0xff]
    %v2879 = vld [vmem:[#allocation8] sm:$0x1]
    %s2880 = scalar_lea.vmem [#allocation8], 1
    %v2881 = vld [vmem:[%s2880] sm:$0x1]
    %v2883 = vlaneseq
    %v2884 = vshrl.u32 %v2883, 7
    %v2885 = vsub.s32 0, %v2884
    %v2886 = vrot.slane %v2879, %v2885
    %v2889 = vsel %vm216, %v2854, 0
    %v2892 = vsel %vm216, %v2855, 0
    %v2895 = vsel %vm216, %v2856, 0
    %v2898 = vsel %vm216, %v2857, 0
    %v2901 = vsel %vm216, %v2858, 0
    %v2904 = vsel %vm216, %v2859, 0
    %v2907 = vsel %vm216, %v2860, 0
    %v2910 = vsel %vm216, %v2861, 0
    %v2913 = vsel %vm216, %v2862, 0
    %v2916 = vsel %vm216, %v2863, 0
    %v2919 = vsel %vm216, %v2864, 0
    %v2922 = vsel %vm216, %v2865, 0
    %v2925 = vsel %vm216, %v2866, 0
    %v2928 = vsel %vm216, %v2867, 0
    %v2931 = vsel %vm216, %v2868, 0
    %v2934 = vsel %vm216, %v2869, 0
    %2936 = vmatprep.subr.mxu0 0.0
    %2937 = vmatpush1.msra.mxu0 %v2870
    %2938 = vmatprep.subr.mxu0 0.0
    %2939 = vmatpush1.msra.mxu0 %v2871
    %2940 = vmatprep.subr.mxu0 0.0
    %2941 = vmatpush1.msra.mxu0 %v2872
    %2942 = vmatprep.subr.mxu0 0.0
    %2943 = vmatpush1.msra.mxu0 %v2873
    %2944 = vmatprep.subr.mxu0 0.0
    %2945 = vmatpush1.msra.mxu0 0.0
    %2946 = vmatprep.subr.mxu0 0.0
    %2947 = vmatpush1.msra.mxu0 0.0
    %2948 = vmatprep.subr.mxu0 0.0
    %2949 = vmatpush1.msra.mxu0 0.0
    %2950 = vmatprep.subr.mxu0 0.0
    %2951 = vmatpush1.msra.mxu0 0.0
    %2952 = vmatprep.subr.mxu0 0.0
    %2953 = vmatpush1.msra.mxu0 0.0
    %2954 = vmatprep.subr.mxu0 0.0
    %2955 = vmatpush1.msra.mxu0 0.0
    %2956 = vmatprep.subr.mxu0 0.0
    %2957 = vmatpush1.msra.mxu0 0.0
    %2958 = vmatprep.subr.mxu0 0.0
    %2959 = vmatpush1.msra.mxu0 0.0
    %2960 = vmatprep.subr.mxu0 0.0
    %2961 = vmatpush1.msra.mxu0 0.0
    %2962 = vmatprep.subr.mxu0 0.0
    %2963 = vmatpush1.msra.mxu0 0.0
    %2964 = vmatprep.subr.mxu0 0.0
    %2965 = vmatpush1.msra.mxu0 0.0
    %2966 = vmatprep.subr.mxu0 0.0
    %2967 = vmatpush1.msra.mxu0 0.0
    %2968 = vmatprep.subr.mxu0 0.0
    %2969 = vmatpush1.msra.mxu0 0.0
    %2970 = vmatprep.subr.mxu0 0.0
    %2971 = vmatpush1.msra.mxu0 0.0
    %2972 = vmatprep.subr.mxu0 0.0
    %2973 = vmatpush1.msra.mxu0 0.0
    %2974 = vmatprep.subr.mxu0 0.0
    %2975 = vmatpush1.msra.mxu0 0.0
    %2976 = vmatprep.subr.mxu0 0.0
    %2977 = vmatpush1.msra.mxu0 0.0
    %2978 = vmatprep.subr.mxu0 0.0
    %2979 = vmatpush1.msra.mxu0 0.0
    %2980 = vmatprep.subr.mxu0 0.0
    %2981 = vmatpush1.msra.mxu0 0.0
    %2982 = vmatprep.subr.mxu0 0.0
    %2983 = vmatpush1.msra.mxu0 0.0
    %2984 = vmatprep.subr.mxu0 0.0
    %2985 = vmatpush1.msra.mxu0 0.0
    %2986 = vmatprep.subr.mxu0 0.0
    %2987 = vmatpush1.msra.mxu0 0.0
    %2988 = vmatprep.subr.mxu0 0.0
    %2989 = vmatpush1.msra.mxu0 0.0
    %2990 = vmatprep.subr.mxu0 0.0
    %2991 = vmatpush1.msra.mxu0 0.0
    %2992 = vmatprep.subr.mxu0 0.0
    %2993 = vmatpush1.msra.mxu0 0.0
    %2994 = vmatprep.subr.mxu0 0.0
    %2995 = vmatpush1.msra.mxu0 0.0
    %2996 = vmatprep.subr.mxu0 0.0
    %2997 = vmatpush1.msra.mxu0 0.0
    %2998 = vmatprep.subr.mxu0 0.0
    %2999 = vmatpush1.msra.mxu0 0.0
    %3000 = vmatprep.mubr.f32.mxu0 0.0
    %3001 = vmatmul.mubr.f32.gmra.mrb[0].mxu0 %v2889
    %v3002 = vpop.f32.mrb[0].mxu0
    %v3003 = vadd.f32 %v2886, %v3002
    %v3004 = vpop.f32.mrb[0].mxu0
    %3005 = vmatprep.mubr.f32.mxu0 0.0
    %3006 = vmatmul.mubr.f32.gmra.mrb[0].mxu0 %v2892
    %v3007 = vpop.f32.mrb[0].mxu0
    %v3008 = vadd.f32 %v2886, %v3007
    %v3009 = vpop.f32.mrb[0].mxu0
    %3010 = vmatprep.mubr.f32.mxu0 0.0
    %3011 = vmatmul.mubr.f32.gmra.mrb[0].mxu0 %v2895
    %v3012 = vpop.f32.mrb[0].mxu0
    %v3013 = vadd.f32 %v2886, %v3012
    %v3014 = vpop.f32.mrb[0].mxu0
    %3015 = vmatprep.mubr.f32.mxu0 0.0
    %3016 = vmatmul.mubr.f32.gmra.mrb[0].mxu0 %v2898
    %v3017 = vpop.f32.mrb[0].mxu0
    %v3018 = vadd.f32 %v2886, %v3017
    %v3019 = vpop.f32.mrb[0].mxu0
    %3020 = vmatprep.mubr.f32.mxu0 0.0
    %3021 = vmatmul.mubr.f32.gmra.mrb[0].mxu0 %v2901
    %v3022 = vpop.f32.mrb[0].mxu0
    %v3023 = vadd.f32 %v2886, %v3022
    %v3024 = vpop.f32.mrb[0].mxu0
    %3025 = vmatprep.mubr.f32.mxu0 0.0
    %3026 = vmatmul.mubr.f32.gmra.mrb[0].mxu0 %v2904
    %v3027 = vpop.f32.mrb[0].mxu0
    %v3028 = vadd.f32 %v2886, %v3027
    %v3029 = vpop.f32.mrb[0].mxu0
    %3030 = vmatprep.mubr.f32.mxu0 0.0
    %3031 = vmatmul.mubr.f32.gmra.mrb[0].mxu0 %v2907
    %v3032 = vpop.f32.mrb[0].mxu0
    %v3033 = vadd.f32 %v2886, %v3032
    %v3034 = vpop.f32.mrb[0].mxu0
    %3035 = vmatprep.mubr.f32.mxu0 0.0
    %3036 = vmatmul.mubr.f32.gmra.mrb[0].mxu0 %v2910
    %v3037 = vpop.f32.mrb[0].mxu0
    %v3038 = vadd.f32 %v2886, %v3037
    %v3039 = vpop.f32.mrb[0].mxu0
    %3040 = vmatprep.mubr.f32.mxu0 0.0
    %3041 = vmatmul.mubr.f32.gmra.mrb[0].mxu0 %v2913
    %v3042 = vpop.f32.mrb[0].mxu0
    %v3043 = vadd.f32 %v2886, %v3042
    %v3044 = vpop.f32.mrb[0].mxu0
    %3045 = vmatprep.mubr.f32.mxu0 0.0
    %3046 = vmatmul.mubr.f32.gmra.mrb[0].mxu0 %v2916
    %v3047 = vpop.f32.mrb[0].mxu0
    %v3048 = vadd.f32 %v2886, %v3047
    %v3049 = vpop.f32.mrb[0].mxu0
    %3050 = vmatprep.mubr.f32.mxu0 0.0
    %3051 = vmatmul.mubr.f32.gmra.mrb[0].mxu0 %v2919
    %v3052 = vpop.f32.mrb[0].mxu0
    %v3053 = vadd.f32 %v2886, %v3052
    %v3054 = vpop.f32.mrb[0].mxu0
    %3055 = vmatprep.mubr.f32.mxu0 0.0
    %3056 = vmatmul.mubr.f32.gmra.mrb[0].mxu0 %v2922
    %v3057 = vpop.f32.mrb[0].mxu0
    %v3058 = vadd.f32 %v2886, %v3057
    %v3059 = vpop.f32.mrb[0].mxu0
    %3060 = vmatprep.mubr.f32.mxu0 0.0
    %3061 = vmatmul.mubr.f32.gmra.mrb[0].mxu0 %v2925
    %v3062 = vpop.f32.mrb[0].mxu0
    %v3063 = vadd.f32 %v2886, %v3062
    %v3064 = vpop.f32.mrb[0].mxu0
    %3065 = vmatprep.mubr.f32.mxu0 0.0
    %3066 = vmatmul.mubr.f32.gmra.mrb[0].mxu0 %v2928
    %v3067 = vpop.f32.mrb[0].mxu0
    %v3068 = vadd.f32 %v2886, %v3067
    %v3069 = vpop.f32.mrb[0].mxu0
    %3070 = vmatprep.mubr.f32.mxu0 0.0
    %3071 = vmatmul.mubr.f32.gmra.mrb[0].mxu0 %v2931
    %v3072 = vpop.f32.mrb[0].mxu0
    %v3073 = vadd.f32 %v2886, %v3072
    %v3074 = vpop.f32.mrb[0].mxu0
    %3075 = vmatprep.mubr.f32.mxu0 0.0
    %3076 = vmatmul.mubr.f32.gmra.mrb[0].mxu0 %v2934
    %v3077 = vpop.f32.mrb[0].mxu0
    %v3078 = vadd.f32 %v2886, %v3077
    %v3079 = vpop.f32.mrb[0].mxu0
    %3080 = vdwg.mxu0
    %vm3081 = vcmask 785408
    %3082 = vst.msk [vmem:[#allocation2] sm:$0xff] %vm3081, %v3003
    %3083 = vst.msk [vmem:[#allocation2 + $0x8] sm:$0xff] %vm3081, %v3008
    %3084 = vst.msk [vmem:[#allocation2 + $0x10] sm:$0xff] %vm3081, %v3013
    %3085 = vst.msk [vmem:[#allocation2 + $0x18] sm:$0xff] %vm3081, %v3018
    %3086 = vst.msk [vmem:[#allocation2 + $0x20] sm:$0xff] %vm3081, %v3023
    %3087 = vst.msk [vmem:[#allocation2 + $0x28] sm:$0xff] %vm3081, %v3028
    %3088 = vst.msk [vmem:[#allocation2 + $0x30] sm:$0xff] %vm3081, %v3033
    %3089 = vst.msk [vmem:[#allocation2 + $0x38] sm:$0xff] %vm3081, %v3038
    %3090 = vst.msk [vmem:[#allocation2 + $0x40] sm:$0xff] %vm3081, %v3043
    %3091 = vst.msk [vmem:[#allocation2 + $0x48] sm:$0xff] %vm3081, %v3048
    %3092 = vst.msk [vmem:[#allocation2 + $0x50] sm:$0xff] %vm3081, %v3053
    %3093 = vst.msk [vmem:[#allocation2 + $0x58] sm:$0xff] %vm3081, %v3058
    %3094 = vst.msk [vmem:[#allocation2 + $0x60] sm:$0xff] %vm3081, %v3063
    %3095 = vst.msk [vmem:[#allocation2 + $0x68] sm:$0xff] %vm3081, %v3068
    %3096 = vst.msk [vmem:[#allocation2 + $0x70] sm:$0xff] %vm3081, %v3073
    %3097 = vst.msk [vmem:[#allocation2 + $0x78] sm:$0xff] %vm3081, %v3078
    %v3098 = vld [vmem:[#allocation2] sm:$0xff]
    %v3100 = vlaneseq
    %v3101 = vshrl.u32 %v3100, 7
    %v3102 = vsub.s32 0, %v3101
    %v3103 = vrot.slane %v2881, %v3102
    %v3106 = vsel %vm216, 0.0, 0
    %3108 = vmatprep.subr.mxu0 0.0
    %3109 = vmatpush1.msra.mxu0 %v2875
    %3110 = vmatprep.subr.mxu0 0.0
    %3111 = vmatpush1.msra.mxu0 %v2876
    %3112 = vmatprep.subr.mxu0 0.0
    %3113 = vmatpush1.msra.mxu0 %v2877
    %3114 = vmatprep.subr.mxu0 0.0
    %3115 = vmatpush1.msra.mxu0 %v2878
    %3116 = vmatprep.subr.mxu0 0.0
    %3117 = vmatpush1.msra.mxu0 0.0
    %3118 = vmatprep.subr.mxu0 0.0
    %3119 = vmatpush1.msra.mxu0 0.0
    %3120 = vmatprep.subr.mxu0 0.0
    %3121 = vmatpush1.msra.mxu0 0.0
    %3122 = vmatprep.subr.mxu0 0.0
    %3123 = vmatpush1.msra.mxu0 0.0
    %3124 = vmatprep.subr.mxu0 0.0
    %3125 = vmatpush1.msra.mxu0 0.0
    %3126 = vmatprep.subr.mxu0 0.0
    %3127 = vmatpush1.msra.mxu0 0.0
    %3128 = vmatprep.subr.mxu0 0.0
    %3129 = vmatpush1.msra.mxu0 0.0
    %3130 = vmatprep.subr.mxu0 0.0
    %3131 = vmatpush1.msra.mxu0 0.0
    %3132 = vmatprep.subr.mxu0 0.0
    %3133 = vmatpush1.msra.mxu0 0.0
    %3134 = vmatprep.subr.mxu0 0.0
    %3135 = vmatpush1.msra.mxu0 0.0
    %3136 = vmatprep.subr.mxu0 0.0
    %3137 = vmatpush1.msra.mxu0 0.0
    %3138 = vmatprep.subr.mxu0 0.0
    %3139 = vmatpush1.msra.mxu0 0.0
    %3140 = vmatprep.subr.mxu0 0.0
    %3141 = vmatpush1.msra.mxu0 0.0
    %3142 = vmatprep.subr.mxu0 0.0
    %3143 = vmatpush1.msra.mxu0 0.0
    %3144 = vmatprep.subr.mxu0 0.0
    %3145 = vmatpush1.msra.mxu0 0.0
    %3146 = vmatprep.subr.mxu0 0.0
    %3147 = vmatpush1.msra.mxu0 0.0
    %3148 = vmatprep.subr.mxu0 0.0
    %3149 = vmatpush1.msra.mxu0 0.0
    %3150 = vmatprep.subr.mxu0 0.0
    %3151 = vmatpush1.msra.mxu0 0.0
    %3152 = vmatprep.subr.mxu0 0.0
    %3153 = vmatpush1.msra.mxu0 0.0
    %3154 = vmatprep.subr.mxu0 0.0
    %3155 = vmatpush1.msra.mxu0 0.0
    %3156 = vmatprep.subr.mxu0 0.0
    %3157 = vmatpush1.msra.mxu0 0.0
    %3158 = vmatprep.subr.mxu0 0.0
    %3159 = vmatpush1.msra.mxu0 0.0
    %3160 = vmatprep.subr.mxu0 0.0
    %3161 = vmatpush1.msra.mxu0 0.0
    %3162 = vmatprep.subr.mxu0 0.0
    %3163 = vmatpush1.msra.mxu0 0.0
    %3164 = vmatprep.subr.mxu0 0.0
    %3165 = vmatpush1.msra.mxu0 0.0
    %3166 = vmatprep.subr.mxu0 0.0
    %3167 = vmatpush1.msra.mxu0 0.0
    %3168 = vmatprep.subr.mxu0 0.0
    %3169 = vmatpush1.msra.mxu0 0.0
    %3170 = vmatprep.subr.mxu0 0.0
    %3171 = vmatpush1.msra.mxu0 0.0
    %3172 = vmatprep.mubr.f32.mxu0 0.0
    %3173 = vmatmul.mubr.f32.gmra.mrb[0].mxu0 %v3106
    %v3174 = vpop.f32.mrb[0].mxu0
    %v3175 = vadd.f32 %v3103, %v3174
    %v3176 = vpop.f32.mrb[0].mxu0
    %3177 = vdwg.mxu0
    %v3178 = vadd.f32 %v3098, %v3175
    %v3179 = vxor.u32 %v3178, 2147483648
    %v3180 = vmul.f32 %v3179, 1.442695
    %v3181 = vpow.pop %v3180
    %v3182 = vadd.f32 %v3181, 1.0
    %v3183 = vrcp.pop %v3182
    %v3184 = vmul.f32 1.0, %v3183
    %3186 = vrot.lane.b32.xlu0 %v3175, 64
    %v3187 = vpop.permute.xlu0 %3186
    %v3189 = vmul.f32 %v3184, %v3187
    %3191 = vrot.lane.b32.xlu0 %v3189, 64
    %v3192 = vpop.permute.xlu0 %3191
    %v3194 = vadd.f32 %v3098, %v3192
    %v3195 = vtanh.pop %v3194
    %v3196 = vsub.f32 1.0, %v3184
    %3198 = vrot.lane.b32.xlu0 %v3195, 96
    %v3199 = vpop.permute.xlu0 %3198
    %v3201 = vmul.f32 %v3196, %v3199
    %v3202 = vmul.f32 %v3184, 0.0
    %v3203 = vadd.f32 %v3201, %v3202
    %v3204 = vld [vmem:[#allocation2 + $0x8] sm:$0xff]
    %3206 = vrot.lane.b32.xlu0 %v3203, 96
    %v3207 = vpop.permute.xlu0 %3206
    %v3208 = vsel %vm216, %v3207, 0
    %3210 = vmatprep.subr.mxu0 0.0
    %3211 = vmatpush1.msra.mxu0 %v2875
    %3212 = vmatprep.subr.mxu0 0.0
    %3213 = vmatpush1.msra.mxu0 %v2876
    %3214 = vmatprep.subr.mxu0 0.0
    %3215 = vmatpush1.msra.mxu0 %v2877
    %3216 = vmatprep.subr.mxu0 0.0
    %3217 = vmatpush1.msra.mxu0 %v2878
    %3218 = vmatprep.subr.mxu0 0.0
    %3219 = vmatpush1.msra.mxu0 0.0
    %3220 = vmatprep.subr.mxu0 0.0
    %3221 = vmatpush1.msra.mxu0 0.0
    %3222 = vmatprep.subr.mxu0 0.0
    %3223 = vmatpush1.msra.mxu0 0.0
    %3224 = vmatprep.subr.mxu0 0.0
    %3225 = vmatpush1.msra.mxu0 0.0
    %3226 = vmatprep.subr.mxu0 0.0
    %3227 = vmatpush1.msra.mxu0 0.0
    %3228 = vmatprep.subr.mxu0 0.0
    %3229 = vmatpush1.msra.mxu0 0.0
    %3230 = vmatprep.subr.mxu0 0.0
    %3231 = vmatpush1.msra.mxu0 0.0
    %3232 = vmatprep.subr.mxu0 0.0
    %3233 = vmatpush1.msra.mxu0 0.0
    %3234 = vmatprep.subr.mxu0 0.0
    %3235 = vmatpush1.msra.mxu0 0.0
    %3236 = vmatprep.subr.mxu0 0.0
    %3237 = vmatpush1.msra.mxu0 0.0
    %3238 = vmatprep.subr.mxu0 0.0
    %3239 = vmatpush1.msra.mxu0 0.0
    %3240 = vmatprep.subr.mxu0 0.0
    %3241 = vmatpush1.msra.mxu0 0.0
    %3242 = vmatprep.subr.mxu0 0.0
    %3243 = vmatpush1.msra.mxu0 0.0
    %3244 = vmatprep.subr.mxu0 0.0
    %3245 = vmatpush1.msra.mxu0 0.0
    %3246 = vmatprep.subr.mxu0 0.0
    %3247 = vmatpush1.msra.mxu0 0.0
    %3248 = vmatprep.subr.mxu0 0.0
    %3249 = vmatpush1.msra.mxu0 0.0
    %3250 = vmatprep.subr.mxu0 0.0
    %3251 = vmatpush1.msra.mxu0 0.0
    %3252 = vmatprep.subr.mxu0 0.0
    %3253 = vmatpush1.msra.mxu0 0.0
    %3254 = vmatprep.subr.mxu0 0.0
    %3255 = vmatpush1.msra.mxu0 0.0
    %3256 = vmatprep.subr.mxu0 0.0
    %3257 = vmatpush1.msra.mxu0 0.0
    %3258 = vmatprep.subr.mxu0 0.0
    %3259 = vmatpush1.msra.mxu0 0.0
    %3260 = vmatprep.subr.mxu0 0.0
    %3261 = vmatpush1.msra.mxu0 0.0
    %3262 = vmatprep.subr.mxu0 0.0
    %3263 = vmatpush1.msra.mxu0 0.0
    %3264 = vmatprep.subr.mxu0 0.0
    %3265 = vmatpush1.msra.mxu0 0.0
    %3266 = vmatprep.subr.mxu0 0.0
    %3267 = vmatpush1.msra.mxu0 0.0
    %3268 = vmatprep.subr.mxu0 0.0
    %3269 = vmatpush1.msra.mxu0 0.0
    %3270 = vmatprep.subr.mxu0 0.0
    %3271 = vmatpush1.msra.mxu0 0.0
    %3272 = vmatprep.subr.mxu0 0.0
    %3273 = vmatpush1.msra.mxu0 0.0
    %3274 = vmatprep.mubr.f32.mxu0 0.0
    %3275 = vmatmul.mubr.f32.gmra.mrb[0].mxu0 %v3208
    %v3276 = vpop.f32.mrb[0].mxu0
    %v3277 = vadd.f32 %v3103, %v3276
    %v3278 = vpop.f32.mrb[0].mxu0
    %3279 = vdwg.mxu0
    %v3280 = vadd.f32 %v3204, %v3277
    %v3281 = vxor.u32 %v3280, 2147483648
    %v3282 = vmul.f32 %v3281, 1.442695
    %v3283 = vpow.pop %v3282
    %v3284 = vadd.f32 %v3283, 1.0
    %v3285 = vrcp.pop %v3284
    %v3286 = vmul.f32 1.0, %v3285
    %3288 = vrot.lane.b32.xlu0 %v3277, 64
    %v3289 = vpop.permute.xlu0 %3288
    %v3291 = vmul.f32 %v3286, %v3289
    %3293 = vrot.lane.b32.xlu0 %v3291, 64
    %v3294 = vpop.permute.xlu0 %3293
    %v3296 = vadd.f32 %v3204, %v3294
    %v3297 = vtanh.pop %v3296
    %v3298 = vsub.f32 1.0, %v3286
    %3300 = vrot.lane.b32.xlu0 %v3297, 96
    %v3301 = vpop.permute.xlu0 %3300
    %v3303 = vmul.f32 %v3298, %v3301
    %v3304 = vmul.f32 %v3286, %v3203
    %v3305 = vadd.f32 %v3303, %v3304
    %v3306 = vld [vmem:[#allocation2 + $0x10] sm:$0xff]
    %3308 = vrot.lane.b32.xlu0 %v3305, 96
    %v3309 = vpop.permute.xlu0 %3308
    %v3310 = vsel %vm216, %v3309, 0
    %3312 = vmatprep.subr.mxu0 0.0
    %3313 = vmatpush1.msra.mxu0 %v2875
    %3314 = vmatprep.subr.mxu0 0.0
    %3315 = vmatpush1.msra.mxu0 %v2876
    %3316 = vmatprep.subr.mxu0 0.0
    %3317 = vmatpush1.msra.mxu0 %v2877
    %3318 = vmatprep.subr.mxu0 0.0
    %3319 = vmatpush1.msra.mxu0 %v2878
    %3320 = vmatprep.subr.mxu0 0.0
    %3321 = vmatpush1.msra.mxu0 0.0
    %3322 = vmatprep.subr.mxu0 0.0
    %3323 = vmatpush1.msra.mxu0 0.0
    %3324 = vmatprep.subr.mxu0 0.0
    %3325 = vmatpush1.msra.mxu0 0.0
    %3326 = vmatprep.subr.mxu0 0.0
    %3327 = vmatpush1.msra.mxu0 0.0
    %3328 = vmatprep.subr.mxu0 0.0
    %3329 = vmatpush1.msra.mxu0 0.0
    %3330 = vmatprep.subr.mxu0 0.0
    %3331 = vmatpush1.msra.mxu0 0.0
    %3332 = vmatprep.subr.mxu0 0.0
    %3333 = vmatpush1.msra.mxu0 0.0
    %3334 = vmatprep.subr.mxu0 0.0
    %3335 = vmatpush1.msra.mxu0 0.0
    %3336 = vmatprep.subr.mxu0 0.0
    %3337 = vmatpush1.msra.mxu0 0.0
    %3338 = vmatprep.subr.mxu0 0.0
    %3339 = vmatpush1.msra.mxu0 0.0
    %3340 = vmatprep.subr.mxu0 0.0
    %3341 = vmatpush1.msra.mxu0 0.0
    %3342 = vmatprep.subr.mxu0 0.0
    %3343 = vmatpush1.msra.mxu0 0.0
    %3344 = vmatprep.subr.mxu0 0.0
    %3345 = vmatpush1.msra.mxu0 0.0
    %3346 = vmatprep.subr.mxu0 0.0
    %3347 = vmatpush1.msra.mxu0 0.0
    %3348 = vmatprep.subr.mxu0 0.0
    %3349 = vmatpush1.msra.mxu0 0.0
    %3350 = vmatprep.subr.mxu0 0.0
    %3351 = vmatpush1.msra.mxu0 0.0
    %3352 = vmatprep.subr.mxu0 0.0
    %3353 = vmatpush1.msra.mxu0 0.0
    %3354 = vmatprep.subr.mxu0 0.0
    %3355 = vmatpush1.msra.mxu0 0.0
    %3356 = vmatprep.subr.mxu0 0.0
    %3357 = vmatpush1.msra.mxu0 0.0
    %3358 = vmatprep.subr.mxu0 0.0
    %3359 = vmatpush1.msra.mxu0 0.0
    %3360 = vmatprep.subr.mxu0 0.0
    %3361 = vmatpush1.msra.mxu0 0.0
    %3362 = vmatprep.subr.mxu0 0.0
    %3363 = vmatpush1.msra.mxu0 0.0
    %3364 = vmatprep.subr.mxu0 0.0
    %3365 = vmatpush1.msra.mxu0 0.0
    %3366 = vmatprep.subr.mxu0 0.0
    %3367 = vmatpush1.msra.mxu0 0.0
    %3368 = vmatprep.subr.mxu0 0.0
    %3369 = vmatpush1.msra.mxu0 0.0
    %3370 = vmatprep.subr.mxu0 0.0
    %3371 = vmatpush1.msra.mxu0 0.0
    %3372 = vmatprep.subr.mxu0 0.0
    %3373 = vmatpush1.msra.mxu0 0.0
    %3374 = vmatprep.subr.mxu0 0.0
    %3375 = vmatpush1.msra.mxu0 0.0
    %3376 = vmatprep.mubr.f32.mxu0 0.0
    %3377 = vmatmul.mubr.f32.gmra.mrb[0].mxu0 %v3310
    %v3378 = vpop.f32.mrb[0].mxu0
    %v3379 = vadd.f32 %v3103, %v3378
    %v3380 = vpop.f32.mrb[0].mxu0
    %3381 = vdwg.mxu0
    %v3382 = vadd.f32 %v3306, %v3379
    %v3383 = vxor.u32 %v3382, 2147483648
    %v3384 = vmul.f32 %v3383, 1.442695
    %v3385 = vpow.pop %v3384
    %v3386 = vadd.f32 %v3385, 1.0
    %v3387 = vrcp.pop %v3386
    %v3388 = vmul.f32 1.0, %v3387
    %3390 = vrot.lane.b32.xlu0 %v3379, 64
    %v3391 = vpop.permute.xlu0 %3390
    %v3393 = vmul.f32 %v3388, %v3391
    %3395 = vrot.lane.b32.xlu0 %v3393, 64
    %v3396 = vpop.permute.xlu0 %3395
    %v3398 = vadd.f32 %v3306, %v3396
    %v3399 = vtanh.pop %v3398
    %v3400 = vsub.f32 1.0, %v3388
    %3402 = vrot.lane.b32.xlu0 %v3399, 96
    %v3403 = vpop.permute.xlu0 %3402
    %v3405 = vmul.f32 %v3400, %v3403
    %v3406 = vmul.f32 %v3388, %v3305
    %v3407 = vadd.f32 %v3405, %v3406
    %v3408 = vld [vmem:[#allocation2 + $0x18] sm:$0xff]
    %3410 = vrot.lane.b32.xlu0 %v3407, 96
    %v3411 = vpop.permute.xlu0 %3410
    %v3412 = vsel %vm216, %v3411, 0
    %3414 = vmatprep.subr.mxu0 0.0
    %3415 = vmatpush1.msra.mxu0 %v2875
    %3416 = vmatprep.subr.mxu0 0.0
    %3417 = vmatpush1.msra.mxu0 %v2876
    %3418 = vmatprep.subr.mxu0 0.0
    %3419 = vmatpush1.msra.mxu0 %v2877
    %3420 = vmatprep.subr.mxu0 0.0
    %3421 = vmatpush1.msra.mxu0 %v2878
    %3422 = vmatprep.subr.mxu0 0.0
    %3423 = vmatpush1.msra.mxu0 0.0
    %3424 = vmatprep.subr.mxu0 0.0
    %3425 = vmatpush1.msra.mxu0 0.0
    %3426 = vmatprep.subr.mxu0 0.0
    %3427 = vmatpush1.msra.mxu0 0.0
    %3428 = vmatprep.subr.mxu0 0.0
    %3429 = vmatpush1.msra.mxu0 0.0
    %3430 = vmatprep.subr.mxu0 0.0
    %3431 = vmatpush1.msra.mxu0 0.0
    %3432 = vmatprep.subr.mxu0 0.0
    %3433 = vmatpush1.msra.mxu0 0.0
    %3434 = vmatprep.subr.mxu0 0.0
    %3435 = vmatpush1.msra.mxu0 0.0
    %3436 = vmatprep.subr.mxu0 0.0
    %3437 = vmatpush1.msra.mxu0 0.0
    %3438 = vmatprep.subr.mxu0 0.0
    %3439 = vmatpush1.msra.mxu0 0.0
    %3440 = vmatprep.subr.mxu0 0.0
    %3441 = vmatpush1.msra.mxu0 0.0
    %3442 = vmatprep.subr.mxu0 0.0
    %3443 = vmatpush1.msra.mxu0 0.0
    %3444 = vmatprep.subr.mxu0 0.0
    %3445 = vmatpush1.msra.mxu0 0.0
    %3446 = vmatprep.subr.mxu0 0.0
    %3447 = vmatpush1.msra.mxu0 0.0
    %3448 = vmatprep.subr.mxu0 0.0
    %3449 = vmatpush1.msra.mxu0 0.0
    %3450 = vmatprep.subr.mxu0 0.0
    %3451 = vmatpush1.msra.mxu0 0.0
    %3452 = vmatprep.subr.mxu0 0.0
    %3453 = vmatpush1.msra.mxu0 0.0
    %3454 = vmatprep.subr.mxu0 0.0
    %3455 = vmatpush1.msra.mxu0 0.0
    %3456 = vmatprep.subr.mxu0 0.0
    %3457 = vmatpush1.msra.mxu0 0.0
    %3458 = vmatprep.subr.mxu0 0.0
    %3459 = vmatpush1.msra.mxu0 0.0
    %3460 = vmatprep.subr.mxu0 0.0
    %3461 = vmatpush1.msra.mxu0 0.0
    %3462 = vmatprep.subr.mxu0 0.0
    %3463 = vmatpush1.msra.mxu0 0.0
    %3464 = vmatprep.subr.mxu0 0.0
    %3465 = vmatpush1.msra.mxu0 0.0
    %3466 = vmatprep.subr.mxu0 0.0
    %3467 = vmatpush1.msra.mxu0 0.0
    %3468 = vmatprep.subr.mxu0 0.0
    %3469 = vmatpush1.msra.mxu0 0.0
    %3470 = vmatprep.subr.mxu0 0.0
    %3471 = vmatpush1.msra.mxu0 0.0
    %3472 = vmatprep.subr.mxu0 0.0
    %3473 = vmatpush1.msra.mxu0 0.0
    %3474 = vmatprep.subr.mxu0 0.0
    %3475 = vmatpush1.msra.mxu0 0.0
    %3476 = vmatprep.subr.mxu0 0.0
    %3477 = vmatpush1.msra.mxu0 0.0
    %3478 = vmatprep.mubr.f32.mxu0 0.0
    %3479 = vmatmul.mubr.f32.gmra.mrb[0].mxu0 %v3412
    %v3480 = vpop.f32.mrb[0].mxu0
    %v3481 = vadd.f32 %v3103, %v3480
    %v3482 = vpop.f32.mrb[0].mxu0
    %3483 = vdwg.mxu0
    %v3484 = vadd.f32 %v3408, %v3481
    %v3485 = vxor.u32 %v3484, 2147483648
    %v3486 = vmul.f32 %v3485, 1.442695
    %v3487 = vpow.pop %v3486
    %v3488 = vadd.f32 %v3487, 1.0
    %v3489 = vrcp.pop %v3488
    %v3490 = vmul.f32 1.0, %v3489
    %3492 = vrot.lane.b32.xlu0 %v3481, 64
    %v3493 = vpop.permute.xlu0 %3492
    %v3495 = vmul.f32 %v3490, %v3493
    %3497 = vrot.lane.b32.xlu0 %v3495, 64
    %v3498 = vpop.permute.xlu0 %3497
    %v3500 = vadd.f32 %v3408, %v3498
    %v3501 = vtanh.pop %v3500
    %v3502 = vsub.f32 1.0, %v3490
    %3504 = vrot.lane.b32.xlu0 %v3501, 96
    %v3505 = vpop.permute.xlu0 %3504
    %v3507 = vmul.f32 %v3502, %v3505
    %v3508 = vmul.f32 %v3490, %v3407
    %v3509 = vadd.f32 %v3507, %v3508
    %v3510 = vld [vmem:[#allocation2 + $0x20] sm:$0xff]
    %3512 = vrot.lane.b32.xlu0 %v3509, 96
    %v3513 = vpop.permute.xlu0 %3512
    %v3514 = vsel %vm216, %v3513, 0
    %3516 = vmatprep.subr.mxu0 0.0
    %3517 = vmatpush1.msra.mxu0 %v2875
    %3518 = vmatprep.subr.mxu0 0.0
    %3519 = vmatpush1.msra.mxu0 %v2876
    %3520 = vmatprep.subr.mxu0 0.0
    %3521 = vmatpush1.msra.mxu0 %v2877
    %3522 = vmatprep.subr.mxu0 0.0
    %3523 = vmatpush1.msra.mxu0 %v2878
    %3524 = vmatprep.subr.mxu0 0.0
    %3525 = vmatpush1.msra.mxu0 0.0
    %3526 = vmatprep.subr.mxu0 0.0
    %3527 = vmatpush1.msra.mxu0 0.0
    %3528 = vmatprep.subr.mxu0 0.0
    %3529 = vmatpush1.msra.mxu0 0.0
    %3530 = vmatprep.subr.mxu0 0.0
    %3531 = vmatpush1.msra.mxu0 0.0
    %3532 = vmatprep.subr.mxu0 0.0
    %3533 = vmatpush1.msra.mxu0 0.0
    %3534 = vmatprep.subr.mxu0 0.0
    %3535 = vmatpush1.msra.mxu0 0.0
    %3536 = vmatprep.subr.mxu0 0.0
    %3537 = vmatpush1.msra.mxu0 0.0
    %3538 = vmatprep.subr.mxu0 0.0
    %3539 = vmatpush1.msra.mxu0 0.0
    %3540 = vmatprep.subr.mxu0 0.0
    %3541 = vmatpush1.msra.mxu0 0.0
    %3542 = vmatprep.subr.mxu0 0.0
    %3543 = vmatpush1.msra.mxu0 0.0
    %3544 = vmatprep.subr.mxu0 0.0
    %3545 = vmatpush1.msra.mxu0 0.0
    %3546 = vmatprep.subr.mxu0 0.0
    %3547 = vmatpush1.msra.mxu0 0.0
    %3548 = vmatprep.subr.mxu0 0.0
    %3549 = vmatpush1.msra.mxu0 0.0
    %3550 = vmatprep.subr.mxu0 0.0
    %3551 = vmatpush1.msra.mxu0 0.0
    %3552 = vmatprep.subr.mxu0 0.0
    %3553 = vmatpush1.msra.mxu0 0.0
    %3554 = vmatprep.subr.mxu0 0.0
    %3555 = vmatpush1.msra.mxu0 0.0
    %3556 = vmatprep.subr.mxu0 0.0
    %3557 = vmatpush1.msra.mxu0 0.0
    %3558 = vmatprep.subr.mxu0 0.0
    %3559 = vmatpush1.msra.mxu0 0.0
    %3560 = vmatprep.subr.mxu0 0.0
    %3561 = vmatpush1.msra.mxu0 0.0
    %3562 = vmatprep.subr.mxu0 0.0
    %3563 = vmatpush1.msra.mxu0 0.0
    %3564 = vmatprep.subr.mxu0 0.0
    %3565 = vmatpush1.msra.mxu0 0.0
    %3566 = vmatprep.subr.mxu0 0.0
    %3567 = vmatpush1.msra.mxu0 0.0
    %3568 = vmatprep.subr.mxu0 0.0
    %3569 = vmatpush1.msra.mxu0 0.0
    %3570 = vmatprep.subr.mxu0 0.0
    %3571 = vmatpush1.msra.mxu0 0.0
    %3572 = vmatprep.subr.mxu0 0.0
    %3573 = vmatpush1.msra.mxu0 0.0
    %3574 = vmatprep.subr.mxu0 0.0
    %3575 = vmatpush1.msra.mxu0 0.0
    %3576 = vmatprep.subr.mxu0 0.0
    %3577 = vmatpush1.msra.mxu0 0.0
    %3578 = vmatprep.subr.mxu0 0.0
    %3579 = vmatpush1.msra.mxu0 0.0
    %3580 = vmatprep.mubr.f32.mxu0 0.0
    %3581 = vmatmul.mubr.f32.gmra.mrb[0].mxu0 %v3514
    %v3582 = vpop.f32.mrb[0].mxu0
    %v3583 = vadd.f32 %v3103, %v3582
    %v3584 = vpop.f32.mrb[0].mxu0
    %3585 = vdwg.mxu0
    %v3586 = vadd.f32 %v3510, %v3583
    %v3587 = vxor.u32 %v3586, 2147483648
    %v3588 = vmul.f32 %v3587, 1.442695
    %v3589 = vpow.pop %v3588
    %v3590 = vadd.f32 %v3589, 1.0
    %v3591 = vrcp.pop %v3590
    %v3592 = vmul.f32 1.0, %v3591
    %3594 = vrot.lane.b32.xlu0 %v3583, 64
    %v3595 = vpop.permute.xlu0 %3594
    %v3597 = vmul.f32 %v3592, %v3595
    %3599 = vrot.lane.b32.xlu0 %v3597, 64
    %v3600 = vpop.permute.xlu0 %3599
    %v3602 = vadd.f32 %v3510, %v3600
    %v3603 = vtanh.pop %v3602
    %v3604 = vsub.f32 1.0, %v3592
    %3606 = vrot.lane.b32.xlu0 %v3603, 96
    %v3607 = vpop.permute.xlu0 %3606
    %v3609 = vmul.f32 %v3604, %v3607
    %v3610 = vmul.f32 %v3592, %v3509
    %v3611 = vadd.f32 %v3609, %v3610
    %v3612 = vld [vmem:[#allocation2 + $0x28] sm:$0xff]
    %3614 = vrot.lane.b32.xlu0 %v3611, 96
    %v3615 = vpop.permute.xlu0 %3614
    %v3616 = vsel %vm216, %v3615, 0
    %3618 = vmatprep.subr.mxu0 0.0
    %3619 = vmatpush1.msra.mxu0 %v2875
    %3620 = vmatprep.subr.mxu0 0.0
    %3621 = vmatpush1.msra.mxu0 %v2876
    %3622 = vmatprep.subr.mxu0 0.0
    %3623 = vmatpush1.msra.mxu0 %v2877
    %3624 = vmatprep.subr.mxu0 0.0
    %3625 = vmatpush1.msra.mxu0 %v2878
    %3626 = vmatprep.subr.mxu0 0.0
    %3627 = vmatpush1.msra.mxu0 0.0
    %3628 = vmatprep.subr.mxu0 0.0
    %3629 = vmatpush1.msra.mxu0 0.0
    %3630 = vmatprep.subr.mxu0 0.0
    %3631 = vmatpush1.msra.mxu0 0.0
    %3632 = vmatprep.subr.mxu0 0.0
    %3633 = vmatpush1.msra.mxu0 0.0
    %3634 = vmatprep.subr.mxu0 0.0
    %3635 = vmatpush1.msra.mxu0 0.0
    %3636 = vmatprep.subr.mxu0 0.0
    %3637 = vmatpush1.msra.mxu0 0.0
    %3638 = vmatprep.subr.mxu0 0.0
    %3639 = vmatpush1.msra.mxu0 0.0
    %3640 = vmatprep.subr.mxu0 0.0
    %3641 = vmatpush1.msra.mxu0 0.0
    %3642 = vmatprep.subr.mxu0 0.0
    %3643 = vmatpush1.msra.mxu0 0.0
    %3644 = vmatprep.subr.mxu0 0.0
    %3645 = vmatpush1.msra.mxu0 0.0
    %3646 = vmatprep.subr.mxu0 0.0
    %3647 = vmatpush1.msra.mxu0 0.0
    %3648 = vmatprep.subr.mxu0 0.0
    %3649 = vmatpush1.msra.mxu0 0.0
    %3650 = vmatprep.subr.mxu0 0.0
    %3651 = vmatpush1.msra.mxu0 0.0
    %3652 = vmatprep.subr.mxu0 0.0
    %3653 = vmatpush1.msra.mxu0 0.0
    %3654 = vmatprep.subr.mxu0 0.0
    %3655 = vmatpush1.msra.mxu0 0.0
    %3656 = vmatprep.subr.mxu0 0.0
    %3657 = vmatpush1.msra.mxu0 0.0
    %3658 = vmatprep.subr.mxu0 0.0
    %3659 = vmatpush1.msra.mxu0 0.0
    %3660 = vmatprep.subr.mxu0 0.0
    %3661 = vmatpush1.msra.mxu0 0.0
    %3662 = vmatprep.subr.mxu0 0.0
    %3663 = vmatpush1.msra.mxu0 0.0
    %3664 = vmatprep.subr.mxu0 0.0
    %3665 = vmatpush1.msra.mxu0 0.0
    %3666 = vmatprep.subr.mxu0 0.0
    %3667 = vmatpush1.msra.mxu0 0.0
    %3668 = vmatprep.subr.mxu0 0.0
    %3669 = vmatpush1.msra.mxu0 0.0
    %3670 = vmatprep.subr.mxu0 0.0
    %3671 = vmatpush1.msra.mxu0 0.0
    %3672 = vmatprep.subr.mxu0 0.0
    %3673 = vmatpush1.msra.mxu0 0.0
    %3674 = vmatprep.subr.mxu0 0.0
    %3675 = vmatpush1.msra.mxu0 0.0
    %3676 = vmatprep.subr.mxu0 0.0
    %3677 = vmatpush1.msra.mxu0 0.0
    %3678 = vmatprep.subr.mxu0 0.0
    %3679 = vmatpush1.msra.mxu0 0.0
    %3680 = vmatprep.subr.mxu0 0.0
    %3681 = vmatpush1.msra.mxu0 0.0
    %3682 = vmatprep.mubr.f32.mxu0 0.0
    %3683 = vmatmul.mubr.f32.gmra.mrb[0].mxu0 %v3616
    %v3684 = vpop.f32.mrb[0].mxu0
    %v3685 = vadd.f32 %v3103, %v3684
    %v3686 = vpop.f32.mrb[0].mxu0
    %3687 = vdwg.mxu0
    %v3688 = vadd.f32 %v3612, %v3685
    %v3689 = vxor.u32 %v3688, 2147483648
    %v3690 = vmul.f32 %v3689, 1.442695
    %v3691 = vpow.pop %v3690
    %v3692 = vadd.f32 %v3691, 1.0
    %v3693 = vrcp.pop %v3692
    %v3694 = vmul.f32 1.0, %v3693
    %3696 = vrot.lane.b32.xlu0 %v3685, 64
    %v3697 = vpop.permute.xlu0 %3696
    %v3699 = vmul.f32 %v3694, %v3697
    %3701 = vrot.lane.b32.xlu0 %v3699, 64
    %v3702 = vpop.permute.xlu0 %3701
    %v3704 = vadd.f32 %v3612, %v3702
    %v3705 = vtanh.pop %v3704
    %v3706 = vsub.f32 1.0, %v3694
    %3708 = vrot.lane.b32.xlu0 %v3705, 96
    %v3709 = vpop.permute.xlu0 %3708
    %v3711 = vmul.f32 %v3706, %v3709
    %v3712 = vmul.f32 %v3694, %v3611
    %v3713 = vadd.f32 %v3711, %v3712
    %v3714 = vld [vmem:[#allocation2 + $0x30] sm:$0xff]
    %3716 = vrot.lane.b32.xlu0 %v3713, 96
    %v3717 = vpop.permute.xlu0 %3716
    %v3718 = vsel %vm216, %v3717, 0
    %3720 = vmatprep.subr.mxu0 0.0
    %3721 = vmatpush1.msra.mxu0 %v2875
    %3722 = vmatprep.subr.mxu0 0.0
    %3723 = vmatpush1.msra.mxu0 %v2876
    %3724 = vmatprep.subr.mxu0 0.0
    %3725 = vmatpush1.msra.mxu0 %v2877
    %3726 = vmatprep.subr.mxu0 0.0
    %3727 = vmatpush1.msra.mxu0 %v2878
    %3728 = vmatprep.subr.mxu0 0.0
    %3729 = vmatpush1.msra.mxu0 0.0
    %3730 = vmatprep.subr.mxu0 0.0
    %3731 = vmatpush1.msra.mxu0 0.0
    %3732 = vmatprep.subr.mxu0 0.0
    %3733 = vmatpush1.msra.mxu0 0.0
    %3734 = vmatprep.subr.mxu0 0.0
    %3735 = vmatpush1.msra.mxu0 0.0
    %3736 = vmatprep.subr.mxu0 0.0
    %3737 = vmatpush1.msra.mxu0 0.0
    %3738 = vmatprep.subr.mxu0 0.0
    %3739 = vmatpush1.msra.mxu0 0.0
    %3740 = vmatprep.subr.mxu0 0.0
    %3741 = vmatpush1.msra.mxu0 0.0
    %3742 = vmatprep.subr.mxu0 0.0
    %3743 = vmatpush1.msra.mxu0 0.0
    %3744 = vmatprep.subr.mxu0 0.0
    %3745 = vmatpush1.msra.mxu0 0.0
    %3746 = vmatprep.subr.mxu0 0.0
    %3747 = vmatpush1.msra.mxu0 0.0
    %3748 = vmatprep.subr.mxu0 0.0
    %3749 = vmatpush1.msra.mxu0 0.0
    %3750 = vmatprep.subr.mxu0 0.0
    %3751 = vmatpush1.msra.mxu0 0.0
    %3752 = vmatprep.subr.mxu0 0.0
    %3753 = vmatpush1.msra.mxu0 0.0
    %3754 = vmatprep.subr.mxu0 0.0
    %3755 = vmatpush1.msra.mxu0 0.0
    %3756 = vmatprep.subr.mxu0 0.0
    %3757 = vmatpush1.msra.mxu0 0.0
    %3758 = vmatprep.subr.mxu0 0.0
    %3759 = vmatpush1.msra.mxu0 0.0
    %3760 = vmatprep.subr.mxu0 0.0
    %3761 = vmatpush1.msra.mxu0 0.0
    %3762 = vmatprep.subr.mxu0 0.0
    %3763 = vmatpush1.msra.mxu0 0.0
    %3764 = vmatprep.subr.mxu0 0.0
    %3765 = vmatpush1.msra.mxu0 0.0
    %3766 = vmatprep.subr.mxu0 0.0
    %3767 = vmatpush1.msra.mxu0 0.0
    %3768 = vmatprep.subr.mxu0 0.0
    %3769 = vmatpush1.msra.mxu0 0.0
    %3770 = vmatprep.subr.mxu0 0.0
    %3771 = vmatpush1.msra.mxu0 0.0
    %3772 = vmatprep.subr.mxu0 0.0
    %3773 = vmatpush1.msra.mxu0 0.0
    %3774 = vmatprep.subr.mxu0 0.0
    %3775 = vmatpush1.msra.mxu0 0.0
    %3776 = vmatprep.subr.mxu0 0.0
    %3777 = vmatpush1.msra.mxu0 0.0
    %3778 = vmatprep.subr.mxu0 0.0
    %3779 = vmatpush1.msra.mxu0 0.0
    %3780 = vmatprep.subr.mxu0 0.0
    %3781 = vmatpush1.msra.mxu0 0.0
    %3782 = vmatprep.subr.mxu0 0.0
    %3783 = vmatpush1.msra.mxu0 0.0
    %3784 = vmatprep.mubr.f32.mxu0 0.0
    %3785 = vmatmul.mubr.f32.gmra.mrb[0].mxu0 %v3718
    %v3786 = vpop.f32.mrb[0].mxu0
    %v3787 = vadd.f32 %v3103, %v3786
    %v3788 = vpop.f32.mrb[0].mxu0
    %3789 = vdwg.mxu0
    %v3790 = vadd.f32 %v3714, %v3787
    %v3791 = vxor.u32 %v3790, 2147483648
    %v3792 = vmul.f32 %v3791, 1.442695
    %v3793 = vpow.pop %v3792
    %v3794 = vadd.f32 %v3793, 1.0
    %v3795 = vrcp.pop %v3794
    %v3796 = vmul.f32 1.0, %v3795
    %3798 = vrot.lane.b32.xlu0 %v3787, 64
    %v3799 = vpop.permute.xlu0 %3798
    %v3801 = vmul.f32 %v3796, %v3799
    %3803 = vrot.lane.b32.xlu0 %v3801, 64
    %v3804 = vpop.permute.xlu0 %3803
    %v3806 = vadd.f32 %v3714, %v3804
    %v3807 = vtanh.pop %v3806
    %v3808 = vsub.f32 1.0, %v3796
    %3810 = vrot.lane.b32.xlu0 %v3807, 96
    %v3811 = vpop.permute.xlu0 %3810
    %v3813 = vmul.f32 %v3808, %v3811
    %v3814 = vmul.f32 %v3796, %v3713
    %v3815 = vadd.f32 %v3813, %v3814
    %v3816 = vld [vmem:[#allocation2 + $0x38] sm:$0xff]
    %3818 = vrot.lane.b32.xlu0 %v3815, 96
    %v3819 = vpop.permute.xlu0 %3818
    %v3820 = vsel %vm216, %v3819, 0
    %3822 = vmatprep.subr.mxu0 0.0
    %3823 = vmatpush1.msra.mxu0 %v2875
    %3824 = vmatprep.subr.mxu0 0.0
    %3825 = vmatpush1.msra.mxu0 %v2876
    %3826 = vmatprep.subr.mxu0 0.0
    %3827 = vmatpush1.msra.mxu0 %v2877
    %3828 = vmatprep.subr.mxu0 0.0
    %3829 = vmatpush1.msra.mxu0 %v2878
    %3830 = vmatprep.subr.mxu0 0.0
    %3831 = vmatpush1.msra.mxu0 0.0
    %3832 = vmatprep.subr.mxu0 0.0
    %3833 = vmatpush1.msra.mxu0 0.0
    %3834 = vmatprep.subr.mxu0 0.0
    %3835 = vmatpush1.msra.mxu0 0.0
    %3836 = vmatprep.subr.mxu0 0.0
    %3837 = vmatpush1.msra.mxu0 0.0
    %3838 = vmatprep.subr.mxu0 0.0
    %3839 = vmatpush1.msra.mxu0 0.0
    %3840 = vmatprep.subr.mxu0 0.0
    %3841 = vmatpush1.msra.mxu0 0.0
    %3842 = vmatprep.subr.mxu0 0.0
    %3843 = vmatpush1.msra.mxu0 0.0
    %3844 = vmatprep.subr.mxu0 0.0
    %3845 = vmatpush1.msra.mxu0 0.0
    %3846 = vmatprep.subr.mxu0 0.0
    %3847 = vmatpush1.msra.mxu0 0.0
    %3848 = vmatprep.subr.mxu0 0.0
    %3849 = vmatpush1.msra.mxu0 0.0
    %3850 = vmatprep.subr.mxu0 0.0
    %3851 = vmatpush1.msra.mxu0 0.0
    %3852 = vmatprep.subr.mxu0 0.0
    %3853 = vmatpush1.msra.mxu0 0.0
    %3854 = vmatprep.subr.mxu0 0.0
    %3855 = vmatpush1.msra.mxu0 0.0
    %3856 = vmatprep.subr.mxu0 0.0
    %3857 = vmatpush1.msra.mxu0 0.0
    %3858 = vmatprep.subr.mxu0 0.0
    %3859 = vmatpush1.msra.mxu0 0.0
    %3860 = vmatprep.subr.mxu0 0.0
    %3861 = vmatpush1.msra.mxu0 0.0
    %3862 = vmatprep.subr.mxu0 0.0
    %3863 = vmatpush1.msra.mxu0 0.0
    %3864 = vmatprep.subr.mxu0 0.0
    %3865 = vmatpush1.msra.mxu0 0.0
    %3866 = vmatprep.subr.mxu0 0.0
    %3867 = vmatpush1.msra.mxu0 0.0
    %3868 = vmatprep.subr.mxu0 0.0
    %3869 = vmatpush1.msra.mxu0 0.0
    %3870 = vmatprep.subr.mxu0 0.0
    %3871 = vmatpush1.msra.mxu0 0.0
    %3872 = vmatprep.subr.mxu0 0.0
    %3873 = vmatpush1.msra.mxu0 0.0
    %3874 = vmatprep.subr.mxu0 0.0
    %3875 = vmatpush1.msra.mxu0 0.0
    %3876 = vmatprep.subr.mxu0 0.0
    %3877 = vmatpush1.msra.mxu0 0.0
    %3878 = vmatprep.subr.mxu0 0.0
    %3879 = vmatpush1.msra.mxu0 0.0
    %3880 = vmatprep.subr.mxu0 0.0
    %3881 = vmatpush1.msra.mxu0 0.0
    %3882 = vmatprep.subr.mxu0 0.0
    %3883 = vmatpush1.msra.mxu0 0.0
    %3884 = vmatprep.subr.mxu0 0.0
    %3885 = vmatpush1.msra.mxu0 0.0
    %3886 = vmatprep.mubr.f32.mxu0 0.0
    %3887 = vmatmul.mubr.f32.gmra.mrb[0].mxu0 %v3820
    %v3888 = vpop.f32.mrb[0].mxu0
    %v3889 = vadd.f32 %v3103, %v3888
    %v3890 = vpop.f32.mrb[0].mxu0
    %3891 = vdwg.mxu0
    %v3892 = vadd.f32 %v3816, %v3889
    %v3893 = vxor.u32 %v3892, 2147483648
    %v3894 = vmul.f32 %v3893, 1.442695
    %v3895 = vpow.pop %v3894
    %v3896 = vadd.f32 %v3895, 1.0
    %v3897 = vrcp.pop %v3896
    %v3898 = vmul.f32 1.0, %v3897
    %3900 = vrot.lane.b32.xlu0 %v3889, 64
    %v3901 = vpop.permute.xlu0 %3900
    %v3903 = vmul.f32 %v3898, %v3901
    %3905 = vrot.lane.b32.xlu0 %v3903, 64
    %v3906 = vpop.permute.xlu0 %3905
    %v3908 = vadd.f32 %v3816, %v3906
    %v3909 = vtanh.pop %v3908
    %v3910 = vsub.f32 1.0, %v3898
    %3912 = vrot.lane.b32.xlu0 %v3909, 96
    %v3913 = vpop.permute.xlu0 %3912
    %v3915 = vmul.f32 %v3910, %v3913
    %v3916 = vmul.f32 %v3898, %v3815
    %v3917 = vadd.f32 %v3915, %v3916
    %v3918 = vld [vmem:[#allocation2 + $0x40] sm:$0xff]
    %3920 = vrot.lane.b32.xlu0 %v3917, 96
    %v3921 = vpop.permute.xlu0 %3920
    %v3922 = vsel %vm216, %v3921, 0
    %3924 = vmatprep.subr.mxu0 0.0
    %3925 = vmatpush1.msra.mxu0 %v2875
    %3926 = vmatprep.subr.mxu0 0.0
    %3927 = vmatpush1.msra.mxu0 %v2876
    %3928 = vmatprep.subr.mxu0 0.0
    %3929 = vmatpush1.msra.mxu0 %v2877
    %3930 = vmatprep.subr.mxu0 0.0
    %3931 = vmatpush1.msra.mxu0 %v2878
    %3932 = vmatprep.subr.mxu0 0.0
    %3933 = vmatpush1.msra.mxu0 0.0
    %3934 = vmatprep.subr.mxu0 0.0
    %3935 = vmatpush1.msra.mxu0 0.0
    %3936 = vmatprep.subr.mxu0 0.0
    %3937 = vmatpush1.msra.mxu0 0.0
    %3938 = vmatprep.subr.mxu0 0.0
    %3939 = vmatpush1.msra.mxu0 0.0
    %3940 = vmatprep.subr.mxu0 0.0
    %3941 = vmatpush1.msra.mxu0 0.0
    %3942 = vmatprep.subr.mxu0 0.0
    %3943 = vmatpush1.msra.mxu0 0.0
    %3944 = vmatprep.subr.mxu0 0.0
    %3945 = vmatpush1.msra.mxu0 0.0
    %3946 = vmatprep.subr.mxu0 0.0
    %3947 = vmatpush1.msra.mxu0 0.0
    %3948 = vmatprep.subr.mxu0 0.0
    %3949 = vmatpush1.msra.mxu0 0.0
    %3950 = vmatprep.subr.mxu0 0.0
    %3951 = vmatpush1.msra.mxu0 0.0
    %3952 = vmatprep.subr.mxu0 0.0
    %3953 = vmatpush1.msra.mxu0 0.0
    %3954 = vmatprep.subr.mxu0 0.0
    %3955 = vmatpush1.msra.mxu0 0.0
    %3956 = vmatprep.subr.mxu0 0.0
    %3957 = vmatpush1.msra.mxu0 0.0
    %3958 = vmatprep.subr.mxu0 0.0
    %3959 = vmatpush1.msra.mxu0 0.0
    %3960 = vmatprep.subr.mxu0 0.0
    %3961 = vmatpush1.msra.mxu0 0.0
    %3962 = vmatprep.subr.mxu0 0.0
    %3963 = vmatpush1.msra.mxu0 0.0
    %3964 = vmatprep.subr.mxu0 0.0
    %3965 = vmatpush1.msra.mxu0 0.0
    %3966 = vmatprep.subr.mxu0 0.0
    %3967 = vmatpush1.msra.mxu0 0.0
    %3968 = vmatprep.subr.mxu0 0.0
    %3969 = vmatpush1.msra.mxu0 0.0
    %3970 = vmatprep.subr.mxu0 0.0
    %3971 = vmatpush1.msra.mxu0 0.0
    %3972 = vmatprep.subr.mxu0 0.0
    %3973 = vmatpush1.msra.mxu0 0.0
    %3974 = vmatprep.subr.mxu0 0.0
    %3975 = vmatpush1.msra.mxu0 0.0
    %3976 = vmatprep.subr.mxu0 0.0
    %3977 = vmatpush1.msra.mxu0 0.0
    %3978 = vmatprep.subr.mxu0 0.0
    %3979 = vmatpush1.msra.mxu0 0.0
    %3980 = vmatprep.subr.mxu0 0.0
    %3981 = vmatpush1.msra.mxu0 0.0
    %3982 = vmatprep.subr.mxu0 0.0
    %3983 = vmatpush1.msra.mxu0 0.0
    %3984 = vmatprep.subr.mxu0 0.0
    %3985 = vmatpush1.msra.mxu0 0.0
    %3986 = vmatprep.subr.mxu0 0.0
    %3987 = vmatpush1.msra.mxu0 0.0
    %3988 = vmatprep.mubr.f32.mxu0 0.0
    %3989 = vmatmul.mubr.f32.gmra.mrb[0].mxu0 %v3922
    %v3990 = vpop.f32.mrb[0].mxu0
    %v3991 = vadd.f32 %v3103, %v3990
    %v3992 = vpop.f32.mrb[0].mxu0
    %3993 = vdwg.mxu0
    %v3994 = vadd.f32 %v3918, %v3991
    %v3995 = vxor.u32 %v3994, 2147483648
    %v3996 = vmul.f32 %v3995, 1.442695
    %v3997 = vpow.pop %v3996
    %v3998 = vadd.f32 %v3997, 1.0
    %v3999 = vrcp.pop %v3998
    %v4000 = vmul.f32 1.0, %v3999
    %4002 = vrot.lane.b32.xlu0 %v3991, 64
    %v4003 = vpop.permute.xlu0 %4002
    %v4005 = vmul.f32 %v4000, %v4003
    %4007 = vrot.lane.b32.xlu0 %v4005, 64
    %v4008 = vpop.permute.xlu0 %4007
    %v4010 = vadd.f32 %v3918, %v4008
    %v4011 = vtanh.pop %v4010
    %v4012 = vsub.f32 1.0, %v4000
    %4014 = vrot.lane.b32.xlu0 %v4011, 96
    %v4015 = vpop.permute.xlu0 %4014
    %v4017 = vmul.f32 %v4012, %v4015
    %v4018 = vmul.f32 %v4000, %v3917
    %v4019 = vadd.f32 %v4017, %v4018
    %v4020 = vld [vmem:[#allocation2 + $0x48] sm:$0xff]
    %4022 = vrot.lane.b32.xlu0 %v4019, 96
    %v4023 = vpop.permute.xlu0 %4022
    %v4024 = vsel %vm216, %v4023, 0
    %4026 = vmatprep.subr.mxu0 0.0
    %4027 = vmatpush1.msra.mxu0 %v2875
    %4028 = vmatprep.subr.mxu0 0.0
    %4029 = vmatpush1.msra.mxu0 %v2876
    %4030 = vmatprep.subr.mxu0 0.0
    %4031 = vmatpush1.msra.mxu0 %v2877
    %4032 = vmatprep.subr.mxu0 0.0
    %4033 = vmatpush1.msra.mxu0 %v2878
    %4034 = vmatprep.subr.mxu0 0.0
    %4035 = vmatpush1.msra.mxu0 0.0
    %4036 = vmatprep.subr.mxu0 0.0
    %4037 = vmatpush1.msra.mxu0 0.0
    %4038 = vmatprep.subr.mxu0 0.0
    %4039 = vmatpush1.msra.mxu0 0.0
    %4040 = vmatprep.subr.mxu0 0.0
    %4041 = vmatpush1.msra.mxu0 0.0
    %4042 = vmatprep.subr.mxu0 0.0
    %4043 = vmatpush1.msra.mxu0 0.0
    %4044 = vmatprep.subr.mxu0 0.0
    %4045 = vmatpush1.msra.mxu0 0.0
    %4046 = vmatprep.subr.mxu0 0.0
    %4047 = vmatpush1.msra.mxu0 0.0
    %4048 = vmatprep.subr.mxu0 0.0
    %4049 = vmatpush1.msra.mxu0 0.0
    %4050 = vmatprep.subr.mxu0 0.0
    %4051 = vmatpush1.msra.mxu0 0.0
    %4052 = vmatprep.subr.mxu0 0.0
    %4053 = vmatpush1.msra.mxu0 0.0
    %4054 = vmatprep.subr.mxu0 0.0
    %4055 = vmatpush1.msra.mxu0 0.0
    %4056 = vmatprep.subr.mxu0 0.0
    %4057 = vmatpush1.msra.mxu0 0.0
    %4058 = vmatprep.subr.mxu0 0.0
    %4059 = vmatpush1.msra.mxu0 0.0
    %4060 = vmatprep.subr.mxu0 0.0
    %4061 = vmatpush1.msra.mxu0 0.0
    %4062 = vmatprep.subr.mxu0 0.0
    %4063 = vmatpush1.msra.mxu0 0.0
    %4064 = vmatprep.subr.mxu0 0.0
    %4065 = vmatpush1.msra.mxu0 0.0
    %4066 = vmatprep.subr.mxu0 0.0
    %4067 = vmatpush1.msra.mxu0 0.0
    %4068 = vmatprep.subr.mxu0 0.0
    %4069 = vmatpush1.msra.mxu0 0.0
    %4070 = vmatprep.subr.mxu0 0.0
    %4071 = vmatpush1.msra.mxu0 0.0
    %4072 = vmatprep.subr.mxu0 0.0
    %4073 = vmatpush1.msra.mxu0 0.0
    %4074 = vmatprep.subr.mxu0 0.0
    %4075 = vmatpush1.msra.mxu0 0.0
    %4076 = vmatprep.subr.mxu0 0.0
    %4077 = vmatpush1.msra.mxu0 0.0
    %4078 = vmatprep.subr.mxu0 0.0
    %4079 = vmatpush1.msra.mxu0 0.0
    %4080 = vmatprep.subr.mxu0 0.0
    %4081 = vmatpush1.msra.mxu0 0.0
    %4082 = vmatprep.subr.mxu0 0.0
    %4083 = vmatpush1.msra.mxu0 0.0
    %4084 = vmatprep.subr.mxu0 0.0
    %4085 = vmatpush1.msra.mxu0 0.0
    %4086 = vmatprep.subr.mxu0 0.0
    %4087 = vmatpush1.msra.mxu0 0.0
    %4088 = vmatprep.subr.mxu0 0.0
    %4089 = vmatpush1.msra.mxu0 0.0
    %4090 = vmatprep.mubr.f32.mxu0 0.0
    %4091 = vmatmul.mubr.f32.gmra.mrb[0].mxu0 %v4024
    %v4092 = vpop.f32.mrb[0].mxu0
    %v4093 = vadd.f32 %v3103, %v4092
    %v4094 = vpop.f32.mrb[0].mxu0
    %4095 = vdwg.mxu0
    %v4096 = vadd.f32 %v4020, %v4093
    %v4097 = vxor.u32 %v4096, 2147483648
    %v4098 = vmul.f32 %v4097, 1.442695
    %v4099 = vpow.pop %v4098
    %v4100 = vadd.f32 %v4099, 1.0
    %v4101 = vrcp.pop %v4100
    %v4102 = vmul.f32 1.0, %v4101
    %4104 = vrot.lane.b32.xlu0 %v4093, 64
    %v4105 = vpop.permute.xlu0 %4104
    %v4107 = vmul.f32 %v4102, %v4105
    %4109 = vrot.lane.b32.xlu0 %v4107, 64
    %v4110 = vpop.permute.xlu0 %4109
    %v4112 = vadd.f32 %v4020, %v4110
    %v4113 = vtanh.pop %v4112
    %v4114 = vsub.f32 1.0, %v4102
    %4116 = vrot.lane.b32.xlu0 %v4113, 96
    %v4117 = vpop.permute.xlu0 %4116
    %v4119 = vmul.f32 %v4114, %v4117
    %v4120 = vmul.f32 %v4102, %v4019
    %v4121 = vadd.f32 %v4119, %v4120
    %v4122 = vld [vmem:[#allocation2 + $0x50] sm:$0xff]
    %4124 = vrot.lane.b32.xlu0 %v4121, 96
    %v4125 = vpop.permute.xlu0 %4124
    %v4126 = vsel %vm216, %v4125, 0
    %4128 = vmatprep.subr.mxu0 0.0
    %4129 = vmatpush1.msra.mxu0 %v2875
    %4130 = vmatprep.subr.mxu0 0.0
    %4131 = vmatpush1.msra.mxu0 %v2876
    %4132 = vmatprep.subr.mxu0 0.0
    %4133 = vmatpush1.msra.mxu0 %v2877
    %4134 = vmatprep.subr.mxu0 0.0
    %4135 = vmatpush1.msra.mxu0 %v2878
    %4136 = vmatprep.subr.mxu0 0.0
    %4137 = vmatpush1.msra.mxu0 0.0
    %4138 = vmatprep.subr.mxu0 0.0
    %4139 = vmatpush1.msra.mxu0 0.0
    %4140 = vmatprep.subr.mxu0 0.0
    %4141 = vmatpush1.msra.mxu0 0.0
    %4142 = vmatprep.subr.mxu0 0.0
    %4143 = vmatpush1.msra.mxu0 0.0
    %4144 = vmatprep.subr.mxu0 0.0
    %4145 = vmatpush1.msra.mxu0 0.0
    %4146 = vmatprep.subr.mxu0 0.0
    %4147 = vmatpush1.msra.mxu0 0.0
    %4148 = vmatprep.subr.mxu0 0.0
    %4149 = vmatpush1.msra.mxu0 0.0
    %4150 = vmatprep.subr.mxu0 0.0
    %4151 = vmatpush1.msra.mxu0 0.0
    %4152 = vmatprep.subr.mxu0 0.0
    %4153 = vmatpush1.msra.mxu0 0.0
    %4154 = vmatprep.subr.mxu0 0.0
    %4155 = vmatpush1.msra.mxu0 0.0
    %4156 = vmatprep.subr.mxu0 0.0
    %4157 = vmatpush1.msra.mxu0 0.0
    %4158 = vmatprep.subr.mxu0 0.0
    %4159 = vmatpush1.msra.mxu0 0.0
    %4160 = vmatprep.subr.mxu0 0.0
    %4161 = vmatpush1.msra.mxu0 0.0
    %4162 = vmatprep.subr.mxu0 0.0
    %4163 = vmatpush1.msra.mxu0 0.0
    %4164 = vmatprep.subr.mxu0 0.0
    %4165 = vmatpush1.msra.mxu0 0.0
    %4166 = vmatprep.subr.mxu0 0.0
    %4167 = vmatpush1.msra.mxu0 0.0
    %4168 = vmatprep.subr.mxu0 0.0
    %4169 = vmatpush1.msra.mxu0 0.0
    %4170 = vmatprep.subr.mxu0 0.0
    %4171 = vmatpush1.msra.mxu0 0.0
    %4172 = vmatprep.subr.mxu0 0.0
    %4173 = vmatpush1.msra.mxu0 0.0
    %4174 = vmatprep.subr.mxu0 0.0
    %4175 = vmatpush1.msra.mxu0 0.0
    %4176 = vmatprep.subr.mxu0 0.0
    %4177 = vmatpush1.msra.mxu0 0.0
    %4178 = vmatprep.subr.mxu0 0.0
    %4179 = vmatpush1.msra.mxu0 0.0
    %4180 = vmatprep.subr.mxu0 0.0
    %4181 = vmatpush1.msra.mxu0 0.0
    %4182 = vmatprep.subr.mxu0 0.0
    %4183 = vmatpush1.msra.mxu0 0.0
    %4184 = vmatprep.subr.mxu0 0.0
    %4185 = vmatpush1.msra.mxu0 0.0
    %4186 = vmatprep.subr.mxu0 0.0
    %4187 = vmatpush1.msra.mxu0 0.0
    %4188 = vmatprep.subr.mxu0 0.0
    %4189 = vmatpush1.msra.mxu0 0.0
    %4190 = vmatprep.subr.mxu0 0.0
    %4191 = vmatpush1.msra.mxu0 0.0
    %4192 = vmatprep.mubr.f32.mxu0 0.0
    %4193 = vmatmul.mubr.f32.gmra.mrb[0].mxu0 %v4126
    %v4194 = vpop.f32.mrb[0].mxu0
    %v4195 = vadd.f32 %v3103, %v4194
    %v4196 = vpop.f32.mrb[0].mxu0
    %4197 = vdwg.mxu0
    %v4198 = vadd.f32 %v4122, %v4195
    %v4199 = vxor.u32 %v4198, 2147483648
    %v4200 = vmul.f32 %v4199, 1.442695
    %v4201 = vpow.pop %v4200
    %v4202 = vadd.f32 %v4201, 1.0
    %v4203 = vrcp.pop %v4202
    %v4204 = vmul.f32 1.0, %v4203
    %4206 = vrot.lane.b32.xlu0 %v4195, 64
    %v4207 = vpop.permute.xlu0 %4206
    %v4209 = vmul.f32 %v4204, %v4207
    %4211 = vrot.lane.b32.xlu0 %v4209, 64
    %v4212 = vpop.permute.xlu0 %4211
    %v4214 = vadd.f32 %v4122, %v4212
    %v4215 = vtanh.pop %v4214
    %v4216 = vsub.f32 1.0, %v4204
    %4218 = vrot.lane.b32.xlu0 %v4215, 96
    %v4219 = vpop.permute.xlu0 %4218
    %v4221 = vmul.f32 %v4216, %v4219
    %v4222 = vmul.f32 %v4204, %v4121
    %v4223 = vadd.f32 %v4221, %v4222
    %v4224 = vld [vmem:[#allocation2 + $0x58] sm:$0xff]
    %4226 = vrot.lane.b32.xlu0 %v4223, 96
    %v4227 = vpop.permute.xlu0 %4226
    %v4228 = vsel %vm216, %v4227, 0
    %4230 = vmatprep.subr.mxu0 0.0
    %4231 = vmatpush1.msra.mxu0 %v2875
    %4232 = vmatprep.subr.mxu0 0.0
    %4233 = vmatpush1.msra.mxu0 %v2876
    %4234 = vmatprep.subr.mxu0 0.0
    %4235 = vmatpush1.msra.mxu0 %v2877
    %4236 = vmatprep.subr.mxu0 0.0
    %4237 = vmatpush1.msra.mxu0 %v2878
    %4238 = vmatprep.subr.mxu0 0.0
    %4239 = vmatpush1.msra.mxu0 0.0
    %4240 = vmatprep.subr.mxu0 0.0
    %4241 = vmatpush1.msra.mxu0 0.0
    %4242 = vmatprep.subr.mxu0 0.0
    %4243 = vmatpush1.msra.mxu0 0.0
    %4244 = vmatprep.subr.mxu0 0.0
    %4245 = vmatpush1.msra.mxu0 0.0
    %4246 = vmatprep.subr.mxu0 0.0
    %4247 = vmatpush1.msra.mxu0 0.0
    %4248 = vmatprep.subr.mxu0 0.0
    %4249 = vmatpush1.msra.mxu0 0.0
    %4250 = vmatprep.subr.mxu0 0.0
    %4251 = vmatpush1.msra.mxu0 0.0
    %4252 = vmatprep.subr.mxu0 0.0
    %4253 = vmatpush1.msra.mxu0 0.0
    %4254 = vmatprep.subr.mxu0 0.0
    %4255 = vmatpush1.msra.mxu0 0.0
    %4256 = vmatprep.subr.mxu0 0.0
    %4257 = vmatpush1.msra.mxu0 0.0
    %4258 = vmatprep.subr.mxu0 0.0
    %4259 = vmatpush1.msra.mxu0 0.0
    %4260 = vmatprep.subr.mxu0 0.0
    %4261 = vmatpush1.msra.mxu0 0.0
    %4262 = vmatprep.subr.mxu0 0.0
    %4263 = vmatpush1.msra.mxu0 0.0
    %4264 = vmatprep.subr.mxu0 0.0
    %4265 = vmatpush1.msra.mxu0 0.0
    %4266 = vmatprep.subr.mxu0 0.0
    %4267 = vmatpush1.msra.mxu0 0.0
    %4268 = vmatprep.subr.mxu0 0.0
    %4269 = vmatpush1.msra.mxu0 0.0
    %4270 = vmatprep.subr.mxu0 0.0
    %4271 = vmatpush1.msra.mxu0 0.0
    %4272 = vmatprep.subr.mxu0 0.0
    %4273 = vmatpush1.msra.mxu0 0.0
    %4274 = vmatprep.subr.mxu0 0.0
    %4275 = vmatpush1.msra.mxu0 0.0
    %4276 = vmatprep.subr.mxu0 0.0
    %4277 = vmatpush1.msra.mxu0 0.0
    %4278 = vmatprep.subr.mxu0 0.0
    %4279 = vmatpush1.msra.mxu0 0.0
    %4280 = vmatprep.subr.mxu0 0.0
    %4281 = vmatpush1.msra.mxu0 0.0
    %4282 = vmatprep.subr.mxu0 0.0
    %4283 = vmatpush1.msra.mxu0 0.0
    %4284 = vmatprep.subr.mxu0 0.0
    %4285 = vmatpush1.msra.mxu0 0.0
    %4286 = vmatprep.subr.mxu0 0.0
    %4287 = vmatpush1.msra.mxu0 0.0
    %4288 = vmatprep.subr.mxu0 0.0
    %4289 = vmatpush1.msra.mxu0 0.0
    %4290 = vmatprep.subr.mxu0 0.0
    %4291 = vmatpush1.msra.mxu0 0.0
    %4292 = vmatprep.subr.mxu0 0.0
    %4293 = vmatpush1.msra.mxu0 0.0
    %4294 = vmatprep.mubr.f32.mxu0 0.0
    %4295 = vmatmul.mubr.f32.gmra.mrb[0].mxu0 %v4228
    %v4296 = vpop.f32.mrb[0].mxu0
    %v4297 = vadd.f32 %v3103, %v4296
    %v4298 = vpop.f32.mrb[0].mxu0
    %4299 = vdwg.mxu0
    %v4300 = vadd.f32 %v4224, %v4297
    %v4301 = vxor.u32 %v4300, 2147483648
    %v4302 = vmul.f32 %v4301, 1.442695
    %v4303 = vpow.pop %v4302
    %v4304 = vadd.f32 %v4303, 1.0
    %v4305 = vrcp.pop %v4304
    %v4306 = vmul.f32 1.0, %v4305
    %4308 = vrot.lane.b32.xlu0 %v4297, 64
    %v4309 = vpop.permute.xlu0 %4308
    %v4311 = vmul.f32 %v4306, %v4309
    %4313 = vrot.lane.b32.xlu0 %v4311, 64
    %v4314 = vpop.permute.xlu0 %4313
    %v4316 = vadd.f32 %v4224, %v4314
    %v4317 = vtanh.pop %v4316
    %v4318 = vsub.f32 1.0, %v4306
    %4320 = vrot.lane.b32.xlu0 %v4317, 96
    %v4321 = vpop.permute.xlu0 %4320
    %v4323 = vmul.f32 %v4318, %v4321
    %v4324 = vmul.f32 %v4306, %v4223
    %v4325 = vadd.f32 %v4323, %v4324
    %v4326 = vld [vmem:[#allocation2 + $0x60] sm:$0xff]
    %4328 = vrot.lane.b32.xlu0 %v4325, 96
    %v4329 = vpop.permute.xlu0 %4328
    %v4330 = vsel %vm216, %v4329, 0
    %4332 = vmatprep.subr.mxu0 0.0
    %4333 = vmatpush1.msra.mxu0 %v2875
    %4334 = vmatprep.subr.mxu0 0.0
    %4335 = vmatpush1.msra.mxu0 %v2876
    %4336 = vmatprep.subr.mxu0 0.0
    %4337 = vmatpush1.msra.mxu0 %v2877
    %4338 = vmatprep.subr.mxu0 0.0
    %4339 = vmatpush1.msra.mxu0 %v2878
    %4340 = vmatprep.subr.mxu0 0.0
    %4341 = vmatpush1.msra.mxu0 0.0
    %4342 = vmatprep.subr.mxu0 0.0
    %4343 = vmatpush1.msra.mxu0 0.0
    %4344 = vmatprep.subr.mxu0 0.0
    %4345 = vmatpush1.msra.mxu0 0.0
    %4346 = vmatprep.subr.mxu0 0.0
    %4347 = vmatpush1.msra.mxu0 0.0
    %4348 = vmatprep.subr.mxu0 0.0
    %4349 = vmatpush1.msra.mxu0 0.0
    %4350 = vmatprep.subr.mxu0 0.0
    %4351 = vmatpush1.msra.mxu0 0.0
    %4352 = vmatprep.subr.mxu0 0.0
    %4353 = vmatpush1.msra.mxu0 0.0
    %4354 = vmatprep.subr.mxu0 0.0
    %4355 = vmatpush1.msra.mxu0 0.0
    %4356 = vmatprep.subr.mxu0 0.0
    %4357 = vmatpush1.msra.mxu0 0.0
    %4358 = vmatprep.subr.mxu0 0.0
    %4359 = vmatpush1.msra.mxu0 0.0
    %4360 = vmatprep.subr.mxu0 0.0
    %4361 = vmatpush1.msra.mxu0 0.0
    %4362 = vmatprep.subr.mxu0 0.0
    %4363 = vmatpush1.msra.mxu0 0.0
    %4364 = vmatprep.subr.mxu0 0.0
    %4365 = vmatpush1.msra.mxu0 0.0
    %4366 = vmatprep.subr.mxu0 0.0
    %4367 = vmatpush1.msra.mxu0 0.0
    %4368 = vmatprep.subr.mxu0 0.0
    %4369 = vmatpush1.msra.mxu0 0.0
    %4370 = vmatprep.subr.mxu0 0.0
    %4371 = vmatpush1.msra.mxu0 0.0
    %4372 = vmatprep.subr.mxu0 0.0
    %4373 = vmatpush1.msra.mxu0 0.0
    %4374 = vmatprep.subr.mxu0 0.0
    %4375 = vmatpush1.msra.mxu0 0.0
    %4376 = vmatprep.subr.mxu0 0.0
    %4377 = vmatpush1.msra.mxu0 0.0
    %4378 = vmatprep.subr.mxu0 0.0
    %4379 = vmatpush1.msra.mxu0 0.0
    %4380 = vmatprep.subr.mxu0 0.0
    %4381 = vmatpush1.msra.mxu0 0.0
    %4382 = vmatprep.subr.mxu0 0.0
    %4383 = vmatpush1.msra.mxu0 0.0
    %4384 = vmatprep.subr.mxu0 0.0
    %4385 = vmatpush1.msra.mxu0 0.0
    %4386 = vmatprep.subr.mxu0 0.0
    %4387 = vmatpush1.msra.mxu0 0.0
    %4388 = vmatprep.subr.mxu0 0.0
    %4389 = vmatpush1.msra.mxu0 0.0
    %4390 = vmatprep.subr.mxu0 0.0
    %4391 = vmatpush1.msra.mxu0 0.0
    %4392 = vmatprep.subr.mxu0 0.0
    %4393 = vmatpush1.msra.mxu0 0.0
    %4394 = vmatprep.subr.mxu0 0.0
    %4395 = vmatpush1.msra.mxu0 0.0
    %4396 = vmatprep.mubr.f32.mxu0 0.0
    %4397 = vmatmul.mubr.f32.gmra.mrb[0].mxu0 %v4330
    %v4398 = vpop.f32.mrb[0].mxu0
    %v4399 = vadd.f32 %v3103, %v4398
    %v4400 = vpop.f32.mrb[0].mxu0
    %4401 = vdwg.mxu0
    %v4402 = vadd.f32 %v4326, %v4399
    %v4403 = vxor.u32 %v4402, 2147483648
    %v4404 = vmul.f32 %v4403, 1.442695
    %v4405 = vpow.pop %v4404
    %v4406 = vadd.f32 %v4405, 1.0
    %v4407 = vrcp.pop %v4406
    %v4408 = vmul.f32 1.0, %v4407
    %4410 = vrot.lane.b32.xlu0 %v4399, 64
    %v4411 = vpop.permute.xlu0 %4410
    %v4413 = vmul.f32 %v4408, %v4411
    %4415 = vrot.lane.b32.xlu0 %v4413, 64
    %v4416 = vpop.permute.xlu0 %4415
    %v4418 = vadd.f32 %v4326, %v4416
    %v4419 = vtanh.pop %v4418
    %v4420 = vsub.f32 1.0, %v4408
    %4422 = vrot.lane.b32.xlu0 %v4419, 96
    %v4423 = vpop.permute.xlu0 %4422
    %v4425 = vmul.f32 %v4420, %v4423
    %v4426 = vmul.f32 %v4408, %v4325
    %v4427 = vadd.f32 %v4425, %v4426
    %v4428 = vld [vmem:[#allocation2 + $0x68] sm:$0xff]
    %4430 = vrot.lane.b32.xlu0 %v4427, 96
    %v4431 = vpop.permute.xlu0 %4430
    %v4432 = vsel %vm216, %v4431, 0
    %4434 = vmatprep.subr.mxu0 0.0
    %4435 = vmatpush1.msra.mxu0 %v2875
    %4436 = vmatprep.subr.mxu0 0.0
    %4437 = vmatpush1.msra.mxu0 %v2876
    %4438 = vmatprep.subr.mxu0 0.0
    %4439 = vmatpush1.msra.mxu0 %v2877
    %4440 = vmatprep.subr.mxu0 0.0
    %4441 = vmatpush1.msra.mxu0 %v2878
    %4442 = vmatprep.subr.mxu0 0.0
    %4443 = vmatpush1.msra.mxu0 0.0
    %4444 = vmatprep.subr.mxu0 0.0
    %4445 = vmatpush1.msra.mxu0 0.0
    %4446 = vmatprep.subr.mxu0 0.0
    %4447 = vmatpush1.msra.mxu0 0.0
    %4448 = vmatprep.subr.mxu0 0.0
    %4449 = vmatpush1.msra.mxu0 0.0
    %4450 = vmatprep.subr.mxu0 0.0
    %4451 = vmatpush1.msra.mxu0 0.0
    %4452 = vmatprep.subr.mxu0 0.0
    %4453 = vmatpush1.msra.mxu0 0.0
    %4454 = vmatprep.subr.mxu0 0.0
    %4455 = vmatpush1.msra.mxu0 0.0
    %4456 = vmatprep.subr.mxu0 0.0
    %4457 = vmatpush1.msra.mxu0 0.0
    %4458 = vmatprep.subr.mxu0 0.0
    %4459 = vmatpush1.msra.mxu0 0.0
    %4460 = vmatprep.subr.mxu0 0.0
    %4461 = vmatpush1.msra.mxu0 0.0
    %4462 = vmatprep.subr.mxu0 0.0
    %4463 = vmatpush1.msra.mxu0 0.0
    %4464 = vmatprep.subr.mxu0 0.0
    %4465 = vmatpush1.msra.mxu0 0.0
    %4466 = vmatprep.subr.mxu0 0.0
    %4467 = vmatpush1.msra.mxu0 0.0
    %4468 = vmatprep.subr.mxu0 0.0
    %4469 = vmatpush1.msra.mxu0 0.0
    %4470 = vmatprep.subr.mxu0 0.0
    %4471 = vmatpush1.msra.mxu0 0.0
    %4472 = vmatprep.subr.mxu0 0.0
    %4473 = vmatpush1.msra.mxu0 0.0
    %4474 = vmatprep.subr.mxu0 0.0
    %4475 = vmatpush1.msra.mxu0 0.0
    %4476 = vmatprep.subr.mxu0 0.0
    %4477 = vmatpush1.msra.mxu0 0.0
    %4478 = vmatprep.subr.mxu0 0.0
    %4479 = vmatpush1.msra.mxu0 0.0
    %4480 = vmatprep.subr.mxu0 0.0
    %4481 = vmatpush1.msra.mxu0 0.0
    %4482 = vmatprep.subr.mxu0 0.0
    %4483 = vmatpush1.msra.mxu0 0.0
    %4484 = vmatprep.subr.mxu0 0.0
    %4485 = vmatpush1.msra.mxu0 0.0
    %4486 = vmatprep.subr.mxu0 0.0
    %4487 = vmatpush1.msra.mxu0 0.0
    %4488 = vmatprep.subr.mxu0 0.0
    %4489 = vmatpush1.msra.mxu0 0.0
    %4490 = vmatprep.subr.mxu0 0.0
    %4491 = vmatpush1.msra.mxu0 0.0
    %4492 = vmatprep.subr.mxu0 0.0
    %4493 = vmatpush1.msra.mxu0 0.0
    %4494 = vmatprep.subr.mxu0 0.0
    %4495 = vmatpush1.msra.mxu0 0.0
    %4496 = vmatprep.subr.mxu0 0.0
    %4497 = vmatpush1.msra.mxu0 0.0
    %4498 = vmatprep.mubr.f32.mxu0 0.0
    %4499 = vmatmul.mubr.f32.gmra.mrb[0].mxu0 %v4432
    %v4500 = vpop.f32.mrb[0].mxu0
    %v4501 = vadd.f32 %v3103, %v4500
    %v4502 = vpop.f32.mrb[0].mxu0
    %4503 = vdwg.mxu0
    %v4504 = vadd.f32 %v4428, %v4501
    %v4505 = vxor.u32 %v4504, 2147483648
    %v4506 = vmul.f32 %v4505, 1.442695
    %v4507 = vpow.pop %v4506
    %v4508 = vadd.f32 %v4507, 1.0
    %v4509 = vrcp.pop %v4508
    %v4510 = vmul.f32 1.0, %v4509
    %4512 = vrot.lane.b32.xlu0 %v4501, 64
    %v4513 = vpop.permute.xlu0 %4512
    %v4515 = vmul.f32 %v4510, %v4513
    %4517 = vrot.lane.b32.xlu0 %v4515, 64
    %v4518 = vpop.permute.xlu0 %4517
    %v4520 = vadd.f32 %v4428, %v4518
    %v4521 = vtanh.pop %v4520
    %v4522 = vsub.f32 1.0, %v4510
    %4524 = vrot.lane.b32.xlu0 %v4521, 96
    %v4525 = vpop.permute.xlu0 %4524
    %v4527 = vmul.f32 %v4522, %v4525
    %v4528 = vmul.f32 %v4510, %v4427
    %v4529 = vadd.f32 %v4527, %v4528
    %v4530 = vld [vmem:[#allocation2 + $0x70] sm:$0xff]
    %4532 = vrot.lane.b32.xlu0 %v4529, 96
    %v4533 = vpop.permute.xlu0 %4532
    %v4534 = vsel %vm216, %v4533, 0
    %4536 = vmatprep.subr.mxu0 0.0
    %4537 = vmatpush1.msra.mxu0 %v2875
    %4538 = vmatprep.subr.mxu0 0.0
    %4539 = vmatpush1.msra.mxu0 %v2876
    %4540 = vmatprep.subr.mxu0 0.0
    %4541 = vmatpush1.msra.mxu0 %v2877
    %4542 = vmatprep.subr.mxu0 0.0
    %4543 = vmatpush1.msra.mxu0 %v2878
    %4544 = vmatprep.subr.mxu0 0.0
    %4545 = vmatpush1.msra.mxu0 0.0
    %4546 = vmatprep.subr.mxu0 0.0
    %4547 = vmatpush1.msra.mxu0 0.0
    %4548 = vmatprep.subr.mxu0 0.0
    %4549 = vmatpush1.msra.mxu0 0.0
    %4550 = vmatprep.subr.mxu0 0.0
    %4551 = vmatpush1.msra.mxu0 0.0
    %4552 = vmatprep.subr.mxu0 0.0
    %4553 = vmatpush1.msra.mxu0 0.0
    %4554 = vmatprep.subr.mxu0 0.0
    %4555 = vmatpush1.msra.mxu0 0.0
    %4556 = vmatprep.subr.mxu0 0.0
    %4557 = vmatpush1.msra.mxu0 0.0
    %4558 = vmatprep.subr.mxu0 0.0
    %4559 = vmatpush1.msra.mxu0 0.0
    %4560 = vmatprep.subr.mxu0 0.0
    %4561 = vmatpush1.msra.mxu0 0.0
    %4562 = vmatprep.subr.mxu0 0.0
    %4563 = vmatpush1.msra.mxu0 0.0
    %4564 = vmatprep.subr.mxu0 0.0
    %4565 = vmatpush1.msra.mxu0 0.0
    %4566 = vmatprep.subr.mxu0 0.0
    %4567 = vmatpush1.msra.mxu0 0.0
    %4568 = vmatprep.subr.mxu0 0.0
    %4569 = vmatpush1.msra.mxu0 0.0
    %4570 = vmatprep.subr.mxu0 0.0
    %4571 = vmatpush1.msra.mxu0 0.0
    %4572 = vmatprep.subr.mxu0 0.0
    %4573 = vmatpush1.msra.mxu0 0.0
    %4574 = vmatprep.subr.mxu0 0.0
    %4575 = vmatpush1.msra.mxu0 0.0
    %4576 = vmatprep.subr.mxu0 0.0
    %4577 = vmatpush1.msra.mxu0 0.0
    %4578 = vmatprep.subr.mxu0 0.0
    %4579 = vmatpush1.msra.mxu0 0.0
    %4580 = vmatprep.subr.mxu0 0.0
    %4581 = vmatpush1.msra.mxu0 0.0
    %4582 = vmatprep.subr.mxu0 0.0
    %4583 = vmatpush1.msra.mxu0 0.0
    %4584 = vmatprep.subr.mxu0 0.0
    %4585 = vmatpush1.msra.mxu0 0.0
    %4586 = vmatprep.subr.mxu0 0.0
    %4587 = vmatpush1.msra.mxu0 0.0
    %4588 = vmatprep.subr.mxu0 0.0
    %4589 = vmatpush1.msra.mxu0 0.0
    %4590 = vmatprep.subr.mxu0 0.0
    %4591 = vmatpush1.msra.mxu0 0.0
    %4592 = vmatprep.subr.mxu0 0.0
    %4593 = vmatpush1.msra.mxu0 0.0
    %4594 = vmatprep.subr.mxu0 0.0
    %4595 = vmatpush1.msra.mxu0 0.0
    %4596 = vmatprep.subr.mxu0 0.0
    %4597 = vmatpush1.msra.mxu0 0.0
    %4598 = vmatprep.subr.mxu0 0.0
    %4599 = vmatpush1.msra.mxu0 0.0
    %4600 = vmatprep.mubr.f32.mxu0 0.0
    %4601 = vmatmul.mubr.f32.gmra.mrb[0].mxu0 %v4534
    %v4602 = vpop.f32.mrb[0].mxu0
    %v4603 = vadd.f32 %v3103, %v4602
    %v4604 = vpop.f32.mrb[0].mxu0
    %4605 = vdwg.mxu0
    %v4606 = vadd.f32 %v4530, %v4603
    %v4607 = vxor.u32 %v4606, 2147483648
    %v4608 = vmul.f32 %v4607, 1.442695
    %v4609 = vpow.pop %v4608
    %v4610 = vadd.f32 %v4609, 1.0
    %v4611 = vrcp.pop %v4610
    %v4612 = vmul.f32 1.0, %v4611
    %4614 = vrot.lane.b32.xlu0 %v4603, 64
    %v4615 = vpop.permute.xlu0 %4614
    %v4617 = vmul.f32 %v4612, %v4615
    %4619 = vrot.lane.b32.xlu0 %v4617, 64
    %v4620 = vpop.permute.xlu0 %4619
    %v4622 = vadd.f32 %v4530, %v4620
    %v4623 = vtanh.pop %v4622
    %v4624 = vsub.f32 1.0, %v4612
    %4626 = vrot.lane.b32.xlu0 %v4623, 96
    %v4627 = vpop.permute.xlu0 %4626
    %v4629 = vmul.f32 %v4624, %v4627
    %v4630 = vmul.f32 %v4612, %v4529
    %v4631 = vadd.f32 %v4629, %v4630
    %v4632 = vld [vmem:[#allocation2 + $0x78] sm:$0xff]
    %4634 = vrot.lane.b32.xlu0 %v4631, 96
    %v4635 = vpop.permute.xlu0 %4634
    %v4636 = vsel %vm216, %v4635, 0
    %4638 = vmatprep.subr.mxu0 0.0
    %4639 = vmatpush1.msra.mxu0 %v2875
    %4640 = vmatprep.subr.mxu0 0.0
    %4641 = vmatpush1.msra.mxu0 %v2876
    %4642 = vmatprep.subr.mxu0 0.0
    %4643 = vmatpush1.msra.mxu0 %v2877
    %4644 = vmatprep.subr.mxu0 0.0
    %4645 = vmatpush1.msra.mxu0 %v2878
    %4646 = vmatprep.subr.mxu0 0.0
    %4647 = vmatpush1.msra.mxu0 0.0
    %4648 = vmatprep.subr.mxu0 0.0
    %4649 = vmatpush1.msra.mxu0 0.0
    %4650 = vmatprep.subr.mxu0 0.0
    %4651 = vmatpush1.msra.mxu0 0.0
    %4652 = vmatprep.subr.mxu0 0.0
    %4653 = vmatpush1.msra.mxu0 0.0
    %4654 = vmatprep.subr.mxu0 0.0
    %4655 = vmatpush1.msra.mxu0 0.0
    %4656 = vmatprep.subr.mxu0 0.0
    %4657 = vmatpush1.msra.mxu0 0.0
    %4658 = vmatprep.subr.mxu0 0.0
    %4659 = vmatpush1.msra.mxu0 0.0
    %4660 = vmatprep.subr.mxu0 0.0
    %4661 = vmatpush1.msra.mxu0 0.0
    %4662 = vmatprep.subr.mxu0 0.0
    %4663 = vmatpush1.msra.mxu0 0.0
    %4664 = vmatprep.subr.mxu0 0.0
    %4665 = vmatpush1.msra.mxu0 0.0
    %4666 = vmatprep.subr.mxu0 0.0
    %4667 = vmatpush1.msra.mxu0 0.0
    %4668 = vmatprep.subr.mxu0 0.0
    %4669 = vmatpush1.msra.mxu0 0.0
    %4670 = vmatprep.subr.mxu0 0.0
    %4671 = vmatpush1.msra.mxu0 0.0
    %4672 = vmatprep.subr.mxu0 0.0
    %4673 = vmatpush1.msra.mxu0 0.0
    %4674 = vmatprep.subr.mxu0 0.0
    %4675 = vmatpush1.msra.mxu0 0.0
    %4676 = vmatprep.subr.mxu0 0.0
    %4677 = vmatpush1.msra.mxu0 0.0
    %4678 = vmatprep.subr.mxu0 0.0
    %4679 = vmatpush1.msra.mxu0 0.0
    %4680 = vmatprep.subr.mxu0 0.0
    %4681 = vmatpush1.msra.mxu0 0.0
    %4682 = vmatprep.subr.mxu0 0.0
    %4683 = vmatpush1.msra.mxu0 0.0
    %4684 = vmatprep.subr.mxu0 0.0
    %4685 = vmatpush1.msra.mxu0 0.0
    %4686 = vmatprep.subr.mxu0 0.0
    %4687 = vmatpush1.msra.mxu0 0.0
    %4688 = vmatprep.subr.mxu0 0.0
    %4689 = vmatpush1.msra.mxu0 0.0
    %4690 = vmatprep.subr.mxu0 0.0
    %4691 = vmatpush1.msra.mxu0 0.0
    %4692 = vmatprep.subr.mxu0 0.0
    %4693 = vmatpush1.msra.mxu0 0.0
    %4694 = vmatprep.subr.mxu0 0.0
    %4695 = vmatpush1.msra.mxu0 0.0
    %4696 = vmatprep.subr.mxu0 0.0
    %4697 = vmatpush1.msra.mxu0 0.0
    %4698 = vmatprep.subr.mxu0 0.0
    %4699 = vmatpush1.msra.mxu0 0.0
    %4700 = vmatprep.subr.mxu0 0.0
    %4701 = vmatpush1.msra.mxu0 0.0
    %4702 = vmatprep.mubr.f32.mxu0 0.0
    %4703 = vmatmul.mubr.f32.gmra.mrb[0].mxu0 %v4636
    %v4704 = vpop.f32.mrb[0].mxu0
    %v4705 = vadd.f32 %v3103, %v4704
    %v4706 = vpop.f32.mrb[0].mxu0
    %4707 = vdwg.mxu0
    %v4708 = vadd.f32 %v4632, %v4705
    %v4709 = vxor.u32 %v4708, 2147483648
    %v4710 = vmul.f32 %v4709, 1.442695
    %v4711 = vpow.pop %v4710
    %v4712 = vadd.f32 %v4711, 1.0
    %v4713 = vrcp.pop %v4712
    %v4714 = vmul.f32 1.0, %v4713
    %4716 = vrot.lane.b32.xlu0 %v4705, 64
    %v4717 = vpop.permute.xlu0 %4716
    %v4719 = vmul.f32 %v4714, %v4717
    %4721 = vrot.lane.b32.xlu0 %v4719, 64
    %v4722 = vpop.permute.xlu0 %4721
    %v4724 = vadd.f32 %v4632, %v4722
    %v4725 = vtanh.pop %v4724
    %v4726 = vsub.f32 1.0, %v4714
    %4728 = vrot.lane.b32.xlu0 %v4725, 96
    %v4729 = vpop.permute.xlu0 %4728
    %v4731 = vmul.f32 %v4726, %v4729
    %v4732 = vmul.f32 %v4714, %v4631
    %v4733 = vadd.f32 %v4731, %v4732
    %v4734 = vld [vmem:[%s7] sm:$0xff]
    %v4735 = vld [vmem:[%s7 + $0x8] sm:$0xff]
    %v4736 = vld [vmem:[%s7 + $0x10] sm:$0xff]
    %v4737 = vld [vmem:[%s7 + $0x18] sm:$0xff]
    %v4738 = vld [vmem:[%s8] sm:$0x1]
    %v4740 = vlaneseq
    %v4741 = vshrl.u32 %v4740, 7
    %v4742 = vsub.s32 0, %v4741
    %v4743 = vrot.slane %v4738, %v4742
    %4746 = vrot.lane.b32.xlu0 %v4733, 96
    %v4747 = vpop.permute.xlu0 %4746
    %v4748 = vsel %vm216, %v4747, 0
    %4750 = vmatprep.subr.mxu0 0.0
    %4751 = vmatpush1.msra.mxu0 %v4734
    %4752 = vmatprep.subr.mxu0 0.0
    %4753 = vmatpush1.msra.mxu0 %v4735
    %4754 = vmatprep.subr.mxu0 0.0
    %4755 = vmatpush1.msra.mxu0 %v4736
    %4756 = vmatprep.subr.mxu0 0.0
    %4757 = vmatpush1.msra.mxu0 %v4737
    %4758 = vmatprep.subr.mxu0 0.0
    %4759 = vmatpush1.msra.mxu0 0.0
    %4760 = vmatprep.subr.mxu0 0.0
    %4761 = vmatpush1.msra.mxu0 0.0
    %4762 = vmatprep.subr.mxu0 0.0
    %4763 = vmatpush1.msra.mxu0 0.0
    %4764 = vmatprep.subr.mxu0 0.0
    %4765 = vmatpush1.msra.mxu0 0.0
    %4766 = vmatprep.subr.mxu0 0.0
    %4767 = vmatpush1.msra.mxu0 0.0
    %4768 = vmatprep.subr.mxu0 0.0
    %4769 = vmatpush1.msra.mxu0 0.0
    %4770 = vmatprep.subr.mxu0 0.0
    %4771 = vmatpush1.msra.mxu0 0.0
    %4772 = vmatprep.subr.mxu0 0.0
    %4773 = vmatpush1.msra.mxu0 0.0
    %4774 = vmatprep.subr.mxu0 0.0
    %4775 = vmatpush1.msra.mxu0 0.0
    %4776 = vmatprep.subr.mxu0 0.0
    %4777 = vmatpush1.msra.mxu0 0.0
    %4778 = vmatprep.subr.mxu0 0.0
    %4779 = vmatpush1.msra.mxu0 0.0
    %4780 = vmatprep.subr.mxu0 0.0
    %4781 = vmatpush1.msra.mxu0 0.0
    %4782 = vmatprep.subr.mxu0 0.0
    %4783 = vmatpush1.msra.mxu0 0.0
    %4784 = vmatprep.subr.mxu0 0.0
    %4785 = vmatpush1.msra.mxu0 0.0
    %4786 = vmatprep.subr.mxu0 0.0
    %4787 = vmatpush1.msra.mxu0 0.0
    %4788 = vmatprep.subr.mxu0 0.0
    %4789 = vmatpush1.msra.mxu0 0.0
    %4790 = vmatprep.subr.mxu0 0.0
    %4791 = vmatpush1.msra.mxu0 0.0
    %4792 = vmatprep.subr.mxu0 0.0
    %4793 = vmatpush1.msra.mxu0 0.0
    %4794 = vmatprep.subr.mxu0 0.0
    %4795 = vmatpush1.msra.mxu0 0.0
    %4796 = vmatprep.subr.mxu0 0.0
    %4797 = vmatpush1.msra.mxu0 0.0
    %4798 = vmatprep.subr.mxu0 0.0
    %4799 = vmatpush1.msra.mxu0 0.0
    %4800 = vmatprep.subr.mxu0 0.0
    %4801 = vmatpush1.msra.mxu0 0.0
    %4802 = vmatprep.subr.mxu0 0.0
    %4803 = vmatpush1.msra.mxu0 0.0
    %4804 = vmatprep.subr.mxu0 0.0
    %4805 = vmatpush1.msra.mxu0 0.0
    %4806 = vmatprep.subr.mxu0 0.0
    %4807 = vmatpush1.msra.mxu0 0.0
    %4808 = vmatprep.subr.mxu0 0.0
    %4809 = vmatpush1.msra.mxu0 0.0
    %4810 = vmatprep.subr.mxu0 0.0
    %4811 = vmatpush1.msra.mxu0 0.0
    %4812 = vmatprep.subr.mxu0 0.0
    %4813 = vmatpush1.msra.mxu0 0.0
    %4814 = vmatprep.mubr.f32.mxu0 0.0
    %4815 = vmatmul.mubr.f32.gmra.mrb[0].mxu0 %v4748
    %v4816 = vpop.f32.mrb[0].mxu0
    %v4817 = vadd.f32 %v4743, %v4816
    %v4818 = vpop.f32.mrb[0].mxu0
    %4819 = vdwg.mxu0
    %4820 = vst [vmem:[%s9] sm:$0xff] %v4817
    // Predicated region
    $region54: #{gated_wavenet_forward.1} parent=1 // pred_check
      _
    $region55: #{gated_wavenet_forward.1} parent=1 // pred_check_branch
      %4822 = sbr.rel (0) target = $region57
    $region56: #{gated_wavenet_forward.1} parent=1 // pred_region
      _
    $region57: #{gated_wavenet_forward.1} parent=1 // pred_fallthru
      _
    // Predicated region
    $region58: #{gated_wavenet_forward.1} parent=1 // pred_check
      _
    $region59: #{gated_wavenet_forward.1} parent=1 // pred_check_branch
      %4824 = sbr.rel (0) target = $region61
    $region60: #{gated_wavenet_forward.1} parent=1 // pred_region
      _
    $region61: #{gated_wavenet_forward.1} parent=1 // pred_fallthru
      _
    %4825 = vsyncpa [#allocation4], 1
    %4826 = vsyncpa [#allocation6], 1
    %4827 = vsyncpa [#allocation9], 1

</llo_original>
